<compile_context>
chip_gen: v7x
topology: tpu7x:2x2x1
jax: 0.10.0
libtpu: 0.0.40
codegen_flags: <defaults>
</compile_context>

<pallas_src>
import jax
import jax.numpy as jnp
from jax import lax
from jax.experimental import pallas as pl
from jax.experimental.pallas import tpu as pltpu

_LN_EPS = 1e-5


def _layer_norm(z, w, b):
    mu = jnp.mean(z, axis=-1, keepdims=True)
    var = jnp.mean((z - mu) ** 2, axis=-1, keepdims=True)
    return (z - mu) * lax.rsqrt(var + _LN_EPS) * w + b


# -----------------------------------------------------------------------------
# Kernel: one transformer layer for one (batch, query-tile) grid step.
# -----------------------------------------------------------------------------
def transformer_layer_kernel(
    x_ref,                     # (1, N, D)   full row of x for this batch element
    ln1_w_ref, ln1_b_ref,      # (1, D) f32
    wq_ref,                    # (D, inner)  bf16  (softmax scale folded in)
    wkt_ref,                   # (H, dh, D)  bf16  (K weight, pre-transposed)
    wv_ref,                    # (H, D, dh)  bf16
    wproj_ref,                 # (inner, D)  bf16
    bproj_ref,                 # (1, D) f32
    ln2_w_ref, ln2_b_ref,      # (1, D) f32
    ffw1_ref,                  # (D, M) bf16
    ffb1_ref,                  # (1, M) f32
    ffw2_ref,                  # (M, D) bf16
    ffb2_ref,                  # (1, D) f32
    o_ref,                     # (1, TQ, D)
    k_scr,                     # (H, dh, N)  bf16 scratch (persists across t)
    v_scr,                     # (H, N, dh)  bf16 scratch (persists across t)
    ao_scr,                    # (TQ, inner) bf16 scratch (staged head outputs)
):
    bf16 = jnp.bfloat16
    f32 = jnp.float32
    heads, dh, _ = wkt_ref.shape
    tq = o_ref.shape[1]
    t = pl.program_id(1)

    # Small parameter reads hoisted once per grid step.
    ln1_w = ln1_w_ref[...]
    ln1_b = ln1_b_ref[...]
    ln2_w = ln2_w_ref[...]
    ln2_b = ln2_b_ref[...]
    bproj = bproj_ref[...]
    ffb1 = ffb1_ref[...]
    ffb2 = ffb2_ref[...]

    # ---- K/V: LayerNorm + projections over the full row, ONCE per batch element.
    @pl.when(t == 0)
    def _fill_kv():
        x_kv = x_ref[0].astype(f32)                              # (N, D)
        xn_kv = _layer_norm(x_kv, ln1_w, ln1_b).astype(bf16)     # (N, D)
        for h in range(heads):                                   # static; heads small
            # K stored pre-transposed: (dh, N) = wkt[h](dh,D) ._D xn_kv(N,D)
            k_scr[h] = lax.dot_general(
                wkt_ref[h], xn_kv, (((1,), (1,)), ((), ())),
                preferred_element_type=f32).astype(bf16)
            v_scr[h] = jnp.dot(xn_kv, wv_ref[h],
                               preferred_element_type=f32).astype(bf16)

    # ---- PreNorm + multi-head attention + residual for this query tile.
    q_start = pl.multiple_of(t * tq, tq)
    x_q = x_ref[0, pl.ds(q_start, tq), :].astype(f32)            # (TQ, D)
    xn_q = _layer_norm(x_q, ln1_w, ln1_b).astype(bf16)

    # Fused Q projection: (TQ, D) @ (D, inner), full MXU width.
    q_all = jnp.dot(xn_q, wq_ref[...], preferred_element_type=f32)

    for h in range(heads):                                       # static; heads small
        q_h = q_all[:, h * dh:(h + 1) * dh].astype(bf16)         # (TQ, dh)
        dots = jnp.dot(q_h, k_scr[h], preferred_element_type=f32)   # (TQ, N)
        dots = dots - jnp.max(dots, axis=-1, keepdims=True)
        ex = jnp.exp(dots)
        attn = ex * pl.reciprocal(jnp.sum(ex, axis=-1, keepdims=True), approx=True)
        out_h = jnp.dot(attn.astype(bf16), v_scr[h],
                        preferred_element_type=f32)              # (TQ, dh)
        ao_scr[:, h * dh:(h + 1) * dh] = out_h.astype(bf16)

    # Fused output projection over all heads: (TQ, inner) @ (inner, D).
    proj = jnp.dot(ao_scr[...], wproj_ref[...], preferred_element_type=f32)
    x1 = x_q + proj + bproj                                      # residual (dropout p=0)

    # ---- PreNorm + MLP (exact erf GELU) + residual.
    xn2 = _layer_norm(x1, ln2_w, ln2_b).astype(bf16)
    h1 = jnp.dot(xn2, ffw1_ref[...], preferred_element_type=f32) + ffb1
    h1 = 0.5 * h1 * (1.0 + lax.erf(h1 * 0.7071067811865476))
    h2 = jnp.dot(h1.astype(bf16), ffw2_ref[...], preferred_element_type=f32) + ffb2

    o_ref[0] = (x1 + h2).astype(o_ref.dtype)


# -----------------------------------------------------------------------------
# Wrapper: one pallas_call per layer, grid over (batch, query tiles).
# -----------------------------------------------------------------------------
KPARAM_ORDER = ("ln1_w", "ln1_b", "wq", "wkt", "wv", "wproj", "bproj",
                "ln2_w", "ln2_b", "ffw1", "ffb1", "ffw2", "ffb2")


def _pick_tq(n, max_tq=128):
    """Largest query tile (multiple of 8, <= max_tq) that divides n, else full row."""
    if n <= max_tq:
        return n
    for cand in range(max_tq, 7, -8):
        if n % cand == 0:
            return cand
    return n


def _device_vmem_capacity_bytes():
    try:
        info = pltpu.get_tpu_info()
        cap = getattr(info, "vmem_capacity_bytes", None)
        if cap:
            return int(cap)
    except Exception:
        pass
    return 64 * 1024 * 1024   # conservative (v7x-sized) fallback


def _vmem_limit_bytes(p_list, N, D, tq, heads, dh, mlp):
    inner = heads * dh
    param_bytes = sum(int(a.size) * a.dtype.itemsize for a in p_list)
    act_bytes = 2 * N * D * 4 + 2 * tq * D * 4                 # x row + out tile (2-buf)
    scratch_bytes = 2 * heads * N * dh * 2 + tq * inner * 2    # K^T + V + staged heads
    inter_bytes = 4 * (tq * N + tq * mlp + tq * inner + 3 * tq * D + 2 * N * D)
    needed = 2 * param_bytes + act_bytes + scratch_bytes + 2 * inter_bytes + (2 << 20)
    cap = _device_vmem_capacity_bytes()
    return int(min(max(needed, 32 << 20), cap * 3 // 4))


def transformer_layer(x, kp, *, tq=None):
    B, N, D = x.shape
    heads, dh, _ = kp["wkt"].shape
    inner = heads * dh
    mlp = kp["ffw1"].shape[1]
    if tq is None:
        tq = _pick_tq(N)
    assert N % tq == 0, "query tile size must divide the sequence length"
    n_t = N // tq
    p_list = [kp[k] for k in KPARAM_ORDER]

    vmem_limit = _vmem_limit_bytes(p_list, N, D, tq, heads, dh, mlp)

    macs = (3 * B * N * D * inner            # q, k, v projections
            + 2 * B * heads * N * N * dh     # q @ k^T and attn @ v
            + B * N * inner * D              # output projection
            + 2 * B * N * D * mlp)           # MLP
    cost = pl.CostEstimate(
        flops=int(2 * macs),
        transcendentals=int(B * heads * N * N + B * N * mlp),
        bytes_accessed=int(2 * x.size * x.dtype.itemsize
                           + sum(int(a.size) * a.dtype.itemsize for a in p_list)),
    )

    def param_spec(arr, single_buffer):
        nd = arr.ndim
        if single_buffer:
            # Constant index map -> double-buffering only doubles VMEM residency.
            return pl.BlockSpec(arr.shape, lambda b, t, _nd=nd: (0,) * _nd,
                                pipeline_mode=pl.Buffered(1))
        return pl.BlockSpec(arr.shape, lambda b, t, _nd=nd: (0,) * _nd)

    def run(single_buffer_weights):
        in_specs = ([pl.BlockSpec((1, N, D), lambda b, t: (b, 0, 0))]   # full row (re-used over t)
                    + [param_spec(a, single_buffer_weights) for a in p_list])
        fn = pl.pallas_call(
            transformer_layer_kernel,
            out_shape=jax.ShapeDtypeStruct((B, N, D), x.dtype),
            grid=(B, n_t),
            in_specs=in_specs,
            out_specs=pl.BlockSpec((1, tq, D), lambda b, t: (b, t, 0)),
            scratch_shapes=[
                pltpu.VMEM((heads, dh, N), jnp.bfloat16),   # K^T per head (per batch elem)
                pltpu.VMEM((heads, N, dh), jnp.bfloat16),   # V per head (per batch elem)
                pltpu.VMEM((tq, inner), jnp.bfloat16),      # staged head outputs
            ],
            compiler_params=pltpu.CompilerParams(
                dimension_semantics=("parallel", "arbitrary"),
                vmem_limit_bytes=vmem_limit,
            ),
            cost_estimate=cost,
        )
        return fn(x, *p_list)

    try:
        return run(True)
    except Exception:
        # pipeline_mode=pl.Buffered(1) unavailable on this jax/libtpu version:
        # fall back to default double-buffered weight specs (correct, more VMEM).
        return run(False)


def transformer_forward(x, layer_kparams, *, tq=None):
    for kp in layer_kparams:
        x = transformer_layer(x, kp, tq=tq)
    return x


# -----------------------------------------------------------------------------
# Parameter construction (logical layout) + kernel re-layout on the host.
# -----------------------------------------------------------------------------
def make_layer_params(key, dim, heads, dim_head, mlp_dim):
    inner = heads * dim_head
    ks = jax.random.split(key, 10)

    def rnd(k, shape, s):
        return jax.random.normal(k, shape, jnp.float32) * s

    return {
        "ln1_w": 1.0 + rnd(ks[6], (1, dim), 0.05),
        "ln1_b": rnd(ks[7], (1, dim), 0.02),
        "wqkv":  rnd(ks[0], (dim, 3 * inner), 0.05),   # to_qkv (no bias)
        "wproj": rnd(ks[1], (inner, dim), 0.05),
        "bproj": rnd(ks[2], (1, dim), 0.02),
        "ln2_w": 1.0 + rnd(ks[8], (1, dim), 0.05),
        "ln2_b": rnd(ks[9], (1, dim), 0.02),
        "ffw1":  rnd(ks[3], (dim, mlp_dim), 0.05),
        "ffb1":  rnd(ks[4], (1, mlp_dim), 0.02),
        "ffw2":  rnd(ks[5], (mlp_dim, dim), 0.05),
        "ffb2":  rnd(ks[2], (1, dim), 0.02),
    }


def prepare_layer_params(p, *, heads, dim_head):
    """Host re-layout: fused bf16 Q/proj/MLP weights, pre-transposed head-major K,
    head-major V, softmax scale folded into wq (zero in-kernel cost)."""
    D = p["wqkv"].shape[0]
    inner = heads * dim_head
    scale = float(dim_head) ** -0.5
    wq = p["wqkv"][:, :inner]
    wk = p["wqkv"][:, inner:2 * inner]
    wv = p["wqkv"][:, 2 * inner:]
    wkt = jnp.transpose(wk.reshape(D, heads, dim_head), (1, 2, 0))   # (H, dh, D)
    wvh = jnp.transpose(wv.reshape(D, heads, dim_head), (1, 0, 2))   # (H, D, dh)
    return {
        "ln1_w": p["ln1_w"], "ln1_b": p["ln1_b"],
        "wq": (wq * scale).astype(jnp.bfloat16),      # (D, inner), scale folded
        "wkt": wkt.astype(jnp.bfloat16),
        "wv": wvh.astype(jnp.bfloat16),
        "wproj": p["wproj"].astype(jnp.bfloat16),     # (inner, D)
        "bproj": p["bproj"],
        "ln2_w": p["ln2_w"], "ln2_b": p["ln2_b"],
        "ffw1": p["ffw1"].astype(jnp.bfloat16),
        "ffb1": p["ffb1"],
        "ffw2": p["ffw2"].astype(jnp.bfloat16),
        "ffb2": p["ffb2"],
    }


# -----------------------------------------------------------------------------
# Pure-JAX reference (mirrors bf16 matmul operands / f32 accumulation).
# -----------------------------------------------------------------------------
def layer_ref(x, kp):
    f32 = jnp.float32
    bf = lambda a: a.astype(jnp.bfloat16)
    H, dh, _ = kp["wkt"].shape
    B, N, _ = x.shape

    def ln(z, w, b):
        mu = z.mean(-1, keepdims=True)
        var = ((z - mu) ** 2).mean(-1, keepdims=True)
        return (z - mu) * lax.rsqrt(var + _LN_EPS) * w + b

    xn = bf(ln(x, kp["ln1_w"][0], kp["ln1_b"][0]))
    q = bf(jnp.einsum("bnd,de->bne", xn, kp["wq"], preferred_element_type=f32))
    q = q.reshape(B, N, H, dh).transpose(0, 2, 1, 3)                        # (B,H,N,dh)
    kT = bf(jnp.einsum("hed,bnd->bhen", kp["wkt"], xn, preferred_element_type=f32))
    v = bf(jnp.einsum("bnd,hde->bhne", xn, kp["wv"], preferred_element_type=f32))
    dots = jnp.einsum("bhne,bhem->bhnm", q, kT, preferred_element_type=f32)
    attn = jax.nn.softmax(dots, axis=-1)
    out = bf(jnp.einsum("bhnm,bhme->bhne", bf(attn), v, preferred_element_type=f32))
    out_cat = out.transpose(0, 2, 1, 3).reshape(B, N, H * dh)
    proj = jnp.einsum("bne,ed->bnd", out_cat, kp["wproj"], preferred_element_type=f32)
    x = x + proj + kp["bproj"][0]
    xn2 = bf(ln(x, kp["ln2_w"][0], kp["ln2_b"][0]))
    h = jnp.einsum("bnd,dm->bnm", xn2, kp["ffw1"],
                   preferred_element_type=f32) + kp["ffb1"][0]
    h = jax.nn.gelu(h, approximate=False)
    h2 = jnp.einsum("bnm,md->bnd", bf(h), kp["ffw2"],
                    preferred_element_type=f32) + kp["ffb2"][0]
    return x + h2


def transformer_ref(x, layer_kparams):
    for kp in layer_kparams:
        x = layer_ref(x, kp)
    return x


# -----------------------------------------------------------------------------
if __name__ == "__main__":
    # Small shapes consistent with the module: x is (batch, seq, dim)
    B, N = 2, 8
    dim, heads, dim_head, mlp_dim, depth = 32, 4, 8, 64, 2

    key = jax.random.PRNGKey(0)
    k_x, *k_layers = jax.random.split(key, depth + 1)

    x = jax.random.normal(k_x, (B, N, dim), jnp.float32)
    logical = [make_layer_params(k, dim, heads, dim_head, mlp_dim) for k in k_layers]
    kparams = [prepare_layer_params(p, heads=heads, dim_head=dim_head) for p in logical]

    out = transformer_forward(x, kparams)
    out = jax.block_until_ready(out)

    ref = transformer_ref(x, kparams)
    assert out.shape == (B, N, dim)
    assert bool(jnp.allclose(out, ref, atol=2e-2, rtol=2e-2)), \
        "Pallas output mismatch vs JAX reference"

    print("KERNEL_OK")
</pallas_src>

<mosaic_0001>
module attributes {stable_mosaic.version = 11 : i64} {
  func.func @transformer_layer_kernel(%arg0: i32, %arg1: i32, %arg2: memref<1x8x32xf32, #tpu.memory_space<vmem>>, %arg3: memref<1x32xf32, #tpu.memory_space<vmem>>, %arg4: memref<1x32xf32, #tpu.memory_space<vmem>>, %arg5: memref<32x32xbf16, #tpu.memory_space<vmem>>, %arg6: memref<4x8x32xbf16, #tpu.memory_space<vmem>>, %arg7: memref<4x32x8xbf16, #tpu.memory_space<vmem>>, %arg8: memref<32x32xbf16, #tpu.memory_space<vmem>>, %arg9: memref<1x32xf32, #tpu.memory_space<vmem>>, %arg10: memref<1x32xf32, #tpu.memory_space<vmem>>, %arg11: memref<1x32xf32, #tpu.memory_space<vmem>>, %arg12: memref<32x64xbf16, #tpu.memory_space<vmem>>, %arg13: memref<1x64xf32, #tpu.memory_space<vmem>>, %arg14: memref<64x32xbf16, #tpu.memory_space<vmem>>, %arg15: memref<1x32xf32, #tpu.memory_space<vmem>>, %arg16: memref<1x8x32xf32, #tpu.memory_space<vmem>>, %arg17: memref<4x8x8xbf16, #tpu.memory_space<vmem>>, %arg18: memref<4x8x8xbf16, #tpu.memory_space<vmem>>, %arg19: memref<8x32xbf16, #tpu.memory_space<vmem>>) attributes {dimension_semantics = [#tpu.dimension_semantics<parallel>, #tpu.dimension_semantics<arbitrary>], iteration_bounds = array<i64: 2, 1>, scalar_prefetch = 0 : i64, scratch_operands = 3 : i64, tpu.core_type = #tpu.core_type<tc>, window_params = [{transform_indices = @transform_0, window_bounds = array<i64: 1, 8, 32>}, {pipeline_mode = #tpu.pipeline_mode<synchronous>, transform_indices = @transform_1, window_bounds = array<i64: 1, 32>}, {pipeline_mode = #tpu.pipeline_mode<synchronous>, transform_indices = @transform_2, window_bounds = array<i64: 1, 32>}, {pipeline_mode = #tpu.pipeline_mode<synchronous>, transform_indices = @transform_3, window_bounds = array<i64: 32, 32>}, {pipeline_mode = #tpu.pipeline_mode<synchronous>, transform_indices = @transform_4, window_bounds = array<i64: 4, 8, 32>}, {pipeline_mode = #tpu.pipeline_mode<synchronous>, transform_indices = @transform_5, window_bounds = array<i64: 4, 32, 8>}, {pipeline_mode = #tpu.pipeline_mode<synchronous>, transform_indices = @transform_6, window_bounds = array<i64: 32, 32>}, {pipeline_mode = #tpu.pipeline_mode<synchronous>, transform_indices = @transform_7, window_bounds = array<i64: 1, 32>}, {pipeline_mode = #tpu.pipeline_mode<synchronous>, transform_indices = @transform_8, window_bounds = array<i64: 1, 32>}, {pipeline_mode = #tpu.pipeline_mode<synchronous>, transform_indices = @transform_9, window_bounds = array<i64: 1, 32>}, {pipeline_mode = #tpu.pipeline_mode<synchronous>, transform_indices = @transform_10, window_bounds = array<i64: 32, 64>}, {pipeline_mode = #tpu.pipeline_mode<synchronous>, transform_indices = @transform_11, window_bounds = array<i64: 1, 64>}, {pipeline_mode = #tpu.pipeline_mode<synchronous>, transform_indices = @transform_12, window_bounds = array<i64: 64, 32>}, {pipeline_mode = #tpu.pipeline_mode<synchronous>, transform_indices = @transform_13, window_bounds = array<i64: 1, 32>}, {transform_indices = @transform_14, window_bounds = array<i64: 1, 8, 32>}]} {
    %c0 = arith.constant 0 : index
    %c0_0 = arith.constant 0 : index
    %0 = vector.load %arg3[%c0, %c0_0] : memref<1x32xf32, #tpu.memory_space<vmem>>, vector<1x32xf32>
    %c0_1 = arith.constant 0 : index
    %c0_2 = arith.constant 0 : index
    %1 = vector.load %arg4[%c0_1, %c0_2] : memref<1x32xf32, #tpu.memory_space<vmem>>, vector<1x32xf32>
    %c0_3 = arith.constant 0 : index
    %c0_4 = arith.constant 0 : index
    %2 = vector.load %arg10[%c0_3, %c0_4] : memref<1x32xf32, #tpu.memory_space<vmem>>, vector<1x32xf32>
    %c0_5 = arith.constant 0 : index
    %c0_6 = arith.constant 0 : index
    %3 = vector.load %arg11[%c0_5, %c0_6] : memref<1x32xf32, #tpu.memory_space<vmem>>, vector<1x32xf32>
    %c0_7 = arith.constant 0 : index
    %c0_8 = arith.constant 0 : index
    %4 = vector.load %arg9[%c0_7, %c0_8] : memref<1x32xf32, #tpu.memory_space<vmem>>, vector<1x32xf32>
    %c0_9 = arith.constant 0 : index
    %c0_10 = arith.constant 0 : index
    %5 = vector.load %arg13[%c0_9, %c0_10] : memref<1x64xf32, #tpu.memory_space<vmem>>, vector<1x64xf32>
    %c0_11 = arith.constant 0 : index
    %c0_12 = arith.constant 0 : index
    %6 = vector.load %arg15[%c0_11, %c0_12] : memref<1x32xf32, #tpu.memory_space<vmem>>, vector<1x32xf32>
    %c0_i32 = arith.constant 0 : i32
    %7 = arith.cmpi eq, %arg1, %c0_i32 : i32
    %8 = arith.extui %7 : i1 to i32
    %c0_i32_13 = arith.constant 0 : i32
    %9 = arith.cmpi ne, %8, %c0_i32_13 : i32
    scf.if %9 {
      %c0_87 = arith.constant 0 : index
      %c0_88 = arith.constant 0 : index
      %c0_89 = arith.constant 0 : index
      %174 = vector.load %arg2[%c0_87, %c0_88, %c0_89] : memref<1x8x32xf32, #tpu.memory_space<vmem>>, vector<1x8x32xf32>
      %175 = vector.shape_cast %174 : vector<1x8x32xf32> to vector<8x32xf32>
      %cst_90 = arith.constant dense<0.000000e+00> : vector<8xf32>
      %176 = vector.multi_reduction <add>, %175, %cst_90 [1] : vector<8x32xf32> to vector<8xf32>
      %177 = vector.shape_cast %176 : vector<8xf32> to vector<8x1xf32>
      %cst_91 = arith.constant 3.200000e+01 : f32
      %178 = vector.broadcast %cst_91 : f32 to vector<8x1xf32>
      %179 = arith.divf %177, %178 : vector<8x1xf32>
      %180 = vector.broadcast %179 : vector<8x1xf32> to vector<8x32xf32>
      %181 = arith.subf %175, %180 : vector<8x32xf32>
      %182 = arith.mulf %181, %181 : vector<8x32xf32>
      %cst_92 = arith.constant dense<0.000000e+00> : vector<8xf32>
      %183 = vector.multi_reduction <add>, %182, %cst_92 [1] : vector<8x32xf32> to vector<8xf32>
      %184 = vector.shape_cast %183 : vector<8xf32> to vector<8x1xf32>
      %cst_93 = arith.constant 3.200000e+01 : f32
      %185 = vector.broadcast %cst_93 : f32 to vector<8x1xf32>
      %186 = arith.divf %184, %185 : vector<8x1xf32>
      %187 = vector.broadcast %179 : vector<8x1xf32> to vector<8x32xf32>
      %188 = arith.subf %175, %187 : vector<8x32xf32>
      %cst_94 = arith.constant 9.99999974E-6 : f32
      %189 = vector.broadcast %cst_94 : f32 to vector<8x1xf32>
      %190 = arith.addf %186, %189 : vector<8x1xf32>
      %191 = math.rsqrt %190 : vector<8x1xf32>
      %192 = vector.broadcast %191 : vector<8x1xf32> to vector<8x32xf32>
      %193 = arith.mulf %188, %192 : vector<8x32xf32>
      %194 = vector.broadcast %0 : vector<1x32xf32> to vector<8x32xf32>
      %195 = arith.mulf %193, %194 : vector<8x32xf32>
      %196 = vector.broadcast %1 : vector<1x32xf32> to vector<8x32xf32>
      %197 = arith.addf %195, %196 : vector<8x32xf32>
      %198 = arith.truncf %197 : vector<8x32xf32> to vector<8x32xbf16>
      %c0_95 = arith.constant 0 : index
      %c0_96 = arith.constant 0 : index
      %c0_97 = arith.constant 0 : index
      %199 = vector.load %arg6[%c0_95, %c0_96, %c0_97] : memref<4x8x32xbf16, #tpu.memory_space<vmem>>, vector<1x8x32xbf16>
      %200 = vector.shape_cast %199 : vector<1x8x32xbf16> to vector<8x32xbf16>
      %cst_98 = arith.constant dense<0.000000e+00> : vector<8x8xf32>
      %201 = tpu.matmul %200, %198, %cst_98 {dimension_numbers = #tpu.dot_dimension_numbers<[1], [1], [0], [0], [0, 0, 1, 0], [], []>} : vector<8x32xbf16>, vector<8x32xbf16>, vector<8x8xf32> -> vector<8x8xf32>
      %202 = arith.truncf %201 : vector<8x8xf32> to vector<8x8xbf16>
      %c0_99 = arith.constant 0 : index
      %c0_100 = arith.constant 0 : index
      %c0_101 = arith.constant 0 : index
      %203 = vector.load %arg17[%c0_99, %c0_100, %c0_101] : memref<4x8x8xbf16, #tpu.memory_space<vmem>>, vector<1x8x8xbf16>
      %204 = vector.shape_cast %203 : vector<1x8x8xbf16> to vector<8x8xbf16>
      %205 = vector.shape_cast %202 : vector<8x8xbf16> to vector<1x8x8xbf16>
      tpu.vector_store %arg17[%c0_99, %c0_100, %c0_101], %205 {strides = array<i32>} : memref<4x8x8xbf16, #tpu.memory_space<vmem>>, vector<1x8x8xbf16>,
      %c0_102 = arith.constant 0 : index
      %c0_103 = arith.constant 0 : index
      %c0_104 = arith.constant 0 : index
      %206 = vector.load %arg7[%c0_102, %c0_103, %c0_104] : memref<4x32x8xbf16, #tpu.memory_space<vmem>>, vector<1x32x8xbf16>
      %207 = vector.shape_cast %206 : vector<1x32x8xbf16> to vector<32x8xbf16>
      %cst_105 = arith.constant dense<0.000000e+00> : vector<8x8xf32>
      %208 = tpu.matmul %198, %207, %cst_105 {dimension_numbers = #tpu.dot_dimension_numbers<[1], [0], [0], [1], [0, 0, 1, 1], [], []>} : vector<8x32xbf16>, vector<32x8xbf16>, vector<8x8xf32> -> vector<8x8xf32>
      %209 = arith.truncf %208 : vector<8x8xf32> to vector<8x8xbf16>
      %c0_106 = arith.constant 0 : index
      %c0_107 = arith.constant 0 : index
      %c0_108 = arith.constant 0 : index
      %210 = vector.load %arg18[%c0_106, %c0_107, %c0_108] : memref<4x8x8xbf16, #tpu.memory_space<vmem>>, vector<1x8x8xbf16>
      %211 = vector.shape_cast %210 : vector<1x8x8xbf16> to vector<8x8xbf16>
      %212 = vector.shape_cast %209 : vector<8x8xbf16> to vector<1x8x8xbf16>
      tpu.vector_store %arg18[%c0_106, %c0_107, %c0_108], %212 {strides = array<i32>} : memref<4x8x8xbf16, #tpu.memory_space<vmem>>, vector<1x8x8xbf16>,
      %c1_109 = arith.constant 1 : index
      %c0_110 = arith.constant 0 : index
      %c0_111 = arith.constant 0 : index
      %213 = vector.load %arg6[%c1_109, %c0_110, %c0_111] : memref<4x8x32xbf16, #tpu.memory_space<vmem>>, vector<1x8x32xbf16>
      %214 = vector.shape_cast %213 : vector<1x8x32xbf16> to vector<8x32xbf16>
      %cst_112 = arith.constant dense<0.000000e+00> : vector<8x8xf32>
      %215 = tpu.matmul %214, %198, %cst_112 {dimension_numbers = #tpu.dot_dimension_numbers<[1], [1], [0], [0], [0, 0, 1, 0], [], []>} : vector<8x32xbf16>, vector<8x32xbf16>, vector<8x8xf32> -> vector<8x8xf32>
      %216 = arith.truncf %215 : vector<8x8xf32> to vector<8x8xbf16>
      %c1_113 = arith.constant 1 : index
      %c0_114 = arith.constant 0 : index
      %c0_115 = arith.constant 0 : index
      %217 = vector.load %arg17[%c1_113, %c0_114, %c0_115] : memref<4x8x8xbf16, #tpu.memory_space<vmem>>, vector<1x8x8xbf16>
      %218 = vector.shape_cast %217 : vector<1x8x8xbf16> to vector<8x8xbf16>
      %219 = vector.shape_cast %216 : vector<8x8xbf16> to vector<1x8x8xbf16>
      tpu.vector_store %arg17[%c1_113, %c0_114, %c0_115], %219 {strides = array<i32>} : memref<4x8x8xbf16, #tpu.memory_space<vmem>>, vector<1x8x8xbf16>,
      %c1_116 = arith.constant 1 : index
      %c0_117 = arith.constant 0 : index
      %c0_118 = arith.constant 0 : index
      %220 = vector.load %arg7[%c1_116, %c0_117, %c0_118] : memref<4x32x8xbf16, #tpu.memory_space<vmem>>, vector<1x32x8xbf16>
      %221 = vector.shape_cast %220 : vector<1x32x8xbf16> to vector<32x8xbf16>
      %cst_119 = arith.constant dense<0.000000e+00> : vector<8x8xf32>
      %222 = tpu.matmul %198, %221, %cst_119 {dimension_numbers = #tpu.dot_dimension_numbers<[1], [0], [0], [1], [0, 0, 1, 1], [], []>} : vector<8x32xbf16>, vector<32x8xbf16>, vector<8x8xf32> -> vector<8x8xf32>
      %223 = arith.truncf %222 : vector<8x8xf32> to vector<8x8xbf16>
      %c1_120 = arith.constant 1 : index
      %c0_121 = arith.constant 0 : index
      %c0_122 = arith.constant 0 : index
      %224 = vector.load %arg18[%c1_120, %c0_121, %c0_122] : memref<4x8x8xbf16, #tpu.memory_space<vmem>>, vector<1x8x8xbf16>
      %225 = vector.shape_cast %224 : vector<1x8x8xbf16> to vector<8x8xbf16>
      %226 = vector.shape_cast %223 : vector<8x8xbf16> to vector<1x8x8xbf16>
      tpu.vector_store %arg18[%c1_120, %c0_121, %c0_122], %226 {strides = array<i32>} : memref<4x8x8xbf16, #tpu.memory_space<vmem>>, vector<1x8x8xbf16>,
      %c2_123 = arith.constant 2 : index
      %c0_124 = arith.constant 0 : index
      %c0_125 = arith.constant 0 : index
      %227 = vector.load %arg6[%c2_123, %c0_124, %c0_125] : memref<4x8x32xbf16, #tpu.memory_space<vmem>>, vector<1x8x32xbf16>
      %228 = vector.shape_cast %227 : vector<1x8x32xbf16> to vector<8x32xbf16>
      %cst_126 = arith.constant dense<0.000000e+00> : vector<8x8xf32>
      %229 = tpu.matmul %228, %198, %cst_126 {dimension_numbers = #tpu.dot_dimension_numbers<[1], [1], [0], [0], [0, 0, 1, 0], [], []>} : vector<8x32xbf16>, vector<8x32xbf16>, vector<8x8xf32> -> vector<8x8xf32>
      %230 = arith.truncf %229 : vector<8x8xf32> to vector<8x8xbf16>
      %c2_127 = arith.constant 2 : index
      %c0_128 = arith.constant 0 : index
      %c0_129 = arith.constant 0 : index
      %231 = vector.load %arg17[%c2_127, %c0_128, %c0_129] : memref<4x8x8xbf16, #tpu.memory_space<vmem>>, vector<1x8x8xbf16>
      %232 = vector.shape_cast %231 : vector<1x8x8xbf16> to vector<8x8xbf16>
      %233 = vector.shape_cast %230 : vector<8x8xbf16> to vector<1x8x8xbf16>
      tpu.vector_store %arg17[%c2_127, %c0_128, %c0_129], %233 {strides = array<i32>} : memref<4x8x8xbf16, #tpu.memory_space<vmem>>, vector<1x8x8xbf16>,
      %c2_130 = arith.constant 2 : index
      %c0_131 = arith.constant 0 : index
      %c0_132 = arith.constant 0 : index
      %234 = vector.load %arg7[%c2_130, %c0_131, %c0_132] : memref<4x32x8xbf16, #tpu.memory_space<vmem>>, vector<1x32x8xbf16>
      %235 = vector.shape_cast %234 : vector<1x32x8xbf16> to vector<32x8xbf16>
      %cst_133 = arith.constant dense<0.000000e+00> : vector<8x8xf32>
      %236 = tpu.matmul %198, %235, %cst_133 {dimension_numbers = #tpu.dot_dimension_numbers<[1], [0], [0], [1], [0, 0, 1, 1], [], []>} : vector<8x32xbf16>, vector<32x8xbf16>, vector<8x8xf32> -> vector<8x8xf32>
      %237 = arith.truncf %236 : vector<8x8xf32> to vector<8x8xbf16>
      %c2_134 = arith.constant 2 : index
      %c0_135 = arith.constant 0 : index
      %c0_136 = arith.constant 0 : index
      %238 = vector.load %arg18[%c2_134, %c0_135, %c0_136] : memref<4x8x8xbf16, #tpu.memory_space<vmem>>, vector<1x8x8xbf16>
      %239 = vector.shape_cast %238 : vector<1x8x8xbf16> to vector<8x8xbf16>
      %240 = vector.shape_cast %237 : vector<8x8xbf16> to vector<1x8x8xbf16>
      tpu.vector_store %arg18[%c2_134, %c0_135, %c0_136], %240 {strides = array<i32>} : memref<4x8x8xbf16, #tpu.memory_space<vmem>>, vector<1x8x8xbf16>,
      %c3_137 = arith.constant 3 : index
      %c0_138 = arith.constant 0 : index
      %c0_139 = arith.constant 0 : index
      %241 = vector.load %arg6[%c3_137, %c0_138, %c0_139] : memref<4x8x32xbf16, #tpu.memory_space<vmem>>, vector<1x8x32xbf16>
      %242 = vector.shape_cast %241 : vector<1x8x32xbf16> to vector<8x32xbf16>
      %cst_140 = arith.constant dense<0.000000e+00> : vector<8x8xf32>
      %243 = tpu.matmul %242, %198, %cst_140 {dimension_numbers = #tpu.dot_dimension_numbers<[1], [1], [0], [0], [0, 0, 1, 0], [], []>} : vector<8x32xbf16>, vector<8x32xbf16>, vector<8x8xf32> -> vector<8x8xf32>
      %244 = arith.truncf %243 : vector<8x8xf32> to vector<8x8xbf16>
      %c3_141 = arith.constant 3 : index
      %c0_142 = arith.constant 0 : index
      %c0_143 = arith.constant 0 : index
      %245 = vector.load %arg17[%c3_141, %c0_142, %c0_143] : memref<4x8x8xbf16, #tpu.memory_space<vmem>>, vector<1x8x8xbf16>
      %246 = vector.shape_cast %245 : vector<1x8x8xbf16> to vector<8x8xbf16>
      %247 = vector.shape_cast %244 : vector<8x8xbf16> to vector<1x8x8xbf16>
      tpu.vector_store %arg17[%c3_141, %c0_142, %c0_143], %247 {strides = array<i32>} : memref<4x8x8xbf16, #tpu.memory_space<vmem>>, vector<1x8x8xbf16>,
      %c3_144 = arith.constant 3 : index
      %c0_145 = arith.constant 0 : index
      %c0_146 = arith.constant 0 : index
      %248 = vector.load %arg7[%c3_144, %c0_145, %c0_146] : memref<4x32x8xbf16, #tpu.memory_space<vmem>>, vector<1x32x8xbf16>
      %249 = vector.shape_cast %248 : vector<1x32x8xbf16> to vector<32x8xbf16>
      %cst_147 = arith.constant dense<0.000000e+00> : vector<8x8xf32>
      %250 = tpu.matmul %198, %249, %cst_147 {dimension_numbers = #tpu.dot_dimension_numbers<[1], [0], [0], [1], [0, 0, 1, 1], [], []>} : vector<8x32xbf16>, vector<32x8xbf16>, vector<8x8xf32> -> vector<8x8xf32>
      %251 = arith.truncf %250 : vector<8x8xf32> to vector<8x8xbf16>
      %c3_148 = arith.constant 3 : index
      %c0_149 = arith.constant 0 : index
      %c0_150 = arith.constant 0 : index
      %252 = vector.load %arg18[%c3_148, %c0_149, %c0_150] : memref<4x8x8xbf16, #tpu.memory_space<vmem>>, vector<1x8x8xbf16>
      %253 = vector.shape_cast %252 : vector<1x8x8xbf16> to vector<8x8xbf16>
      %254 = vector.shape_cast %251 : vector<8x8xbf16> to vector<1x8x8xbf16>
      tpu.vector_store %arg18[%c3_148, %c0_149, %c0_150], %254 {strides = array<i32>} : memref<4x8x8xbf16, #tpu.memory_space<vmem>>, vector<1x8x8xbf16>,
    } else {
    }
    %c8_i32 = arith.constant 8 : i32
    %10 = arith.muli %arg1, %c8_i32 : i32
    %11 = tpu.assume_multiple %10, 8 : i32
    %c0_14 = arith.constant 0 : index
    %12 = arith.index_cast %11 : i32 to index
    %c0_15 = arith.constant 0 : index
    %13 = vector.load %arg2[%c0_14, %12, %c0_15] : memref<1x8x32xf32, #tpu.memory_space<vmem>>, vector<1x8x32xf32>
    %14 = vector.shape_cast %13 : vector<1x8x32xf32> to vector<8x32xf32>
    %cst = arith.constant dense<0.000000e+00> : vector<8xf32>
    %15 = vector.multi_reduction <add>, %14, %cst [1] : vector<8x32xf32> to vector<8xf32>
    %16 = vector.shape_cast %15 : vector<8xf32> to vector<8x1xf32>
    %cst_16 = arith.constant 3.200000e+01 : f32
    %17 = vector.broadcast %cst_16 : f32 to vector<8x1xf32>
    %18 = arith.divf %16, %17 : vector<8x1xf32>
    %19 = vector.broadcast %18 : vector<8x1xf32> to vector<8x32xf32>
    %20 = arith.subf %14, %19 : vector<8x32xf32>
    %21 = arith.mulf %20, %20 : vector<8x32xf32>
    %cst_17 = arith.constant dense<0.000000e+00> : vector<8xf32>
    %22 = vector.multi_reduction <add>, %21, %cst_17 [1] : vector<8x32xf32> to vector<8xf32>
    %23 = vector.shape_cast %22 : vector<8xf32> to vector<8x1xf32>
    %cst_18 = arith.constant 3.200000e+01 : f32
    %24 = vector.broadcast %cst_18 : f32 to vector<8x1xf32>
    %25 = arith.divf %23, %24 : vector<8x1xf32>
    %26 = vector.broadcast %18 : vector<8x1xf32> to vector<8x32xf32>
    %27 = arith.subf %14, %26 : vector<8x32xf32>
    %cst_19 = arith.constant 9.99999974E-6 : f32
    %28 = vector.broadcast %cst_19 : f32 to vector<8x1xf32>
    %29 = arith.addf %25, %28 : vector<8x1xf32>
    %30 = math.rsqrt %29 : vector<8x1xf32>
    %31 = vector.broadcast %30 : vector<8x1xf32> to vector<8x32xf32>
    %32 = arith.mulf %27, %31 : vector<8x32xf32>
    %33 = vector.broadcast %0 : vector<1x32xf32> to vector<8x32xf32>
    %34 = arith.mulf %32, %33 : vector<8x32xf32>
    %35 = vector.broadcast %1 : vector<1x32xf32> to vector<8x32xf32>
    %36 = arith.addf %34, %35 : vector<8x32xf32>
    %37 = arith.truncf %36 : vector<8x32xf32> to vector<8x32xbf16>
    %c0_20 = arith.constant 0 : index
    %c0_21 = arith.constant 0 : index
    %38 = vector.load %arg5[%c0_20, %c0_21] : memref<32x32xbf16, #tpu.memory_space<vmem>>, vector<32x32xbf16>
    %cst_22 = arith.constant dense<0.000000e+00> : vector<8x32xf32>
    %39 = tpu.matmul %37, %38, %cst_22 {dimension_numbers = #tpu.dot_dimension_numbers<[1], [0], [0], [1], [0, 0, 1, 1], [], []>} : vector<8x32xbf16>, vector<32x32xbf16>, vector<8x32xf32> -> vector<8x32xf32>
    %40 = vector.extract_strided_slice %39 {offsets = [0, 0], sizes = [8, 8], strides = [1, 1]} : vector<8x32xf32> to vector<8x8xf32>
    %41 = arith.truncf %40 : vector<8x8xf32> to vector<8x8xbf16>
    %c0_23 = arith.constant 0 : index
    %c0_24 = arith.constant 0 : index
    %c0_25 = arith.constant 0 : index
    %42 = vector.load %arg17[%c0_23, %c0_24, %c0_25] : memref<4x8x8xbf16, #tpu.memory_space<vmem>>, vector<1x8x8xbf16>
    %43 = vector.shape_cast %42 : vector<1x8x8xbf16> to vector<8x8xbf16>
    %cst_26 = arith.constant dense<0.000000e+00> : vector<8x8xf32>
    %44 = tpu.matmul %41, %43, %cst_26 {dimension_numbers = #tpu.dot_dimension_numbers<[1], [0], [0], [1], [0, 0, 1, 1], [], []>} : vector<8x8xbf16>, vector<8x8xbf16>, vector<8x8xf32> -> vector<8x8xf32>
    %cst_27 = arith.constant dense<0xFF800000> : vector<8xf32>
    %45 = vector.multi_reduction <maximumf>, %44, %cst_27 [1] : vector<8x8xf32> to vector<8xf32>
    %46 = vector.shape_cast %45 : vector<8xf32> to vector<8x1xf32>
    %47 = vector.broadcast %46 : vector<8x1xf32> to vector<8x8xf32>
    %48 = arith.subf %44, %47 : vector<8x8xf32>
    %49 = math.exp %48 : vector<8x8xf32>
    %cst_28 = arith.constant dense<0.000000e+00> : vector<8xf32>
    %50 = vector.multi_reduction <add>, %49, %cst_28 [1] : vector<8x8xf32> to vector<8xf32>
    %51 = vector.shape_cast %50 : vector<8xf32> to vector<8x1xf32>
    %52 = tpu.reciprocal %51 {approx = true} : vector<8x1xf32> -> vector<8x1xf32>
    %53 = vector.broadcast %52 : vector<8x1xf32> to vector<8x8xf32>
    %54 = arith.mulf %49, %53 : vector<8x8xf32>
    %55 = arith.truncf %54 : vector<8x8xf32> to vector<8x8xbf16>
    %c0_29 = arith.constant 0 : index
    %c0_30 = arith.constant 0 : index
    %c0_31 = arith.constant 0 : index
    %56 = vector.load %arg18[%c0_29, %c0_30, %c0_31] : memref<4x8x8xbf16, #tpu.memory_space<vmem>>, vector<1x8x8xbf16>
    %57 = vector.shape_cast %56 : vector<1x8x8xbf16> to vector<8x8xbf16>
    %cst_32 = arith.constant dense<0.000000e+00> : vector<8x8xf32>
    %58 = tpu.matmul %55, %57, %cst_32 {dimension_numbers = #tpu.dot_dimension_numbers<[1], [0], [0], [1], [0, 0, 1, 1], [], []>} : vector<8x8xbf16>, vector<8x8xbf16>, vector<8x8xf32> -> vector<8x8xf32>
    %59 = arith.truncf %58 : vector<8x8xf32> to vector<8x8xbf16>
    %c0_33 = arith.constant 0 : index
    %c0_34 = arith.constant 0 : index
    %60 = vector.load %arg19[%c0_33, %c0_34] : memref<8x32xbf16, #tpu.memory_space<vmem>>, vector<8x8xbf16>
    tpu.vector_store %arg19[%c0_33, %c0_34], %59 {strides = array<i32>} : memref<8x32xbf16, #tpu.memory_space<vmem>>, vector<8x8xbf16>,
    %61 = vector.extract_strided_slice %39 {offsets = [0, 8], sizes = [8, 8], strides = [1, 1]} : vector<8x32xf32> to vector<8x8xf32>
    %62 = arith.truncf %61 : vector<8x8xf32> to vector<8x8xbf16>
    %c1 = arith.constant 1 : index
    %c0_35 = arith.constant 0 : index
    %c0_36 = arith.constant 0 : index
    %63 = vector.load %arg17[%c1, %c0_35, %c0_36] : memref<4x8x8xbf16, #tpu.memory_space<vmem>>, vector<1x8x8xbf16>
    %64 = vector.shape_cast %63 : vector<1x8x8xbf16> to vector<8x8xbf16>
    %cst_37 = arith.constant dense<0.000000e+00> : vector<8x8xf32>
    %65 = tpu.matmul %62, %64, %cst_37 {dimension_numbers = #tpu.dot_dimension_numbers<[1], [0], [0], [1], [0, 0, 1, 1], [], []>} : vector<8x8xbf16>, vector<8x8xbf16>, vector<8x8xf32> -> vector<8x8xf32>
    %cst_38 = arith.constant dense<0xFF800000> : vector<8xf32>
    %66 = vector.multi_reduction <maximumf>, %65, %cst_38 [1] : vector<8x8xf32> to vector<8xf32>
    %67 = vector.shape_cast %66 : vector<8xf32> to vector<8x1xf32>
    %68 = vector.broadcast %67 : vector<8x1xf32> to vector<8x8xf32>
    %69 = arith.subf %65, %68 : vector<8x8xf32>
    %70 = math.exp %69 : vector<8x8xf32>
    %cst_39 = arith.constant dense<0.000000e+00> : vector<8xf32>
    %71 = vector.multi_reduction <add>, %70, %cst_39 [1] : vector<8x8xf32> to vector<8xf32>
    %72 = vector.shape_cast %71 : vector<8xf32> to vector<8x1xf32>
    %73 = tpu.reciprocal %72 {approx = true} : vector<8x1xf32> -> vector<8x1xf32>
    %74 = vector.broadcast %73 : vector<8x1xf32> to vector<8x8xf32>
    %75 = arith.mulf %70, %74 : vector<8x8xf32>
    %76 = arith.truncf %75 : vector<8x8xf32> to vector<8x8xbf16>
    %c1_40 = arith.constant 1 : index
    %c0_41 = arith.constant 0 : index
    %c0_42 = arith.constant 0 : index
    %77 = vector.load %arg18[%c1_40, %c0_41, %c0_42] : memref<4x8x8xbf16, #tpu.memory_space<vmem>>, vector<1x8x8xbf16>
    %78 = vector.shape_cast %77 : vector<1x8x8xbf16> to vector<8x8xbf16>
    %cst_43 = arith.constant dense<0.000000e+00> : vector<8x8xf32>
    %79 = tpu.matmul %76, %78, %cst_43 {dimension_numbers = #tpu.dot_dimension_numbers<[1], [0], [0], [1], [0, 0, 1, 1], [], []>} : vector<8x8xbf16>, vector<8x8xbf16>, vector<8x8xf32> -> vector<8x8xf32>
    %80 = arith.truncf %79 : vector<8x8xf32> to vector<8x8xbf16>
    %c0_44 = arith.constant 0 : index
    %c8 = arith.constant 8 : index
    %81 = vector.load %arg19[%c0_44, %c8] : memref<8x32xbf16, #tpu.memory_space<vmem>>, vector<8x8xbf16>
    tpu.vector_store %arg19[%c0_44, %c8], %80 {strides = array<i32>} : memref<8x32xbf16, #tpu.memory_space<vmem>>, vector<8x8xbf16>,
    %82 = vector.extract_strided_slice %39 {offsets = [0, 16], sizes = [8, 8], strides = [1, 1]} : vector<8x32xf32> to vector<8x8xf32>
    %83 = arith.truncf %82 : vector<8x8xf32> to vector<8x8xbf16>
    %c2 = arith.constant 2 : index
    %c0_45 = arith.constant 0 : index
    %c0_46 = arith.constant 0 : index
    %84 = vector.load %arg17[%c2, %c0_45, %c0_46] : memref<4x8x8xbf16, #tpu.memory_space<vmem>>, vector<1x8x8xbf16>
    %85 = vector.shape_cast %84 : vector<1x8x8xbf16> to vector<8x8xbf16>
    %cst_47 = arith.constant dense<0.000000e+00> : vector<8x8xf32>
    %86 = tpu.matmul %83, %85, %cst_47 {dimension_numbers = #tpu.dot_dimension_numbers<[1], [0], [0], [1], [0, 0, 1, 1], [], []>} : vector<8x8xbf16>, vector<8x8xbf16>, vector<8x8xf32> -> vector<8x8xf32>
    %cst_48 = arith.constant dense<0xFF800000> : vector<8xf32>
    %87 = vector.multi_reduction <maximumf>, %86, %cst_48 [1] : vector<8x8xf32> to vector<8xf32>
    %88 = vector.shape_cast %87 : vector<8xf32> to vector<8x1xf32>
    %89 = vector.broadcast %88 : vector<8x1xf32> to vector<8x8xf32>
    %90 = arith.subf %86, %89 : vector<8x8xf32>
    %91 = math.exp %90 : vector<8x8xf32>
    %cst_49 = arith.constant dense<0.000000e+00> : vector<8xf32>
    %92 = vector.multi_reduction <add>, %91, %cst_49 [1] : vector<8x8xf32> to vector<8xf32>
    %93 = vector.shape_cast %92 : vector<8xf32> to vector<8x1xf32>
    %94 = tpu.reciprocal %93 {approx = true} : vector<8x1xf32> -> vector<8x1xf32>
    %95 = vector.broadcast %94 : vector<8x1xf32> to vector<8x8xf32>
    %96 = arith.mulf %91, %95 : vector<8x8xf32>
    %97 = arith.truncf %96 : vector<8x8xf32> to vector<8x8xbf16>
    %c2_50 = arith.constant 2 : index
    %c0_51 = arith.constant 0 : index
    %c0_52 = arith.constant 0 : index
    %98 = vector.load %arg18[%c2_50, %c0_51, %c0_52] : memref<4x8x8xbf16, #tpu.memory_space<vmem>>, vector<1x8x8xbf16>
    %99 = vector.shape_cast %98 : vector<1x8x8xbf16> to vector<8x8xbf16>
    %cst_53 = arith.constant dense<0.000000e+00> : vector<8x8xf32>
    %100 = tpu.matmul %97, %99, %cst_53 {dimension_numbers = #tpu.dot_dimension_numbers<[1], [0], [0], [1], [0, 0, 1, 1], [], []>} : vector<8x8xbf16>, vector<8x8xbf16>, vector<8x8xf32> -> vector<8x8xf32>
    %101 = arith.truncf %100 : vector<8x8xf32> to vector<8x8xbf16>
    %c0_54 = arith.constant 0 : index
    %c16 = arith.constant 16 : index
    %102 = vector.load %arg19[%c0_54, %c16] : memref<8x32xbf16, #tpu.memory_space<vmem>>, vector<8x8xbf16>
    tpu.vector_store %arg19[%c0_54, %c16], %101 {strides = array<i32>} : memref<8x32xbf16, #tpu.memory_space<vmem>>, vector<8x8xbf16>,
    %103 = vector.extract_strided_slice %39 {offsets = [0, 24], sizes = [8, 8], strides = [1, 1]} : vector<8x32xf32> to vector<8x8xf32>
    %104 = arith.truncf %103 : vector<8x8xf32> to vector<8x8xbf16>
    %c3 = arith.constant 3 : index
    %c0_55 = arith.constant 0 : index
    %c0_56 = arith.constant 0 : index
    %105 = vector.load %arg17[%c3, %c0_55, %c0_56] : memref<4x8x8xbf16, #tpu.memory_space<vmem>>, vector<1x8x8xbf16>
    %106 = vector.shape_cast %105 : vector<1x8x8xbf16> to vector<8x8xbf16>
    %cst_57 = arith.constant dense<0.000000e+00> : vector<8x8xf32>
    %107 = tpu.matmul %104, %106, %cst_57 {dimension_numbers = #tpu.dot_dimension_numbers<[1], [0], [0], [1], [0, 0, 1, 1], [], []>} : vector<8x8xbf16>, vector<8x8xbf16>, vector<8x8xf32> -> vector<8x8xf32>
    %cst_58 = arith.constant dense<0xFF800000> : vector<8xf32>
    %108 = vector.multi_reduction <maximumf>, %107, %cst_58 [1] : vector<8x8xf32> to vector<8xf32>
    %109 = vector.shape_cast %108 : vector<8xf32> to vector<8x1xf32>
    %110 = vector.broadcast %109 : vector<8x1xf32> to vector<8x8xf32>
    %111 = arith.subf %107, %110 : vector<8x8xf32>
    %112 = math.exp %111 : vector<8x8xf32>
    %cst_59 = arith.constant dense<0.000000e+00> : vector<8xf32>
    %113 = vector.multi_reduction <add>, %112, %cst_59 [1] : vector<8x8xf32> to vector<8xf32>
    %114 = vector.shape_cast %113 : vector<8xf32> to vector<8x1xf32>
    %115 = tpu.reciprocal %114 {approx = true} : vector<8x1xf32> -> vector<8x1xf32>
    %116 = vector.broadcast %115 : vector<8x1xf32> to vector<8x8xf32>
    %117 = arith.mulf %112, %116 : vector<8x8xf32>
    %118 = arith.truncf %117 : vector<8x8xf32> to vector<8x8xbf16>
    %c3_60 = arith.constant 3 : index
    %c0_61 = arith.constant 0 : index
    %c0_62 = arith.constant 0 : index
    %119 = vector.load %arg18[%c3_60, %c0_61, %c0_62] : memref<4x8x8xbf16, #tpu.memory_space<vmem>>, vector<1x8x8xbf16>
    %120 = vector.shape_cast %119 : vector<1x8x8xbf16> to vector<8x8xbf16>
    %cst_63 = arith.constant dense<0.000000e+00> : vector<8x8xf32>
    %121 = tpu.matmul %118, %120, %cst_63 {dimension_numbers = #tpu.dot_dimension_numbers<[1], [0], [0], [1], [0, 0, 1, 1], [], []>} : vector<8x8xbf16>, vector<8x8xbf16>, vector<8x8xf32> -> vector<8x8xf32>
    %122 = arith.truncf %121 : vector<8x8xf32> to vector<8x8xbf16>
    %c0_64 = arith.constant 0 : index
    %c24 = arith.constant 24 : index
    %123 = vector.load %arg19[%c0_64, %c24] : memref<8x32xbf16, #tpu.memory_space<vmem>>, vector<8x8xbf16>
    tpu.vector_store %arg19[%c0_64, %c24], %122 {strides = array<i32>} : memref<8x32xbf16, #tpu.memory_space<vmem>>, vector<8x8xbf16>,
    %c0_65 = arith.constant 0 : index
    %c0_66 = arith.constant 0 : index
    %124 = vector.load %arg19[%c0_65, %c0_66] : memref<8x32xbf16, #tpu.memory_space<vmem>>, vector<8x32xbf16>
    %c0_67 = arith.constant 0 : index
    %c0_68 = arith.constant 0 : index
    %125 = vector.load %arg8[%c0_67, %c0_68] : memref<32x32xbf16, #tpu.memory_space<vmem>>, vector<32x32xbf16>
    %cst_69 = arith.constant dense<0.000000e+00> : vector<8x32xf32>
    %126 = tpu.matmul %124, %125, %cst_69 {dimension_numbers = #tpu.dot_dimension_numbers<[1], [0], [0], [1], [0, 0, 1, 1], [], []>} : vector<8x32xbf16>, vector<32x32xbf16>, vector<8x32xf32> -> vector<8x32xf32>
    %127 = arith.addf %14, %126 : vector<8x32xf32>
    %128 = vector.broadcast %4 : vector<1x32xf32> to vector<8x32xf32>
    %129 = arith.addf %127, %128 : vector<8x32xf32>
    %cst_70 = arith.constant dense<0.000000e+00> : vector<8xf32>
    %130 = vector.multi_reduction <add>, %129, %cst_70 [1] : vector<8x32xf32> to vector<8xf32>
    %131 = vector.shape_cast %130 : vector<8xf32> to vector<8x1xf32>
    %cst_71 = arith.constant 3.200000e+01 : f32
    %132 = vector.broadcast %cst_71 : f32 to vector<8x1xf32>
    %133 = arith.divf %131, %132 : vector<8x1xf32>
    %134 = vector.broadcast %133 : vector<8x1xf32> to vector<8x32xf32>
    %135 = arith.subf %129, %134 : vector<8x32xf32>
    %136 = arith.mulf %135, %135 : vector<8x32xf32>
    %cst_72 = arith.constant dense<0.000000e+00> : vector<8xf32>
    %137 = vector.multi_reduction <add>, %136, %cst_72 [1] : vector<8x32xf32> to vector<8xf32>
    %138 = vector.shape_cast %137 : vector<8xf32> to vector<8x1xf32>
    %cst_73 = arith.constant 3.200000e+01 : f32
    %139 = vector.broadcast %cst_73 : f32 to vector<8x1xf32>
    %140 = arith.divf %138, %139 : vector<8x1xf32>
    %141 = vector.broadcast %133 : vector<8x1xf32> to vector<8x32xf32>
    %142 = arith.subf %129, %141 : vector<8x32xf32>
    %cst_74 = arith.constant 9.99999974E-6 : f32
    %143 = vector.broadcast %cst_74 : f32 to vector<8x1xf32>
    %144 = arith.addf %140, %143 : vector<8x1xf32>
    %145 = math.rsqrt %144 : vector<8x1xf32>
    %146 = vector.broadcast %145 : vector<8x1xf32> to vector<8x32xf32>
    %147 = arith.mulf %142, %146 : vector<8x32xf32>
    %148 = vector.broadcast %2 : vector<1x32xf32> to vector<8x32xf32>
    %149 = arith.mulf %147, %148 : vector<8x32xf32>
    %150 = vector.broadcast %3 : vector<1x32xf32> to vector<8x32xf32>
    %151 = arith.addf %149, %150 : vector<8x32xf32>
    %152 = arith.truncf %151 : vector<8x32xf32> to vector<8x32xbf16>
    %c0_75 = arith.constant 0 : index
    %c0_76 = arith.constant 0 : index
    %153 = vector.load %arg12[%c0_75, %c0_76] : memref<32x64xbf16, #tpu.memory_space<vmem>>, vector<32x64xbf16>
    %cst_77 = arith.constant dense<0.000000e+00> : vector<8x64xf32>
    %154 = tpu.matmul %152, %153, %cst_77 {dimension_numbers = #tpu.dot_dimension_numbers<[1], [0], [0], [1], [0, 0, 1, 1], [], []>} : vector<8x32xbf16>, vector<32x64xbf16>, vector<8x64xf32> -> vector<8x64xf32>
    %155 = vector.broadcast %5 : vector<1x64xf32> to vector<8x64xf32>
    %156 = arith.addf %154, %155 : vector<8x64xf32>
    %cst_78 = arith.constant 5.000000e-01 : f32
    %157 = vector.broadcast %cst_78 : f32 to vector<8x64xf32>
    %158 = arith.mulf %157, %156 : vector<8x64xf32>
    %cst_79 = arith.constant 0.707106769 : f32
    %159 = vector.broadcast %cst_79 : f32 to vector<8x64xf32>
    %160 = arith.mulf %156, %159 : vector<8x64xf32>
    %161 = math.erf %160 : vector<8x64xf32>
    %cst_80 = arith.constant 1.000000e+00 : f32
    %162 = vector.broadcast %cst_80 : f32 to vector<8x64xf32>
    %163 = arith.addf %162, %161 : vector<8x64xf32>
    %164 = arith.mulf %158, %163 : vector<8x64xf32>
    %165 = arith.truncf %164 : vector<8x64xf32> to vector<8x64xbf16>
    %c0_81 = arith.constant 0 : index
    %c0_82 = arith.constant 0 : index
    %166 = vector.load %arg14[%c0_81, %c0_82] : memref<64x32xbf16, #tpu.memory_space<vmem>>, vector<64x32xbf16>
    %cst_83 = arith.constant dense<0.000000e+00> : vector<8x32xf32>
    %167 = tpu.matmul %165, %166, %cst_83 {dimension_numbers = #tpu.dot_dimension_numbers<[1], [0], [0], [1], [0, 0, 1, 1], [], []>} : vector<8x64xbf16>, vector<64x32xbf16>, vector<8x32xf32> -> vector<8x32xf32>
    %168 = vector.broadcast %6 : vector<1x32xf32> to vector<8x32xf32>
    %169 = arith.addf %167, %168 : vector<8x32xf32>
    %170 = arith.addf %129, %169 : vector<8x32xf32>
    %c0_84 = arith.constant 0 : index
    %c0_85 = arith.constant 0 : index
    %c0_86 = arith.constant 0 : index
    %171 = vector.load %arg16[%c0_84, %c0_85, %c0_86] : memref<1x8x32xf32, #tpu.memory_space<vmem>>, vector<1x8x32xf32>
    %172 = vector.shape_cast %171 : vector<1x8x32xf32> to vector<8x32xf32>
    %173 = vector.shape_cast %170 : vector<8x32xf32> to vector<1x8x32xf32>
    tpu.vector_store %arg16[%c0_84, %c0_85, %c0_86], %173 {strides = array<i32>} : memref<1x8x32xf32, #tpu.memory_space<vmem>>, vector<1x8x32xf32>,
    return
  }
  func.func @transform_0(%arg0: i32, %arg1: i32) -> (i32, i32, i32) {
    %c0_i32 = arith.constant 0 : i32
    %c0_i32_0 = arith.constant 0 : i32
    %c0_i32_1 = arith.constant 0 : i32
    return %arg0, %c0_i32, %c0_i32_0 : i32, i32, i32
  }
  func.func @transform_1(%arg0: i32, %arg1: i32) -> (i32, i32) {
    %c0_i32 = arith.constant 0 : i32
    %c0_i32_0 = arith.constant 0 : i32
    %c0_i32_1 = arith.constant 0 : i32
    return %c0_i32, %c0_i32_0 : i32, i32
  }
  func.func @transform_2(%arg0: i32, %arg1: i32) -> (i32, i32) {
    %c0_i32 = arith.constant 0 : i32
    %c0_i32_0 = arith.constant 0 : i32
    %c0_i32_1 = arith.constant 0 : i32
    return %c0_i32, %c0_i32_0 : i32, i32
  }
  func.func @transform_3(%arg0: i32, %arg1: i32) -> (i32, i32) {
    %c0_i32 = arith.constant 0 : i32
    %c0_i32_0 = arith.constant 0 : i32
    %c0_i32_1 = arith.constant 0 : i32
    return %c0_i32, %c0_i32_0 : i32, i32
  }
  func.func @transform_4(%arg0: i32, %arg1: i32) -> (i32, i32, i32) {
    %c0_i32 = arith.constant 0 : i32
    %c0_i32_0 = arith.constant 0 : i32
    %c0_i32_1 = arith.constant 0 : i32
    %c0_i32_2 = arith.constant 0 : i32
    return %c0_i32, %c0_i32_0, %c0_i32_1 : i32, i32, i32
  }
  func.func @transform_5(%arg0: i32, %arg1: i32) -> (i32, i32, i32) {
    %c0_i32 = arith.constant 0 : i32
    %c0_i32_0 = arith.constant 0 : i32
    %c0_i32_1 = arith.constant 0 : i32
    %c0_i32_2 = arith.constant 0 : i32
    return %c0_i32, %c0_i32_0, %c0_i32_1 : i32, i32, i32
  }
  func.func @transform_6(%arg0: i32, %arg1: i32) -> (i32, i32) {
    %c0_i32 = arith.constant 0 : i32
    %c0_i32_0 = arith.constant 0 : i32
    %c0_i32_1 = arith.constant 0 : i32
    return %c0_i32, %c0_i32_0 : i32, i32
  }
  func.func @transform_7(%arg0: i32, %arg1: i32) -> (i32, i32) {
    %c0_i32 = arith.constant 0 : i32
    %c0_i32_0 = arith.constant 0 : i32
    %c0_i32_1 = arith.constant 0 : i32
    return %c0_i32, %c0_i32_0 : i32, i32
  }
  func.func @transform_8(%arg0: i32, %arg1: i32) -> (i32, i32) {
    %c0_i32 = arith.constant 0 : i32
    %c0_i32_0 = arith.constant 0 : i32
    %c0_i32_1 = arith.constant 0 : i32
    return %c0_i32, %c0_i32_0 : i32, i32
  }
  func.func @transform_9(%arg0: i32, %arg1: i32) -> (i32, i32) {
    %c0_i32 = arith.constant 0 : i32
    %c0_i32_0 = arith.constant 0 : i32
    %c0_i32_1 = arith.constant 0 : i32
    return %c0_i32, %c0_i32_0 : i32, i32
  }
  func.func @transform_10(%arg0: i32, %arg1: i32) -> (i32, i32) {
    %c0_i32 = arith.constant 0 : i32
    %c0_i32_0 = arith.constant 0 : i32
    %c0_i32_1 = arith.constant 0 : i32
    return %c0_i32, %c0_i32_0 : i32, i32
  }
  func.func @transform_11(%arg0: i32, %arg1: i32) -> (i32, i32) {
    %c0_i32 = arith.constant 0 : i32
    %c0_i32_0 = arith.constant 0 : i32
    %c0_i32_1 = arith.constant 0 : i32
    return %c0_i32, %c0_i32_0 : i32, i32
  }
  func.func @transform_12(%arg0: i32, %arg1: i32) -> (i32, i32) {
    %c0_i32 = arith.constant 0 : i32
    %c0_i32_0 = arith.constant 0 : i32
    %c0_i32_1 = arith.constant 0 : i32
    return %c0_i32, %c0_i32_0 : i32, i32
  }
  func.func @transform_13(%arg0: i32, %arg1: i32) -> (i32, i32) {
    %c0_i32 = arith.constant 0 : i32
    %c0_i32_0 = arith.constant 0 : i32
    %c0_i32_1 = arith.constant 0 : i32
    return %c0_i32, %c0_i32_0 : i32, i32
  }
  func.func @transform_14(%arg0: i32, %arg1: i32) -> (i32, i32, i32) {
    %c0_i32 = arith.constant 0 : i32
    %c0_i32_0 = arith.constant 0 : i32
    return %arg0, %arg1, %c0_i32 : i32, i32, i32
  }
}

module attributes {stable_mosaic.version = 11 : i64} {
  func.func @transformer_layer_kernel(%arg0: i32, %arg1: i32, %arg2: memref<1x8x32xf32, #tpu.memory_space<vmem>>, %arg3: memref<1x32xf32, #tpu.memory_space<vmem>>, %arg4: memref<1x32xf32, #tpu.memory_space<vmem>>, %arg5: memref<32x32xbf16, #tpu.memory_space<vmem>>, %arg6: memref<4x8x32xbf16, #tpu.memory_space<vmem>>, %arg7: memref<4x32x8xbf16, #tpu.memory_space<vmem>>, %arg8: memref<32x32xbf16, #tpu.memory_space<vmem>>, %arg9: memref<1x32xf32, #tpu.memory_space<vmem>>, %arg10: memref<1x32xf32, #tpu.memory_space<vmem>>, %arg11: memref<1x32xf32, #tpu.memory_space<vmem>>, %arg12: memref<32x64xbf16, #tpu.memory_space<vmem>>, %arg13: memref<1x64xf32, #tpu.memory_space<vmem>>, %arg14: memref<64x32xbf16, #tpu.memory_space<vmem>>, %arg15: memref<1x32xf32, #tpu.memory_space<vmem>>, %arg16: memref<1x8x32xf32, #tpu.memory_space<vmem>>, %arg17: memref<4x8x8xbf16, #tpu.memory_space<vmem>>, %arg18: memref<4x8x8xbf16, #tpu.memory_space<vmem>>, %arg19: memref<8x32xbf16, #tpu.memory_space<vmem>>) attributes {dimension_semantics = [#tpu.dimension_semantics<parallel>, #tpu.dimension_semantics<arbitrary>], iteration_bounds = array<i64: 2, 1>, scalar_prefetch = 0 : i64, scratch_operands = 3 : i64, tpu.core_type = #tpu.core_type<tc>, window_params = [{transform_indices = @transform_0, window_bounds = array<i64: 1, 8, 32>}, {pipeline_mode = #tpu.pipeline_mode<synchronous>, transform_indices = @transform_1, window_bounds = array<i64: 1, 32>}, {pipeline_mode = #tpu.pipeline_mode<synchronous>, transform_indices = @transform_2, window_bounds = array<i64: 1, 32>}, {pipeline_mode = #tpu.pipeline_mode<synchronous>, transform_indices = @transform_3, window_bounds = array<i64: 32, 32>}, {pipeline_mode = #tpu.pipeline_mode<synchronous>, transform_indices = @transform_4, window_bounds = array<i64: 4, 8, 32>}, {pipeline_mode = #tpu.pipeline_mode<synchronous>, transform_indices = @transform_5, window_bounds = array<i64: 4, 32, 8>}, {pipeline_mode = #tpu.pipeline_mode<synchronous>, transform_indices = @transform_6, window_bounds = array<i64: 32, 32>}, {pipeline_mode = #tpu.pipeline_mode<synchronous>, transform_indices = @transform_7, window_bounds = array<i64: 1, 32>}, {pipeline_mode = #tpu.pipeline_mode<synchronous>, transform_indices = @transform_8, window_bounds = array<i64: 1, 32>}, {pipeline_mode = #tpu.pipeline_mode<synchronous>, transform_indices = @transform_9, window_bounds = array<i64: 1, 32>}, {pipeline_mode = #tpu.pipeline_mode<synchronous>, transform_indices = @transform_10, window_bounds = array<i64: 32, 64>}, {pipeline_mode = #tpu.pipeline_mode<synchronous>, transform_indices = @transform_11, window_bounds = array<i64: 1, 64>}, {pipeline_mode = #tpu.pipeline_mode<synchronous>, transform_indices = @transform_12, window_bounds = array<i64: 64, 32>}, {pipeline_mode = #tpu.pipeline_mode<synchronous>, transform_indices = @transform_13, window_bounds = array<i64: 1, 32>}, {transform_indices = @transform_14, window_bounds = array<i64: 1, 8, 32>}]} {
    %c0 = arith.constant 0 : index
    %c0_0 = arith.constant 0 : index
    %0 = vector.load %arg3[%c0, %c0_0] : memref<1x32xf32, #tpu.memory_space<vmem>>, vector<1x32xf32>
    %c0_1 = arith.constant 0 : index
    %c0_2 = arith.constant 0 : index
    %1 = vector.load %arg4[%c0_1, %c0_2] : memref<1x32xf32, #tpu.memory_space<vmem>>, vector<1x32xf32>
    %c0_3 = arith.constant 0 : index
    %c0_4 = arith.constant 0 : index
    %2 = vector.load %arg10[%c0_3, %c0_4] : memref<1x32xf32, #tpu.memory_space<vmem>>, vector<1x32xf32>
    %c0_5 = arith.constant 0 : index
    %c0_6 = arith.constant 0 : index
    %3 = vector.load %arg11[%c0_5, %c0_6] : memref<1x32xf32, #tpu.memory_space<vmem>>, vector<1x32xf32>
    %c0_7 = arith.constant 0 : index
    %c0_8 = arith.constant 0 : index
    %4 = vector.load %arg9[%c0_7, %c0_8] : memref<1x32xf32, #tpu.memory_space<vmem>>, vector<1x32xf32>
    %c0_9 = arith.constant 0 : index
    %c0_10 = arith.constant 0 : index
    %5 = vector.load %arg13[%c0_9, %c0_10] : memref<1x64xf32, #tpu.memory_space<vmem>>, vector<1x64xf32>
    %c0_11 = arith.constant 0 : index
    %c0_12 = arith.constant 0 : index
    %6 = vector.load %arg15[%c0_11, %c0_12] : memref<1x32xf32, #tpu.memory_space<vmem>>, vector<1x32xf32>
    %c0_i32 = arith.constant 0 : i32
    %7 = arith.cmpi eq, %arg1, %c0_i32 : i32
    %8 = arith.extui %7 : i1 to i32
    %c0_i32_13 = arith.constant 0 : i32
    %9 = arith.cmpi ne, %8, %c0_i32_13 : i32
    scf.if %9 {
      %c0_87 = arith.constant 0 : index
      %c0_88 = arith.constant 0 : index
      %c0_89 = arith.constant 0 : index
      %174 = vector.load %arg2[%c0_87, %c0_88, %c0_89] : memref<1x8x32xf32, #tpu.memory_space<vmem>>, vector<1x8x32xf32>
      %175 = vector.shape_cast %174 : vector<1x8x32xf32> to vector<8x32xf32>
      %cst_90 = arith.constant dense<0.000000e+00> : vector<8xf32>
      %176 = vector.multi_reduction <add>, %175, %cst_90 [1] : vector<8x32xf32> to vector<8xf32>
      %177 = vector.shape_cast %176 : vector<8xf32> to vector<8x1xf32>
      %cst_91 = arith.constant 3.200000e+01 : f32
      %178 = vector.broadcast %cst_91 : f32 to vector<8x1xf32>
      %179 = arith.divf %177, %178 : vector<8x1xf32>
      %180 = vector.broadcast %179 : vector<8x1xf32> to vector<8x32xf32>
      %181 = arith.subf %175, %180 : vector<8x32xf32>
      %182 = arith.mulf %181, %181 : vector<8x32xf32>
      %cst_92 = arith.constant dense<0.000000e+00> : vector<8xf32>
      %183 = vector.multi_reduction <add>, %182, %cst_92 [1] : vector<8x32xf32> to vector<8xf32>
      %184 = vector.shape_cast %183 : vector<8xf32> to vector<8x1xf32>
      %cst_93 = arith.constant 3.200000e+01 : f32
      %185 = vector.broadcast %cst_93 : f32 to vector<8x1xf32>
      %186 = arith.divf %184, %185 : vector<8x1xf32>
      %187 = vector.broadcast %179 : vector<8x1xf32> to vector<8x32xf32>
      %188 = arith.subf %175, %187 : vector<8x32xf32>
      %cst_94 = arith.constant 9.99999974E-6 : f32
      %189 = vector.broadcast %cst_94 : f32 to vector<8x1xf32>
      %190 = arith.addf %186, %189 : vector<8x1xf32>
      %191 = math.rsqrt %190 : vector<8x1xf32>
      %192 = vector.broadcast %191 : vector<8x1xf32> to vector<8x32xf32>
      %193 = arith.mulf %188, %192 : vector<8x32xf32>
      %194 = vector.broadcast %0 : vector<1x32xf32> to vector<8x32xf32>
      %195 = arith.mulf %193, %194 : vector<8x32xf32>
      %196 = vector.broadcast %1 : vector<1x32xf32> to vector<8x32xf32>
      %197 = arith.addf %195, %196 : vector<8x32xf32>
      %198 = arith.truncf %197 : vector<8x32xf32> to vector<8x32xbf16>
      %c0_95 = arith.constant 0 : index
      %c0_96 = arith.constant 0 : index
      %c0_97 = arith.constant 0 : index
      %199 = vector.load %arg6[%c0_95, %c0_96, %c0_97] : memref<4x8x32xbf16, #tpu.memory_space<vmem>>, vector<1x8x32xbf16>
      %200 = vector.shape_cast %199 : vector<1x8x32xbf16> to vector<8x32xbf16>
      %cst_98 = arith.constant dense<0.000000e+00> : vector<8x8xf32>
      %201 = tpu.matmul %200, %198, %cst_98 {dimension_numbers = #tpu.dot_dimension_numbers<[1], [1], [0], [0], [0, 0, 1, 0], [], []>} : vector<8x32xbf16>, vector<8x32xbf16>, vector<8x8xf32> -> vector<8x8xf32>
      %202 = arith.truncf %201 : vector<8x8xf32> to vector<8x8xbf16>
      %c0_99 = arith.constant 0 : index
      %c0_100 = arith.constant 0 : index
      %c0_101 = arith.constant 0 : index
      %203 = vector.load %arg17[%c0_99, %c0_100, %c0_101] : memref<4x8x8xbf16, #tpu.memory_space<vmem>>, vector<1x8x8xbf16>
      %204 = vector.shape_cast %203 : vector<1x8x8xbf16> to vector<8x8xbf16>
      %205 = vector.shape_cast %202 : vector<8x8xbf16> to vector<1x8x8xbf16>
      tpu.vector_store %arg17[%c0_99, %c0_100, %c0_101], %205 {strides = array<i32>} : memref<4x8x8xbf16, #tpu.memory_space<vmem>>, vector<1x8x8xbf16>,
      %c0_102 = arith.constant 0 : index
      %c0_103 = arith.constant 0 : index
      %c0_104 = arith.constant 0 : index
      %206 = vector.load %arg7[%c0_102, %c0_103, %c0_104] : memref<4x32x8xbf16, #tpu.memory_space<vmem>>, vector<1x32x8xbf16>
      %207 = vector.shape_cast %206 : vector<1x32x8xbf16> to vector<32x8xbf16>
      %cst_105 = arith.constant dense<0.000000e+00> : vector<8x8xf32>
      %208 = tpu.matmul %198, %207, %cst_105 {dimension_numbers = #tpu.dot_dimension_numbers<[1], [0], [0], [1], [0, 0, 1, 1], [], []>} : vector<8x32xbf16>, vector<32x8xbf16>, vector<8x8xf32> -> vector<8x8xf32>
      %209 = arith.truncf %208 : vector<8x8xf32> to vector<8x8xbf16>
      %c0_106 = arith.constant 0 : index
      %c0_107 = arith.constant 0 : index
      %c0_108 = arith.constant 0 : index
      %210 = vector.load %arg18[%c0_106, %c0_107, %c0_108] : memref<4x8x8xbf16, #tpu.memory_space<vmem>>, vector<1x8x8xbf16>
      %211 = vector.shape_cast %210 : vector<1x8x8xbf16> to vector<8x8xbf16>
      %212 = vector.shape_cast %209 : vector<8x8xbf16> to vector<1x8x8xbf16>
      tpu.vector_store %arg18[%c0_106, %c0_107, %c0_108], %212 {strides = array<i32>} : memref<4x8x8xbf16, #tpu.memory_space<vmem>>, vector<1x8x8xbf16>,
      %c1_109 = arith.constant 1 : index
      %c0_110 = arith.constant 0 : index
      %c0_111 = arith.constant 0 : index
      %213 = vector.load %arg6[%c1_109, %c0_110, %c0_111] : memref<4x8x32xbf16, #tpu.memory_space<vmem>>, vector<1x8x32xbf16>
      %214 = vector.shape_cast %213 : vector<1x8x32xbf16> to vector<8x32xbf16>
      %cst_112 = arith.constant dense<0.000000e+00> : vector<8x8xf32>
      %215 = tpu.matmul %214, %198, %cst_112 {dimension_numbers = #tpu.dot_dimension_numbers<[1], [1], [0], [0], [0, 0, 1, 0], [], []>} : vector<8x32xbf16>, vector<8x32xbf16>, vector<8x8xf32> -> vector<8x8xf32>
      %216 = arith.truncf %215 : vector<8x8xf32> to vector<8x8xbf16>
      %c1_113 = arith.constant 1 : index
      %c0_114 = arith.constant 0 : index
      %c0_115 = arith.constant 0 : index
      %217 = vector.load %arg17[%c1_113, %c0_114, %c0_115] : memref<4x8x8xbf16, #tpu.memory_space<vmem>>, vector<1x8x8xbf16>
      %218 = vector.shape_cast %217 : vector<1x8x8xbf16> to vector<8x8xbf16>
      %219 = vector.shape_cast %216 : vector<8x8xbf16> to vector<1x8x8xbf16>
      tpu.vector_store %arg17[%c1_113, %c0_114, %c0_115], %219 {strides = array<i32>} : memref<4x8x8xbf16, #tpu.memory_space<vmem>>, vector<1x8x8xbf16>,
      %c1_116 = arith.constant 1 : index
      %c0_117 = arith.constant 0 : index
      %c0_118 = arith.constant 0 : index
      %220 = vector.load %arg7[%c1_116, %c0_117, %c0_118] : memref<4x32x8xbf16, #tpu.memory_space<vmem>>, vector<1x32x8xbf16>
      %221 = vector.shape_cast %220 : vector<1x32x8xbf16> to vector<32x8xbf16>
      %cst_119 = arith.constant dense<0.000000e+00> : vector<8x8xf32>
      %222 = tpu.matmul %198, %221, %cst_119 {dimension_numbers = #tpu.dot_dimension_numbers<[1], [0], [0], [1], [0, 0, 1, 1], [], []>} : vector<8x32xbf16>, vector<32x8xbf16>, vector<8x8xf32> -> vector<8x8xf32>
      %223 = arith.truncf %222 : vector<8x8xf32> to vector<8x8xbf16>
      %c1_120 = arith.constant 1 : index
      %c0_121 = arith.constant 0 : index
      %c0_122 = arith.constant 0 : index
      %224 = vector.load %arg18[%c1_120, %c0_121, %c0_122] : memref<4x8x8xbf16, #tpu.memory_space<vmem>>, vector<1x8x8xbf16>
      %225 = vector.shape_cast %224 : vector<1x8x8xbf16> to vector<8x8xbf16>
      %226 = vector.shape_cast %223 : vector<8x8xbf16> to vector<1x8x8xbf16>
      tpu.vector_store %arg18[%c1_120, %c0_121, %c0_122], %226 {strides = array<i32>} : memref<4x8x8xbf16, #tpu.memory_space<vmem>>, vector<1x8x8xbf16>,
      %c2_123 = arith.constant 2 : index
      %c0_124 = arith.constant 0 : index
      %c0_125 = arith.constant 0 : index
      %227 = vector.load %arg6[%c2_123, %c0_124, %c0_125] : memref<4x8x32xbf16, #tpu.memory_space<vmem>>, vector<1x8x32xbf16>
      %228 = vector.shape_cast %227 : vector<1x8x32xbf16> to vector<8x32xbf16>
      %cst_126 = arith.constant dense<0.000000e+00> : vector<8x8xf32>
      %229 = tpu.matmul %228, %198, %cst_126 {dimension_numbers = #tpu.dot_dimension_numbers<[1], [1], [0], [0], [0, 0, 1, 0], [], []>} : vector<8x32xbf16>, vector<8x32xbf16>, vector<8x8xf32> -> vector<8x8xf32>
      %230 = arith.truncf %229 : vector<8x8xf32> to vector<8x8xbf16>
      %c2_127 = arith.constant 2 : index
      %c0_128 = arith.constant 0 : index
      %c0_129 = arith.constant 0 : index
      %231 = vector.load %arg17[%c2_127, %c0_128, %c0_129] : memref<4x8x8xbf16, #tpu.memory_space<vmem>>, vector<1x8x8xbf16>
      %232 = vector.shape_cast %231 : vector<1x8x8xbf16> to vector<8x8xbf16>
      %233 = vector.shape_cast %230 : vector<8x8xbf16> to vector<1x8x8xbf16>
      tpu.vector_store %arg17[%c2_127, %c0_128, %c0_129], %233 {strides = array<i32>} : memref<4x8x8xbf16, #tpu.memory_space<vmem>>, vector<1x8x8xbf16>,
      %c2_130 = arith.constant 2 : index
      %c0_131 = arith.constant 0 : index
      %c0_132 = arith.constant 0 : index
      %234 = vector.load %arg7[%c2_130, %c0_131, %c0_132] : memref<4x32x8xbf16, #tpu.memory_space<vmem>>, vector<1x32x8xbf16>
      %235 = vector.shape_cast %234 : vector<1x32x8xbf16> to vector<32x8xbf16>
      %cst_133 = arith.constant dense<0.000000e+00> : vector<8x8xf32>
      %236 = tpu.matmul %198, %235, %cst_133 {dimension_numbers = #tpu.dot_dimension_numbers<[1], [0], [0], [1], [0, 0, 1, 1], [], []>} : vector<8x32xbf16>, vector<32x8xbf16>, vector<8x8xf32> -> vector<8x8xf32>
      %237 = arith.truncf %236 : vector<8x8xf32> to vector<8x8xbf16>
      %c2_134 = arith.constant 2 : index
      %c0_135 = arith.constant 0 : index
      %c0_136 = arith.constant 0 : index
      %238 = vector.load %arg18[%c2_134, %c0_135, %c0_136] : memref<4x8x8xbf16, #tpu.memory_space<vmem>>, vector<1x8x8xbf16>
      %239 = vector.shape_cast %238 : vector<1x8x8xbf16> to vector<8x8xbf16>
      %240 = vector.shape_cast %237 : vector<8x8xbf16> to vector<1x8x8xbf16>
      tpu.vector_store %arg18[%c2_134, %c0_135, %c0_136], %240 {strides = array<i32>} : memref<4x8x8xbf16, #tpu.memory_space<vmem>>, vector<1x8x8xbf16>,
      %c3_137 = arith.constant 3 : index
      %c0_138 = arith.constant 0 : index
      %c0_139 = arith.constant 0 : index
      %241 = vector.load %arg6[%c3_137, %c0_138, %c0_139] : memref<4x8x32xbf16, #tpu.memory_space<vmem>>, vector<1x8x32xbf16>
      %242 = vector.shape_cast %241 : vector<1x8x32xbf16> to vector<8x32xbf16>
      %cst_140 = arith.constant dense<0.000000e+00> : vector<8x8xf32>
      %243 = tpu.matmul %242, %198, %cst_140 {dimension_numbers = #tpu.dot_dimension_numbers<[1], [1], [0], [0], [0, 0, 1, 0], [], []>} : vector<8x32xbf16>, vector<8x32xbf16>, vector<8x8xf32> -> vector<8x8xf32>
      %244 = arith.truncf %243 : vector<8x8xf32> to vector<8x8xbf16>
      %c3_141 = arith.constant 3 : index
      %c0_142 = arith.constant 0 : index
      %c0_143 = arith.constant 0 : index
      %245 = vector.load %arg17[%c3_141, %c0_142, %c0_143] : memref<4x8x8xbf16, #tpu.memory_space<vmem>>, vector<1x8x8xbf16>
      %246 = vector.shape_cast %245 : vector<1x8x8xbf16> to vector<8x8xbf16>
      %247 = vector.shape_cast %244 : vector<8x8xbf16> to vector<1x8x8xbf16>
      tpu.vector_store %arg17[%c3_141, %c0_142, %c0_143], %247 {strides = array<i32>} : memref<4x8x8xbf16, #tpu.memory_space<vmem>>, vector<1x8x8xbf16>,
      %c3_144 = arith.constant 3 : index
      %c0_145 = arith.constant 0 : index
      %c0_146 = arith.constant 0 : index
      %248 = vector.load %arg7[%c3_144, %c0_145, %c0_146] : memref<4x32x8xbf16, #tpu.memory_space<vmem>>, vector<1x32x8xbf16>
      %249 = vector.shape_cast %248 : vector<1x32x8xbf16> to vector<32x8xbf16>
      %cst_147 = arith.constant dense<0.000000e+00> : vector<8x8xf32>
      %250 = tpu.matmul %198, %249, %cst_147 {dimension_numbers = #tpu.dot_dimension_numbers<[1], [0], [0], [1], [0, 0, 1, 1], [], []>} : vector<8x32xbf16>, vector<32x8xbf16>, vector<8x8xf32> -> vector<8x8xf32>
      %251 = arith.truncf %250 : vector<8x8xf32> to vector<8x8xbf16>
      %c3_148 = arith.constant 3 : index
      %c0_149 = arith.constant 0 : index
      %c0_150 = arith.constant 0 : index
      %252 = vector.load %arg18[%c3_148, %c0_149, %c0_150] : memref<4x8x8xbf16, #tpu.memory_space<vmem>>, vector<1x8x8xbf16>
      %253 = vector.shape_cast %252 : vector<1x8x8xbf16> to vector<8x8xbf16>
      %254 = vector.shape_cast %251 : vector<8x8xbf16> to vector<1x8x8xbf16>
      tpu.vector_store %arg18[%c3_148, %c0_149, %c0_150], %254 {strides = array<i32>} : memref<4x8x8xbf16, #tpu.memory_space<vmem>>, vector<1x8x8xbf16>,
    } else {
    }
    %c8_i32 = arith.constant 8 : i32
    %10 = arith.muli %arg1, %c8_i32 : i32
    %11 = tpu.assume_multiple %10, 8 : i32
    %c0_14 = arith.constant 0 : index
    %12 = arith.index_cast %11 : i32 to index
    %c0_15 = arith.constant 0 : index
    %13 = vector.load %arg2[%c0_14, %12, %c0_15] : memref<1x8x32xf32, #tpu.memory_space<vmem>>, vector<1x8x32xf32>
    %14 = vector.shape_cast %13 : vector<1x8x32xf32> to vector<8x32xf32>
    %cst = arith.constant dense<0.000000e+00> : vector<8xf32>
    %15 = vector.multi_reduction <add>, %14, %cst [1] : vector<8x32xf32> to vector<8xf32>
    %16 = vector.shape_cast %15 : vector<8xf32> to vector<8x1xf32>
    %cst_16 = arith.constant 3.200000e+01 : f32
    %17 = vector.broadcast %cst_16 : f32 to vector<8x1xf32>
    %18 = arith.divf %16, %17 : vector<8x1xf32>
    %19 = vector.broadcast %18 : vector<8x1xf32> to vector<8x32xf32>
    %20 = arith.subf %14, %19 : vector<8x32xf32>
    %21 = arith.mulf %20, %20 : vector<8x32xf32>
    %cst_17 = arith.constant dense<0.000000e+00> : vector<8xf32>
    %22 = vector.multi_reduction <add>, %21, %cst_17 [1] : vector<8x32xf32> to vector<8xf32>
    %23 = vector.shape_cast %22 : vector<8xf32> to vector<8x1xf32>
    %cst_18 = arith.constant 3.200000e+01 : f32
    %24 = vector.broadcast %cst_18 : f32 to vector<8x1xf32>
    %25 = arith.divf %23, %24 : vector<8x1xf32>
    %26 = vector.broadcast %18 : vector<8x1xf32> to vector<8x32xf32>
    %27 = arith.subf %14, %26 : vector<8x32xf32>
    %cst_19 = arith.constant 9.99999974E-6 : f32
    %28 = vector.broadcast %cst_19 : f32 to vector<8x1xf32>
    %29 = arith.addf %25, %28 : vector<8x1xf32>
    %30 = math.rsqrt %29 : vector<8x1xf32>
    %31 = vector.broadcast %30 : vector<8x1xf32> to vector<8x32xf32>
    %32 = arith.mulf %27, %31 : vector<8x32xf32>
    %33 = vector.broadcast %0 : vector<1x32xf32> to vector<8x32xf32>
    %34 = arith.mulf %32, %33 : vector<8x32xf32>
    %35 = vector.broadcast %1 : vector<1x32xf32> to vector<8x32xf32>
    %36 = arith.addf %34, %35 : vector<8x32xf32>
    %37 = arith.truncf %36 : vector<8x32xf32> to vector<8x32xbf16>
    %c0_20 = arith.constant 0 : index
    %c0_21 = arith.constant 0 : index
    %38 = vector.load %arg5[%c0_20, %c0_21] : memref<32x32xbf16, #tpu.memory_space<vmem>>, vector<32x32xbf16>
    %cst_22 = arith.constant dense<0.000000e+00> : vector<8x32xf32>
    %39 = tpu.matmul %37, %38, %cst_22 {dimension_numbers = #tpu.dot_dimension_numbers<[1], [0], [0], [1], [0, 0, 1, 1], [], []>} : vector<8x32xbf16>, vector<32x32xbf16>, vector<8x32xf32> -> vector<8x32xf32>
    %40 = vector.extract_strided_slice %39 {offsets = [0, 0], sizes = [8, 8], strides = [1, 1]} : vector<8x32xf32> to vector<8x8xf32>
    %41 = arith.truncf %40 : vector<8x8xf32> to vector<8x8xbf16>
    %c0_23 = arith.constant 0 : index
    %c0_24 = arith.constant 0 : index
    %c0_25 = arith.constant 0 : index
    %42 = vector.load %arg17[%c0_23, %c0_24, %c0_25] : memref<4x8x8xbf16, #tpu.memory_space<vmem>>, vector<1x8x8xbf16>
    %43 = vector.shape_cast %42 : vector<1x8x8xbf16> to vector<8x8xbf16>
    %cst_26 = arith.constant dense<0.000000e+00> : vector<8x8xf32>
    %44 = tpu.matmul %41, %43, %cst_26 {dimension_numbers = #tpu.dot_dimension_numbers<[1], [0], [0], [1], [0, 0, 1, 1], [], []>} : vector<8x8xbf16>, vector<8x8xbf16>, vector<8x8xf32> -> vector<8x8xf32>
    %cst_27 = arith.constant dense<0xFF800000> : vector<8xf32>
    %45 = vector.multi_reduction <maximumf>, %44, %cst_27 [1] : vector<8x8xf32> to vector<8xf32>
    %46 = vector.shape_cast %45 : vector<8xf32> to vector<8x1xf32>
    %47 = vector.broadcast %46 : vector<8x1xf32> to vector<8x8xf32>
    %48 = arith.subf %44, %47 : vector<8x8xf32>
    %49 = math.exp %48 : vector<8x8xf32>
    %cst_28 = arith.constant dense<0.000000e+00> : vector<8xf32>
    %50 = vector.multi_reduction <add>, %49, %cst_28 [1] : vector<8x8xf32> to vector<8xf32>
    %51 = vector.shape_cast %50 : vector<8xf32> to vector<8x1xf32>
    %52 = tpu.reciprocal %51 {approx = true} : vector<8x1xf32> -> vector<8x1xf32>
    %53 = vector.broadcast %52 : vector<8x1xf32> to vector<8x8xf32>
    %54 = arith.mulf %49, %53 : vector<8x8xf32>
    %55 = arith.truncf %54 : vector<8x8xf32> to vector<8x8xbf16>
    %c0_29 = arith.constant 0 : index
    %c0_30 = arith.constant 0 : index
    %c0_31 = arith.constant 0 : index
    %56 = vector.load %arg18[%c0_29, %c0_30, %c0_31] : memref<4x8x8xbf16, #tpu.memory_space<vmem>>, vector<1x8x8xbf16>
    %57 = vector.shape_cast %56 : vector<1x8x8xbf16> to vector<8x8xbf16>
    %cst_32 = arith.constant dense<0.000000e+00> : vector<8x8xf32>
    %58 = tpu.matmul %55, %57, %cst_32 {dimension_numbers = #tpu.dot_dimension_numbers<[1], [0], [0], [1], [0, 0, 1, 1], [], []>} : vector<8x8xbf16>, vector<8x8xbf16>, vector<8x8xf32> -> vector<8x8xf32>
    %59 = arith.truncf %58 : vector<8x8xf32> to vector<8x8xbf16>
    %c0_33 = arith.constant 0 : index
    %c0_34 = arith.constant 0 : index
    %60 = vector.load %arg19[%c0_33, %c0_34] : memref<8x32xbf16, #tpu.memory_space<vmem>>, vector<8x8xbf16>
    tpu.vector_store %arg19[%c0_33, %c0_34], %59 {strides = array<i32>} : memref<8x32xbf16, #tpu.memory_space<vmem>>, vector<8x8xbf16>,
    %61 = vector.extract_strided_slice %39 {offsets = [0, 8], sizes = [8, 8], strides = [1, 1]} : vector<8x32xf32> to vector<8x8xf32>
    %62 = arith.truncf %61 : vector<8x8xf32> to vector<8x8xbf16>
    %c1 = arith.constant 1 : index
    %c0_35 = arith.constant 0 : index
    %c0_36 = arith.constant 0 : index
    %63 = vector.load %arg17[%c1, %c0_35, %c0_36] : memref<4x8x8xbf16, #tpu.memory_space<vmem>>, vector<1x8x8xbf16>
    %64 = vector.shape_cast %63 : vector<1x8x8xbf16> to vector<8x8xbf16>
    %cst_37 = arith.constant dense<0.000000e+00> : vector<8x8xf32>
    %65 = tpu.matmul %62, %64, %cst_37 {dimension_numbers = #tpu.dot_dimension_numbers<[1], [0], [0], [1], [0, 0, 1, 1], [], []>} : vector<8x8xbf16>, vector<8x8xbf16>, vector<8x8xf32> -> vector<8x8xf32>
    %cst_38 = arith.constant dense<0xFF800000> : vector<8xf32>
    %66 = vector.multi_reduction <maximumf>, %65, %cst_38 [1] : vector<8x8xf32> to vector<8xf32>
    %67 = vector.shape_cast %66 : vector<8xf32> to vector<8x1xf32>
    %68 = vector.broadcast %67 : vector<8x1xf32> to vector<8x8xf32>
    %69 = arith.subf %65, %68 : vector<8x8xf32>
    %70 = math.exp %69 : vector<8x8xf32>
    %cst_39 = arith.constant dense<0.000000e+00> : vector<8xf32>
    %71 = vector.multi_reduction <add>, %70, %cst_39 [1] : vector<8x8xf32> to vector<8xf32>
    %72 = vector.shape_cast %71 : vector<8xf32> to vector<8x1xf32>
    %73 = tpu.reciprocal %72 {approx = true} : vector<8x1xf32> -> vector<8x1xf32>
    %74 = vector.broadcast %73 : vector<8x1xf32> to vector<8x8xf32>
    %75 = arith.mulf %70, %74 : vector<8x8xf32>
    %76 = arith.truncf %75 : vector<8x8xf32> to vector<8x8xbf16>
    %c1_40 = arith.constant 1 : index
    %c0_41 = arith.constant 0 : index
    %c0_42 = arith.constant 0 : index
    %77 = vector.load %arg18[%c1_40, %c0_41, %c0_42] : memref<4x8x8xbf16, #tpu.memory_space<vmem>>, vector<1x8x8xbf16>
    %78 = vector.shape_cast %77 : vector<1x8x8xbf16> to vector<8x8xbf16>
    %cst_43 = arith.constant dense<0.000000e+00> : vector<8x8xf32>
    %79 = tpu.matmul %76, %78, %cst_43 {dimension_numbers = #tpu.dot_dimension_numbers<[1], [0], [0], [1], [0, 0, 1, 1], [], []>} : vector<8x8xbf16>, vector<8x8xbf16>, vector<8x8xf32> -> vector<8x8xf32>
    %80 = arith.truncf %79 : vector<8x8xf32> to vector<8x8xbf16>
    %c0_44 = arith.constant 0 : index
    %c8 = arith.constant 8 : index
    %81 = vector.load %arg19[%c0_44, %c8] : memref<8x32xbf16, #tpu.memory_space<vmem>>, vector<8x8xbf16>
    tpu.vector_store %arg19[%c0_44, %c8], %80 {strides = array<i32>} : memref<8x32xbf16, #tpu.memory_space<vmem>>, vector<8x8xbf16>,
    %82 = vector.extract_strided_slice %39 {offsets = [0, 16], sizes = [8, 8], strides = [1, 1]} : vector<8x32xf32> to vector<8x8xf32>
    %83 = arith.truncf %82 : vector<8x8xf32> to vector<8x8xbf16>
    %c2 = arith.constant 2 : index
    %c0_45 = arith.constant 0 : index
    %c0_46 = arith.constant 0 : index
    %84 = vector.load %arg17[%c2, %c0_45, %c0_46] : memref<4x8x8xbf16, #tpu.memory_space<vmem>>, vector<1x8x8xbf16>
    %85 = vector.shape_cast %84 : vector<1x8x8xbf16> to vector<8x8xbf16>
    %cst_47 = arith.constant dense<0.000000e+00> : vector<8x8xf32>
    %86 = tpu.matmul %83, %85, %cst_47 {dimension_numbers = #tpu.dot_dimension_numbers<[1], [0], [0], [1], [0, 0, 1, 1], [], []>} : vector<8x8xbf16>, vector<8x8xbf16>, vector<8x8xf32> -> vector<8x8xf32>
    %cst_48 = arith.constant dense<0xFF800000> : vector<8xf32>
    %87 = vector.multi_reduction <maximumf>, %86, %cst_48 [1] : vector<8x8xf32> to vector<8xf32>
    %88 = vector.shape_cast %87 : vector<8xf32> to vector<8x1xf32>
    %89 = vector.broadcast %88 : vector<8x1xf32> to vector<8x8xf32>
    %90 = arith.subf %86, %89 : vector<8x8xf32>
    %91 = math.exp %90 : vector<8x8xf32>
    %cst_49 = arith.constant dense<0.000000e+00> : vector<8xf32>
    %92 = vector.multi_reduction <add>, %91, %cst_49 [1] : vector<8x8xf32> to vector<8xf32>
    %93 = vector.shape_cast %92 : vector<8xf32> to vector<8x1xf32>
    %94 = tpu.reciprocal %93 {approx = true} : vector<8x1xf32> -> vector<8x1xf32>
    %95 = vector.broadcast %94 : vector<8x1xf32> to vector<8x8xf32>
    %96 = arith.mulf %91, %95 : vector<8x8xf32>
    %97 = arith.truncf %96 : vector<8x8xf32> to vector<8x8xbf16>
    %c2_50 = arith.constant 2 : index
    %c0_51 = arith.constant 0 : index
    %c0_52 = arith.constant 0 : index
    %98 = vector.load %arg18[%c2_50, %c0_51, %c0_52] : memref<4x8x8xbf16, #tpu.memory_space<vmem>>, vector<1x8x8xbf16>
    %99 = vector.shape_cast %98 : vector<1x8x8xbf16> to vector<8x8xbf16>
    %cst_53 = arith.constant dense<0.000000e+00> : vector<8x8xf32>
    %100 = tpu.matmul %97, %99, %cst_53 {dimension_numbers = #tpu.dot_dimension_numbers<[1], [0], [0], [1], [0, 0, 1, 1], [], []>} : vector<8x8xbf16>, vector<8x8xbf16>, vector<8x8xf32> -> vector<8x8xf32>
    %101 = arith.truncf %100 : vector<8x8xf32> to vector<8x8xbf16>
    %c0_54 = arith.constant 0 : index
    %c16 = arith.constant 16 : index
    %102 = vector.load %arg19[%c0_54, %c16] : memref<8x32xbf16, #tpu.memory_space<vmem>>, vector<8x8xbf16>
    tpu.vector_store %arg19[%c0_54, %c16], %101 {strides = array<i32>} : memref<8x32xbf16, #tpu.memory_space<vmem>>, vector<8x8xbf16>,
    %103 = vector.extract_strided_slice %39 {offsets = [0, 24], sizes = [8, 8], strides = [1, 1]} : vector<8x32xf32> to vector<8x8xf32>
    %104 = arith.truncf %103 : vector<8x8xf32> to vector<8x8xbf16>
    %c3 = arith.constant 3 : index
    %c0_55 = arith.constant 0 : index
    %c0_56 = arith.constant 0 : index
    %105 = vector.load %arg17[%c3, %c0_55, %c0_56] : memref<4x8x8xbf16, #tpu.memory_space<vmem>>, vector<1x8x8xbf16>
    %106 = vector.shape_cast %105 : vector<1x8x8xbf16> to vector<8x8xbf16>
    %cst_57 = arith.constant dense<0.000000e+00> : vector<8x8xf32>
    %107 = tpu.matmul %104, %106, %cst_57 {dimension_numbers = #tpu.dot_dimension_numbers<[1], [0], [0], [1], [0, 0, 1, 1], [], []>} : vector<8x8xbf16>, vector<8x8xbf16>, vector<8x8xf32> -> vector<8x8xf32>
    %cst_58 = arith.constant dense<0xFF800000> : vector<8xf32>
    %108 = vector.multi_reduction <maximumf>, %107, %cst_58 [1] : vector<8x8xf32> to vector<8xf32>
    %109 = vector.shape_cast %108 : vector<8xf32> to vector<8x1xf32>
    %110 = vector.broadcast %109 : vector<8x1xf32> to vector<8x8xf32>
    %111 = arith.subf %107, %110 : vector<8x8xf32>
    %112 = math.exp %111 : vector<8x8xf32>
    %cst_59 = arith.constant dense<0.000000e+00> : vector<8xf32>
    %113 = vector.multi_reduction <add>, %112, %cst_59 [1] : vector<8x8xf32> to vector<8xf32>
    %114 = vector.shape_cast %113 : vector<8xf32> to vector<8x1xf32>
    %115 = tpu.reciprocal %114 {approx = true} : vector<8x1xf32> -> vector<8x1xf32>
    %116 = vector.broadcast %115 : vector<8x1xf32> to vector<8x8xf32>
    %117 = arith.mulf %112, %116 : vector<8x8xf32>
    %118 = arith.truncf %117 : vector<8x8xf32> to vector<8x8xbf16>
    %c3_60 = arith.constant 3 : index
    %c0_61 = arith.constant 0 : index
    %c0_62 = arith.constant 0 : index
    %119 = vector.load %arg18[%c3_60, %c0_61, %c0_62] : memref<4x8x8xbf16, #tpu.memory_space<vmem>>, vector<1x8x8xbf16>
    %120 = vector.shape_cast %119 : vector<1x8x8xbf16> to vector<8x8xbf16>
    %cst_63 = arith.constant dense<0.000000e+00> : vector<8x8xf32>
    %121 = tpu.matmul %118, %120, %cst_63 {dimension_numbers = #tpu.dot_dimension_numbers<[1], [0], [0], [1], [0, 0, 1, 1], [], []>} : vector<8x8xbf16>, vector<8x8xbf16>, vector<8x8xf32> -> vector<8x8xf32>
    %122 = arith.truncf %121 : vector<8x8xf32> to vector<8x8xbf16>
    %c0_64 = arith.constant 0 : index
    %c24 = arith.constant 24 : index
    %123 = vector.load %arg19[%c0_64, %c24] : memref<8x32xbf16, #tpu.memory_space<vmem>>, vector<8x8xbf16>
    tpu.vector_store %arg19[%c0_64, %c24], %122 {strides = array<i32>} : memref<8x32xbf16, #tpu.memory_space<vmem>>, vector<8x8xbf16>,
    %c0_65 = arith.constant 0 : index
    %c0_66 = arith.constant 0 : index
    %124 = vector.load %arg19[%c0_65, %c0_66] : memref<8x32xbf16, #tpu.memory_space<vmem>>, vector<8x32xbf16>
    %c0_67 = arith.constant 0 : index
    %c0_68 = arith.constant 0 : index
    %125 = vector.load %arg8[%c0_67, %c0_68] : memref<32x32xbf16, #tpu.memory_space<vmem>>, vector<32x32xbf16>
    %cst_69 = arith.constant dense<0.000000e+00> : vector<8x32xf32>
    %126 = tpu.matmul %124, %125, %cst_69 {dimension_numbers = #tpu.dot_dimension_numbers<[1], [0], [0], [1], [0, 0, 1, 1], [], []>} : vector<8x32xbf16>, vector<32x32xbf16>, vector<8x32xf32> -> vector<8x32xf32>
    %127 = arith.addf %14, %126 : vector<8x32xf32>
    %128 = vector.broadcast %4 : vector<1x32xf32> to vector<8x32xf32>
    %129 = arith.addf %127, %128 : vector<8x32xf32>
    %cst_70 = arith.constant dense<0.000000e+00> : vector<8xf32>
    %130 = vector.multi_reduction <add>, %129, %cst_70 [1] : vector<8x32xf32> to vector<8xf32>
    %131 = vector.shape_cast %130 : vector<8xf32> to vector<8x1xf32>
    %cst_71 = arith.constant 3.200000e+01 : f32
    %132 = vector.broadcast %cst_71 : f32 to vector<8x1xf32>
    %133 = arith.divf %131, %132 : vector<8x1xf32>
    %134 = vector.broadcast %133 : vector<8x1xf32> to vector<8x32xf32>
    %135 = arith.subf %129, %134 : vector<8x32xf32>
    %136 = arith.mulf %135, %135 : vector<8x32xf32>
    %cst_72 = arith.constant dense<0.000000e+00> : vector<8xf32>
    %137 = vector.multi_reduction <add>, %136, %cst_72 [1] : vector<8x32xf32> to vector<8xf32>
    %138 = vector.shape_cast %137 : vector<8xf32> to vector<8x1xf32>
    %cst_73 = arith.constant 3.200000e+01 : f32
    %139 = vector.broadcast %cst_73 : f32 to vector<8x1xf32>
    %140 = arith.divf %138, %139 : vector<8x1xf32>
    %141 = vector.broadcast %133 : vector<8x1xf32> to vector<8x32xf32>
    %142 = arith.subf %129, %141 : vector<8x32xf32>
    %cst_74 = arith.constant 9.99999974E-6 : f32
    %143 = vector.broadcast %cst_74 : f32 to vector<8x1xf32>
    %144 = arith.addf %140, %143 : vector<8x1xf32>
    %145 = math.rsqrt %144 : vector<8x1xf32>
    %146 = vector.broadcast %145 : vector<8x1xf32> to vector<8x32xf32>
    %147 = arith.mulf %142, %146 : vector<8x32xf32>
    %148 = vector.broadcast %2 : vector<1x32xf32> to vector<8x32xf32>
    %149 = arith.mulf %147, %148 : vector<8x32xf32>
    %150 = vector.broadcast %3 : vector<1x32xf32> to vector<8x32xf32>
    %151 = arith.addf %149, %150 : vector<8x32xf32>
    %152 = arith.truncf %151 : vector<8x32xf32> to vector<8x32xbf16>
    %c0_75 = arith.constant 0 : index
    %c0_76 = arith.constant 0 : index
    %153 = vector.load %arg12[%c0_75, %c0_76] : memref<32x64xbf16, #tpu.memory_space<vmem>>, vector<32x64xbf16>
    %cst_77 = arith.constant dense<0.000000e+00> : vector<8x64xf32>
    %154 = tpu.matmul %152, %153, %cst_77 {dimension_numbers = #tpu.dot_dimension_numbers<[1], [0], [0], [1], [0, 0, 1, 1], [], []>} : vector<8x32xbf16>, vector<32x64xbf16>, vector<8x64xf32> -> vector<8x64xf32>
    %155 = vector.broadcast %5 : vector<1x64xf32> to vector<8x64xf32>
    %156 = arith.addf %154, %155 : vector<8x64xf32>
    %cst_78 = arith.constant 5.000000e-01 : f32
    %157 = vector.broadcast %cst_78 : f32 to vector<8x64xf32>
    %158 = arith.mulf %157, %156 : vector<8x64xf32>
    %cst_79 = arith.constant 0.707106769 : f32
    %159 = vector.broadcast %cst_79 : f32 to vector<8x64xf32>
    %160 = arith.mulf %156, %159 : vector<8x64xf32>
    %161 = math.erf %160 : vector<8x64xf32>
    %cst_80 = arith.constant 1.000000e+00 : f32
    %162 = vector.broadcast %cst_80 : f32 to vector<8x64xf32>
    %163 = arith.addf %162, %161 : vector<8x64xf32>
    %164 = arith.mulf %158, %163 : vector<8x64xf32>
    %165 = arith.truncf %164 : vector<8x64xf32> to vector<8x64xbf16>
    %c0_81 = arith.constant 0 : index
    %c0_82 = arith.constant 0 : index
    %166 = vector.load %arg14[%c0_81, %c0_82] : memref<64x32xbf16, #tpu.memory_space<vmem>>, vector<64x32xbf16>
    %cst_83 = arith.constant dense<0.000000e+00> : vector<8x32xf32>
    %167 = tpu.matmul %165, %166, %cst_83 {dimension_numbers = #tpu.dot_dimension_numbers<[1], [0], [0], [1], [0, 0, 1, 1], [], []>} : vector<8x64xbf16>, vector<64x32xbf16>, vector<8x32xf32> -> vector<8x32xf32>
    %168 = vector.broadcast %6 : vector<1x32xf32> to vector<8x32xf32>
    %169 = arith.addf %167, %168 : vector<8x32xf32>
    %170 = arith.addf %129, %169 : vector<8x32xf32>
    %c0_84 = arith.constant 0 : index
    %c0_85 = arith.constant 0 : index
    %c0_86 = arith.constant 0 : index
    %171 = vector.load %arg16[%c0_84, %c0_85, %c0_86] : memref<1x8x32xf32, #tpu.memory_space<vmem>>, vector<1x8x32xf32>
    %172 = vector.shape_cast %171 : vector<1x8x32xf32> to vector<8x32xf32>
    %173 = vector.shape_cast %170 : vector<8x32xf32> to vector<1x8x32xf32>
    tpu.vector_store %arg16[%c0_84, %c0_85, %c0_86], %173 {strides = array<i32>} : memref<1x8x32xf32, #tpu.memory_space<vmem>>, vector<1x8x32xf32>,
    return
  }
  func.func @transform_0(%arg0: i32, %arg1: i32) -> (i32, i32, i32) {
    %c0_i32 = arith.constant 0 : i32
    %c0_i32_0 = arith.constant 0 : i32
    %c0_i32_1 = arith.constant 0 : i32
    return %arg0, %c0_i32, %c0_i32_0 : i32, i32, i32
  }
  func.func @transform_1(%arg0: i32, %arg1: i32) -> (i32, i32) {
    %c0_i32 = arith.constant 0 : i32
    %c0_i32_0 = arith.constant 0 : i32
    %c0_i32_1 = arith.constant 0 : i32
    return %c0_i32, %c0_i32_0 : i32, i32
  }
  func.func @transform_2(%arg0: i32, %arg1: i32) -> (i32, i32) {
    %c0_i32 = arith.constant 0 : i32
    %c0_i32_0 = arith.constant 0 : i32
    %c0_i32_1 = arith.constant 0 : i32
    return %c0_i32, %c0_i32_0 : i32, i32
  }
  func.func @transform_3(%arg0: i32, %arg1: i32) -> (i32, i32) {
    %c0_i32 = arith.constant 0 : i32
    %c0_i32_0 = arith.constant 0 : i32
    %c0_i32_1 = arith.constant 0 : i32
    return %c0_i32, %c0_i32_0 : i32, i32
  }
  func.func @transform_4(%arg0: i32, %arg1: i32) -> (i32, i32, i32) {
    %c0_i32 = arith.constant 0 : i32
    %c0_i32_0 = arith.constant 0 : i32
    %c0_i32_1 = arith.constant 0 : i32
    %c0_i32_2 = arith.constant 0 : i32
    return %c0_i32, %c0_i32_0, %c0_i32_1 : i32, i32, i32
  }
  func.func @transform_5(%arg0: i32, %arg1: i32) -> (i32, i32, i32) {
    %c0_i32 = arith.constant 0 : i32
    %c0_i32_0 = arith.constant 0 : i32
    %c0_i32_1 = arith.constant 0 : i32
    %c0_i32_2 = arith.constant 0 : i32
    return %c0_i32, %c0_i32_0, %c0_i32_1 : i32, i32, i32
  }
  func.func @transform_6(%arg0: i32, %arg1: i32) -> (i32, i32) {
    %c0_i32 = arith.constant 0 : i32
    %c0_i32_0 = arith.constant 0 : i32
    %c0_i32_1 = arith.constant 0 : i32
    return %c0_i32, %c0_i32_0 : i32, i32
  }
  func.func @transform_7(%arg0: i32, %arg1: i32) -> (i32, i32) {
    %c0_i32 = arith.constant 0 : i32
    %c0_i32_0 = arith.constant 0 : i32
    %c0_i32_1 = arith.constant 0 : i32
    return %c0_i32, %c0_i32_0 : i32, i32
  }
  func.func @transform_8(%arg0: i32, %arg1: i32) -> (i32, i32) {
    %c0_i32 = arith.constant 0 : i32
    %c0_i32_0 = arith.constant 0 : i32
    %c0_i32_1 = arith.constant 0 : i32
    return %c0_i32, %c0_i32_0 : i32, i32
  }
  func.func @transform_9(%arg0: i32, %arg1: i32) -> (i32, i32) {
    %c0_i32 = arith.constant 0 : i32
    %c0_i32_0 = arith.constant 0 : i32
    %c0_i32_1 = arith.constant 0 : i32
    return %c0_i32, %c0_i32_0 : i32, i32
  }
  func.func @transform_10(%arg0: i32, %arg1: i32) -> (i32, i32) {
    %c0_i32 = arith.constant 0 : i32
    %c0_i32_0 = arith.constant 0 : i32
    %c0_i32_1 = arith.constant 0 : i32
    return %c0_i32, %c0_i32_0 : i32, i32
  }
  func.func @transform_11(%arg0: i32, %arg1: i32) -> (i32, i32) {
    %c0_i32 = arith.constant 0 : i32
    %c0_i32_0 = arith.constant 0 : i32
    %c0_i32_1 = arith.constant 0 : i32
    return %c0_i32, %c0_i32_0 : i32, i32
  }
  func.func @transform_12(%arg0: i32, %arg1: i32) -> (i32, i32) {
    %c0_i32 = arith.constant 0 : i32
    %c0_i32_0 = arith.constant 0 : i32
    %c0_i32_1 = arith.constant 0 : i32
    return %c0_i32, %c0_i32_0 : i32, i32
  }
  func.func @transform_13(%arg0: i32, %arg1: i32) -> (i32, i32) {
    %c0_i32 = arith.constant 0 : i32
    %c0_i32_0 = arith.constant 0 : i32
    %c0_i32_1 = arith.constant 0 : i32
    return %c0_i32, %c0_i32_0 : i32, i32
  }
  func.func @transform_14(%arg0: i32, %arg1: i32) -> (i32, i32, i32) {
    %c0_i32 = arith.constant 0 : i32
    %c0_i32_0 = arith.constant 0 : i32
    return %arg0, %arg1, %c0_i32 : i32, i32, i32
  }
}

</mosaic_0001>

<llo_original>
// kernel: tpu_custom_call.1
$region0: #{tpu_custom_call.1}
  #allocation0 [shape = 'u32[]', space=smem, size = 0x4, offset = 0x4, fixed_abs, tag = 'smem constant byte address 0x4 - core index']
  #allocation1 [shape = 'u32[144,128]{1,0:T(1,128)}', space=vmem, size = 0x12000, scoped, tag = 'internal scratch']
  #allocation2 [shape = 'bf16[4,8,8]{2,1,0:T(8,128)(2,1)}', space=vmem, size = 0x2000, scoped, tag = 'scratch operand']
  #allocation3 [shape = 'bf16[4,8,8]{2,1,0:T(8,128)(2,1)}', space=vmem, size = 0x2000, scoped, tag = 'scratch operand']
  #allocation4 [shape = 'bf16[8,32]{1,0:T(8,128)(2,1)}', space=vmem, size = 0x800, scoped, tag = 'scratch operand']
  %s0 = inlined_call_operand.vmem [shape: f32[2,8,32], index: 0, kind: input, shape index: {}]
  %s1 = inlined_call_operand.vmem [shape: f32[1,32], index: 1, kind: input, shape index: {}]
  %s2 = inlined_call_operand.vmem [shape: f32[1,32], index: 2, kind: input, shape index: {}]
  %s3 = inlined_call_operand.vmem [shape: bf16[32,32], index: 3, kind: input, shape index: {}]
  %s4 = inlined_call_operand.vmem [shape: bf16[4,8,32], index: 4, kind: input, shape index: {}]
  %s5 = inlined_call_operand.vmem [shape: bf16[4,32,8], index: 5, kind: input, shape index: {}]
  %s6 = inlined_call_operand.vmem [shape: bf16[32,32], index: 6, kind: input, shape index: {}]
  %s7 = inlined_call_operand.vmem [shape: f32[1,32], index: 7, kind: input, shape index: {}]
  %s8 = inlined_call_operand.vmem [shape: f32[1,32], index: 8, kind: input, shape index: {}]
  %s9 = inlined_call_operand.vmem [shape: f32[1,32], index: 9, kind: input, shape index: {}]
  %s10 = inlined_call_operand.vmem [shape: bf16[32,64], index: 10, kind: input, shape index: {}]
  %s11 = inlined_call_operand.vmem [shape: f32[1,64], index: 11, kind: input, shape index: {}]
  %s12 = inlined_call_operand.vmem [shape: bf16[64,32], index: 12, kind: input, shape index: {}]
  %s13 = inlined_call_operand.vmem [shape: f32[1,32], index: 13, kind: input, shape index: {}]
  %s14 = inlined_call_operand.hbm [shape: f32[2,8,32], index: 14, kind: output, shape index: {}]
  %s15 = sld [smem:[#allocation0]]
  $region93: #{tpu_custom_call.1} parent=0
    _
  %s17 = ssub.s32 1, %s15
  %s18 = scalar_select 0, %s17, %s15
  $region1: #{tpu_custom_call.1} parent=0
    #allocation5 [shape = 'u8[8192]{0}', space=vmem, size = 0x2000, scoped, tag = 'output window, operand 0']
    #allocation6 [shape = 's32[2]{0}', space=sflag, size = 0x8, scoped, tag = 'scoped memory for tpu_custom_call.1']
    %19 = vsyncpa [#allocation6], 0
    %s20 = scalar_lea.sflag [#allocation6], 1
    %21 = vsyncpa %s20, 0
    loop: start=0, step=1, limit=4
    $region2: #{tpu_custom_call.1} parent=1 // loop_pre_header
      _
    $region3: #{tpu_custom_call.1} parent=1 // loop_header
      %s23 = sphi 0, %s27
      %p24 = scmp.ge.s32.totalorder %s23, 4
      %s30 = sphi 0, %s42
      %s31 = sphi 0, %s38
      %s32 = sphi 0, %s30
      %s33 = sphi 0, %s31
      %s34 = sphi 0, %s32
      %s35 = sphi 0, %s33
      %s45 = sphi 0, %s47
      %s48 = sphi 0, %s45
      %s49 = sphi 0, %s48
      %s65 = sphi 0, %s49
      %s69 = sphi 0, %s69
      %s71 = sphi 0, %s69
      %s72 = sphi 0, %s71
      %s86 = sphi 0, %s72
      %s90 = sphi 0, %s90
      %s92 = sphi 0, %s90
      %s93 = sphi 0, %s92
      %s107 = sphi 0, %s93
      %s111 = sphi 0, %s111
      %s113 = sphi 0, %s111
      %s114 = sphi 0, %s113
      %s128 = sphi 0, %s114
      %s132 = sphi 0, %s132
      %s134 = sphi 0, %s132
      %s135 = sphi 0, %s134
      %s149 = sphi 0, %s135
      %s153 = sphi 0, %s153
      %s155 = sphi 0, %s153
      %s156 = sphi 0, %s155
      %s170 = sphi 0, %s156
      %s174 = sphi 0, %s174
      %s176 = sphi 0, %s174
      %s177 = sphi 0, %s176
      %s191 = sphi 0, %s177
      %s195 = sphi 0, %s195
      %s197 = sphi 0, %s195
      %s198 = sphi 0, %s197
      %s212 = sphi 0, %s198
      %s216 = sphi 0, %s216
      %s218 = sphi 0, %s216
      %s219 = sphi 0, %s218
      %s233 = sphi 0, %s219
      %s237 = sphi 0, %s237
      %s239 = sphi 0, %s237
      %s240 = sphi 0, %s239
      %s254 = sphi 0, %s240
      %s258 = sphi 0, %s258
      %s260 = sphi 0, %s258
      %s261 = sphi 0, %s260
      %s275 = sphi 0, %s261
      %s279 = sphi 0, %s279
      %s281 = sphi 0, %s279
      %s282 = sphi 0, %s281
      %s296 = sphi 0, %s282
      %s300 = sphi 0, %s300
      %s302 = sphi 0, %s300
      %s303 = sphi 0, %s302
      %s317 = sphi 0, %s303
      %s321 = sphi 0, %s321
      %s323 = sphi 0, %s321
      %s324 = sphi 0, %s323
      %s338 = sphi 0, %s324
      %s346 = sphi 0, %s348
      %s349 = sphi 0, %s346
      %s350 = sphi 0, %s349
      %s366 = sphi 0, %s350
    $region4: #{tpu_custom_call.1} parent=1 // loop_header_branch
      %26 = sbr.rel (%p24) target = $region8
    $region5: #{tpu_custom_call.1} parent=1 // loop_body
      %s28 = ssub.s32 %s23, 1
      %s29 = ssub.s32 %s23, 2
      %s36 = sadd.s32 1, %s31
      %p37 = scmp.ge.s32.totalorder %s36, 1
      %s38 = scalar_select %p37, 0, %s36
      %s39 = sadd.s32 1, %s30
      %s40 = scalar_select %p37, %s39, %s30
      %p41 = scmp.ge.s32.totalorder %s40, 2
      %s42 = scalar_select %p41, 0, %s40
      %s43 = ssub.s32 %s30, %s42
      %p44 = scmp.eq.s32.totalorder %s43, 0
      %s46 = sadd.s32 %s45, 1
      %s47 = scalar_select %p44, %s45, %s46
      %p50 = pneg %p44
      %p51 = scmp.eq.s32.totalorder %s23, 1
      %p52 = por %p50, %p51
      %p53 = scmp.ne.s32.totalorder %s45, %s48
      %p54 = scmp.eq.s32.totalorder %s23, 0
      %p55 = por %p53, %p54
      %p56 = scmp.ne.s32.totalorder %s45, %s48
      %p57 = scmp.eq.s32.totalorder %s28, 1
      %p58 = por %p56, %p57
      %p59 = scmp.ne.s32.totalorder %s48, %s49
      %p60 = scmp.eq.s32.totalorder %s28, 0
      %p61 = por %p59, %p60
      %p62 = scmp.ne.s32.totalorder %s48, %s49
      %p63 = scmp.eq.s32.totalorder %s29, 1
      %p64 = por %p62, %p63
      %p66 = scmp.ne.s32.totalorder %s49, %s65
      %p67 = scmp.eq.s32.totalorder %s29, 0
      %p68 = por %p66, %p67
      %s70 = sadd.s32 %s69, 1
      %p73 = scmp.eq.s32.totalorder %s23, 1
      %p74 = scmp.ne.s32.totalorder %s69, %s71
      %p75 = scmp.eq.s32.totalorder %s23, 0
      %p76 = por %p74, %p75
      %p77 = scmp.ne.s32.totalorder %s69, %s71
      %p78 = scmp.eq.s32.totalorder %s28, 1
      %p79 = por %p77, %p78
      %p80 = scmp.ne.s32.totalorder %s71, %s72
      %p81 = scmp.eq.s32.totalorder %s28, 0
      %p82 = por %p80, %p81
      %p83 = scmp.ne.s32.totalorder %s71, %s72
      %p84 = scmp.eq.s32.totalorder %s29, 1
      %p85 = por %p83, %p84
      %p87 = scmp.ne.s32.totalorder %s72, %s86
      %p88 = scmp.eq.s32.totalorder %s29, 0
      %p89 = por %p87, %p88
      %s91 = sadd.s32 %s90, 1
      %p94 = scmp.eq.s32.totalorder %s23, 1
      %p95 = scmp.ne.s32.totalorder %s90, %s92
      %p96 = scmp.eq.s32.totalorder %s23, 0
      %p97 = por %p95, %p96
      %p98 = scmp.ne.s32.totalorder %s90, %s92
      %p99 = scmp.eq.s32.totalorder %s28, 1
      %p100 = por %p98, %p99
      %p101 = scmp.ne.s32.totalorder %s92, %s93
      %p102 = scmp.eq.s32.totalorder %s28, 0
      %p103 = por %p101, %p102
      %p104 = scmp.ne.s32.totalorder %s92, %s93
      %p105 = scmp.eq.s32.totalorder %s29, 1
      %p106 = por %p104, %p105
      %p108 = scmp.ne.s32.totalorder %s93, %s107
      %p109 = scmp.eq.s32.totalorder %s29, 0
      %p110 = por %p108, %p109
      %s112 = sadd.s32 %s111, 1
      %p115 = scmp.eq.s32.totalorder %s23, 1
      %p116 = scmp.ne.s32.totalorder %s111, %s113
      %p117 = scmp.eq.s32.totalorder %s23, 0
      %p118 = por %p116, %p117
      %p119 = scmp.ne.s32.totalorder %s111, %s113
      %p120 = scmp.eq.s32.totalorder %s28, 1
      %p121 = por %p119, %p120
      %p122 = scmp.ne.s32.totalorder %s113, %s114
      %p123 = scmp.eq.s32.totalorder %s28, 0
      %p124 = por %p122, %p123
      %p125 = scmp.ne.s32.totalorder %s113, %s114
      %p126 = scmp.eq.s32.totalorder %s29, 1
      %p127 = por %p125, %p126
      %p129 = scmp.ne.s32.totalorder %s114, %s128
      %p130 = scmp.eq.s32.totalorder %s29, 0
      %p131 = por %p129, %p130
      %s133 = sadd.s32 %s132, 1
      %p136 = scmp.eq.s32.totalorder %s23, 1
      %p137 = scmp.ne.s32.totalorder %s132, %s134
      %p138 = scmp.eq.s32.totalorder %s23, 0
      %p139 = por %p137, %p138
      %p140 = scmp.ne.s32.totalorder %s132, %s134
      %p141 = scmp.eq.s32.totalorder %s28, 1
      %p142 = por %p140, %p141
      %p143 = scmp.ne.s32.totalorder %s134, %s135
      %p144 = scmp.eq.s32.totalorder %s28, 0
      %p145 = por %p143, %p144
      %p146 = scmp.ne.s32.totalorder %s134, %s135
      %p147 = scmp.eq.s32.totalorder %s29, 1
      %p148 = por %p146, %p147
      %p150 = scmp.ne.s32.totalorder %s135, %s149
      %p151 = scmp.eq.s32.totalorder %s29, 0
      %p152 = por %p150, %p151
      %s154 = sadd.s32 %s153, 1
      %p157 = scmp.eq.s32.totalorder %s23, 1
      %p158 = scmp.ne.s32.totalorder %s153, %s155
      %p159 = scmp.eq.s32.totalorder %s23, 0
      %p160 = por %p158, %p159
      %p161 = scmp.ne.s32.totalorder %s153, %s155
      %p162 = scmp.eq.s32.totalorder %s28, 1
      %p163 = por %p161, %p162
      %p164 = scmp.ne.s32.totalorder %s155, %s156
      %p165 = scmp.eq.s32.totalorder %s28, 0
      %p166 = por %p164, %p165
      %p167 = scmp.ne.s32.totalorder %s155, %s156
      %p168 = scmp.eq.s32.totalorder %s29, 1
      %p169 = por %p167, %p168
      %p171 = scmp.ne.s32.totalorder %s156, %s170
      %p172 = scmp.eq.s32.totalorder %s29, 0
      %p173 = por %p171, %p172
      %s175 = sadd.s32 %s174, 1
      %p178 = scmp.eq.s32.totalorder %s23, 1
      %p179 = scmp.ne.s32.totalorder %s174, %s176
      %p180 = scmp.eq.s32.totalorder %s23, 0
      %p181 = por %p179, %p180
      %p182 = scmp.ne.s32.totalorder %s174, %s176
      %p183 = scmp.eq.s32.totalorder %s28, 1
      %p184 = por %p182, %p183
      %p185 = scmp.ne.s32.totalorder %s176, %s177
      %p186 = scmp.eq.s32.totalorder %s28, 0
      %p187 = por %p185, %p186
      %p188 = scmp.ne.s32.totalorder %s176, %s177
      %p189 = scmp.eq.s32.totalorder %s29, 1
      %p190 = por %p188, %p189
      %p192 = scmp.ne.s32.totalorder %s177, %s191
      %p193 = scmp.eq.s32.totalorder %s29, 0
      %p194 = por %p192, %p193
      %s196 = sadd.s32 %s195, 1
      %p199 = scmp.eq.s32.totalorder %s23, 1
      %p200 = scmp.ne.s32.totalorder %s195, %s197
      %p201 = scmp.eq.s32.totalorder %s23, 0
      %p202 = por %p200, %p201
      %p203 = scmp.ne.s32.totalorder %s195, %s197
      %p204 = scmp.eq.s32.totalorder %s28, 1
      %p205 = por %p203, %p204
      %p206 = scmp.ne.s32.totalorder %s197, %s198
      %p207 = scmp.eq.s32.totalorder %s28, 0
      %p208 = por %p206, %p207
      %p209 = scmp.ne.s32.totalorder %s197, %s198
      %p210 = scmp.eq.s32.totalorder %s29, 1
      %p211 = por %p209, %p210
      %p213 = scmp.ne.s32.totalorder %s198, %s212
      %p214 = scmp.eq.s32.totalorder %s29, 0
      %p215 = por %p213, %p214
      %s217 = sadd.s32 %s216, 1
      %p220 = scmp.eq.s32.totalorder %s23, 1
      %p221 = scmp.ne.s32.totalorder %s216, %s218
      %p222 = scmp.eq.s32.totalorder %s23, 0
      %p223 = por %p221, %p222
      %p224 = scmp.ne.s32.totalorder %s216, %s218
      %p225 = scmp.eq.s32.totalorder %s28, 1
      %p226 = por %p224, %p225
      %p227 = scmp.ne.s32.totalorder %s218, %s219
      %p228 = scmp.eq.s32.totalorder %s28, 0
      %p229 = por %p227, %p228
      %p230 = scmp.ne.s32.totalorder %s218, %s219
      %p231 = scmp.eq.s32.totalorder %s29, 1
      %p232 = por %p230, %p231
      %p234 = scmp.ne.s32.totalorder %s219, %s233
      %p235 = scmp.eq.s32.totalorder %s29, 0
      %p236 = por %p234, %p235
      %s238 = sadd.s32 %s237, 1
      %p241 = scmp.eq.s32.totalorder %s23, 1
      %p242 = scmp.ne.s32.totalorder %s237, %s239
      %p243 = scmp.eq.s32.totalorder %s23, 0
      %p244 = por %p242, %p243
      %p245 = scmp.ne.s32.totalorder %s237, %s239
      %p246 = scmp.eq.s32.totalorder %s28, 1
      %p247 = por %p245, %p246
      %p248 = scmp.ne.s32.totalorder %s239, %s240
      %p249 = scmp.eq.s32.totalorder %s28, 0
      %p250 = por %p248, %p249
      %p251 = scmp.ne.s32.totalorder %s239, %s240
      %p252 = scmp.eq.s32.totalorder %s29, 1
      %p253 = por %p251, %p252
      %p255 = scmp.ne.s32.totalorder %s240, %s254
      %p256 = scmp.eq.s32.totalorder %s29, 0
      %p257 = por %p255, %p256
      %s259 = sadd.s32 %s258, 1
      %p262 = scmp.eq.s32.totalorder %s23, 1
      %p263 = scmp.ne.s32.totalorder %s258, %s260
      %p264 = scmp.eq.s32.totalorder %s23, 0
      %p265 = por %p263, %p264
      %p266 = scmp.ne.s32.totalorder %s258, %s260
      %p267 = scmp.eq.s32.totalorder %s28, 1
      %p268 = por %p266, %p267
      %p269 = scmp.ne.s32.totalorder %s260, %s261
      %p270 = scmp.eq.s32.totalorder %s28, 0
      %p271 = por %p269, %p270
      %p272 = scmp.ne.s32.totalorder %s260, %s261
      %p273 = scmp.eq.s32.totalorder %s29, 1
      %p274 = por %p272, %p273
      %p276 = scmp.ne.s32.totalorder %s261, %s275
      %p277 = scmp.eq.s32.totalorder %s29, 0
      %p278 = por %p276, %p277
      %s280 = sadd.s32 %s279, 1
      %p283 = scmp.eq.s32.totalorder %s23, 1
      %p284 = scmp.ne.s32.totalorder %s279, %s281
      %p285 = scmp.eq.s32.totalorder %s23, 0
      %p286 = por %p284, %p285
      %p287 = scmp.ne.s32.totalorder %s279, %s281
      %p288 = scmp.eq.s32.totalorder %s28, 1
      %p289 = por %p287, %p288
      %p290 = scmp.ne.s32.totalorder %s281, %s282
      %p291 = scmp.eq.s32.totalorder %s28, 0
      %p292 = por %p290, %p291
      %p293 = scmp.ne.s32.totalorder %s281, %s282
      %p294 = scmp.eq.s32.totalorder %s29, 1
      %p295 = por %p293, %p294
      %p297 = scmp.ne.s32.totalorder %s282, %s296
      %p298 = scmp.eq.s32.totalorder %s29, 0
      %p299 = por %p297, %p298
      %s301 = sadd.s32 %s300, 1
      %p304 = scmp.eq.s32.totalorder %s23, 1
      %p305 = scmp.ne.s32.totalorder %s300, %s302
      %p306 = scmp.eq.s32.totalorder %s23, 0
      %p307 = por %p305, %p306
      %p308 = scmp.ne.s32.totalorder %s300, %s302
      %p309 = scmp.eq.s32.totalorder %s28, 1
      %p310 = por %p308, %p309
      %p311 = scmp.ne.s32.totalorder %s302, %s303
      %p312 = scmp.eq.s32.totalorder %s28, 0
      %p313 = por %p311, %p312
      %p314 = scmp.ne.s32.totalorder %s302, %s303
      %p315 = scmp.eq.s32.totalorder %s29, 1
      %p316 = por %p314, %p315
      %p318 = scmp.ne.s32.totalorder %s303, %s317
      %p319 = scmp.eq.s32.totalorder %s29, 0
      %p320 = por %p318, %p319
      %s322 = sadd.s32 %s321, 1
      %p325 = scmp.eq.s32.totalorder %s23, 1
      %p326 = scmp.ne.s32.totalorder %s321, %s323
      %p327 = scmp.eq.s32.totalorder %s23, 0
      %p328 = por %p326, %p327
      %p329 = scmp.ne.s32.totalorder %s321, %s323
      %p330 = scmp.eq.s32.totalorder %s28, 1
      %p331 = por %p329, %p330
      %p332 = scmp.ne.s32.totalorder %s323, %s324
      %p333 = scmp.eq.s32.totalorder %s28, 0
      %p334 = por %p332, %p333
      %p335 = scmp.ne.s32.totalorder %s323, %s324
      %p336 = scmp.eq.s32.totalorder %s29, 1
      %p337 = por %p335, %p336
      %p339 = scmp.ne.s32.totalorder %s324, %s338
      %p340 = scmp.eq.s32.totalorder %s29, 0
      %p341 = por %p339, %p340
      %s342 = ssub.s32 %s30, %s42
      %s343 = ssub.s32 %s31, %s38
      %s344 = sor.u32 %s342, %s343
      %p345 = scmp.eq.s32.totalorder %s344, 0
      %s347 = sadd.s32 %s346, 1
      %s348 = scalar_select %p345, %s346, %s347
      %p351 = pneg %p345
      %p352 = scmp.eq.s32.totalorder %s23, 1
      %p353 = por %p351, %p352
      %p354 = scmp.ne.s32.totalorder %s346, %s349
      %p355 = scmp.eq.s32.totalorder %s23, 0
      %p356 = por %p354, %p355
      %p357 = scmp.ne.s32.totalorder %s346, %s349
      %p358 = scmp.eq.s32.totalorder %s28, 1
      %p359 = por %p357, %p358
      %p360 = scmp.ne.s32.totalorder %s349, %s350
      %p361 = scmp.eq.s32.totalorder %s28, 0
      %p362 = por %p360, %p361
      %p363 = scmp.ne.s32.totalorder %s349, %s350
      %p364 = scmp.eq.s32.totalorder %s29, 1
      %p365 = por %p363, %p364
      %p367 = scmp.ne.s32.totalorder %s350, %s366
      %p368 = scmp.eq.s32.totalorder %s29, 0
      %p369 = por %p367, %p368
      %p370 = scmp.le.s32.totalorder 1, %s23
      %p371 = scmp.lt.s32.totalorder %s23, 3
      %p372 = pnand %p370, %p371
      %p373 = pneg %p372
      // Predicated region
      $region9: #{tpu_custom_call.1} parent=5 // pred_check
        _
      $region10: #{tpu_custom_call.1} parent=5 // pred_check_branch
        %375 = sbr.rel (%p372) target = $region12
      $region11: #{tpu_custom_call.1} parent=5 // pred_region
        %s376 = ssub.s32 %s23, 1
        // Predicated region
        $region13: #{tpu_custom_call.1} parent=11 // pred_check
          %p377 = pneg %p82
        $region14: #{tpu_custom_call.1} parent=11 // pred_check_branch
          %379 = sbr.rel (%p377) target = $region16
        $region15: #{tpu_custom_call.1} parent=11 // pred_region
          _
        $region16: #{tpu_custom_call.1} parent=11 // pred_fallthru
          _
        // Predicated region
        $region17: #{tpu_custom_call.1} parent=11 // pred_check
          %p380 = pneg %p103
        $region18: #{tpu_custom_call.1} parent=11 // pred_check_branch
          %382 = sbr.rel (%p380) target = $region20
        $region19: #{tpu_custom_call.1} parent=11 // pred_region
          _
        $region20: #{tpu_custom_call.1} parent=11 // pred_fallthru
          _
        // Predicated region
        $region21: #{tpu_custom_call.1} parent=11 // pred_check
          %p383 = pneg %p124
        $region22: #{tpu_custom_call.1} parent=11 // pred_check_branch
          %385 = sbr.rel (%p383) target = $region24
        $region23: #{tpu_custom_call.1} parent=11 // pred_region
          _
        $region24: #{tpu_custom_call.1} parent=11 // pred_fallthru
          _
        // Predicated region
        $region25: #{tpu_custom_call.1} parent=11 // pred_check
          %p386 = pneg %p145
        $region26: #{tpu_custom_call.1} parent=11 // pred_check_branch
          %388 = sbr.rel (%p386) target = $region28
        $region27: #{tpu_custom_call.1} parent=11 // pred_region
          _
        $region28: #{tpu_custom_call.1} parent=11 // pred_fallthru
          _
        // Predicated region
        $region29: #{tpu_custom_call.1} parent=11 // pred_check
          %p389 = pneg %p166
        $region30: #{tpu_custom_call.1} parent=11 // pred_check_branch
          %391 = sbr.rel (%p389) target = $region32
        $region31: #{tpu_custom_call.1} parent=11 // pred_region
          _
        $region32: #{tpu_custom_call.1} parent=11 // pred_fallthru
          _
        // Predicated region
        $region33: #{tpu_custom_call.1} parent=11 // pred_check
          %p392 = pneg %p187
        $region34: #{tpu_custom_call.1} parent=11 // pred_check_branch
          %394 = sbr.rel (%p392) target = $region36
        $region35: #{tpu_custom_call.1} parent=11 // pred_region
          _
        $region36: #{tpu_custom_call.1} parent=11 // pred_fallthru
          _
        // Predicated region
        $region37: #{tpu_custom_call.1} parent=11 // pred_check
          %p395 = pneg %p208
        $region38: #{tpu_custom_call.1} parent=11 // pred_check_branch
          %397 = sbr.rel (%p395) target = $region40
        $region39: #{tpu_custom_call.1} parent=11 // pred_region
          _
        $region40: #{tpu_custom_call.1} parent=11 // pred_fallthru
          _
        // Predicated region
        $region41: #{tpu_custom_call.1} parent=11 // pred_check
          %p398 = pneg %p229
        $region42: #{tpu_custom_call.1} parent=11 // pred_check_branch
          %400 = sbr.rel (%p398) target = $region44
        $region43: #{tpu_custom_call.1} parent=11 // pred_region
          _
        $region44: #{tpu_custom_call.1} parent=11 // pred_fallthru
          _
        // Predicated region
        $region45: #{tpu_custom_call.1} parent=11 // pred_check
          %p401 = pneg %p250
        $region46: #{tpu_custom_call.1} parent=11 // pred_check_branch
          %403 = sbr.rel (%p401) target = $region48
        $region47: #{tpu_custom_call.1} parent=11 // pred_region
          _
        $region48: #{tpu_custom_call.1} parent=11 // pred_fallthru
          _
        // Predicated region
        $region49: #{tpu_custom_call.1} parent=11 // pred_check
          %p404 = pneg %p271
        $region50: #{tpu_custom_call.1} parent=11 // pred_check_branch
          %406 = sbr.rel (%p404) target = $region52
        $region51: #{tpu_custom_call.1} parent=11 // pred_region
          _
        $region52: #{tpu_custom_call.1} parent=11 // pred_fallthru
          _
        // Predicated region
        $region53: #{tpu_custom_call.1} parent=11 // pred_check
          %p407 = pneg %p292
        $region54: #{tpu_custom_call.1} parent=11 // pred_check_branch
          %409 = sbr.rel (%p407) target = $region56
        $region55: #{tpu_custom_call.1} parent=11 // pred_region
          _
        $region56: #{tpu_custom_call.1} parent=11 // pred_fallthru
          _
        // Predicated region
        $region57: #{tpu_custom_call.1} parent=11 // pred_check
          %p410 = pneg %p313
        $region58: #{tpu_custom_call.1} parent=11 // pred_check_branch
          %412 = sbr.rel (%p410) target = $region60
        $region59: #{tpu_custom_call.1} parent=11 // pred_region
          _
        $region60: #{tpu_custom_call.1} parent=11 // pred_fallthru
          _
        // Predicated region
        $region61: #{tpu_custom_call.1} parent=11 // pred_check
          %p413 = pneg %p334
        $region62: #{tpu_custom_call.1} parent=11 // pred_check_branch
          %415 = sbr.rel (%p413) target = $region64
        $region63: #{tpu_custom_call.1} parent=11 // pred_region
          _
        $region64: #{tpu_custom_call.1} parent=11 // pred_fallthru
          _
      $region12: #{tpu_custom_call.1} parent=5 // pred_fallthru
        _
      %p416 = scmp.lt.s32.totalorder %s23, 2
      // Predicated region
      $region65: #{tpu_custom_call.1} parent=5 // pred_check
        %p417 = pneg %p416
      $region66: #{tpu_custom_call.1} parent=5 // pred_check_branch
        %419 = sbr.rel (%p417) target = $region68
      $region67: #{tpu_custom_call.1} parent=5 // pred_region
        // Predicated region
        $region69: #{tpu_custom_call.1} parent=67 // pred_check
          %p420 = pneg %p55
        $region70: #{tpu_custom_call.1} parent=67 // pred_check_branch
          %422 = sbr.rel (%p420) target = $region72
        $region71: #{tpu_custom_call.1} parent=67 // pred_region
          %p423 = scmp.lt.s32.totalorder %s30, 1
          %s424 = scalar_select %p423, %s30, 1
          %s425 = smul.addr %s424, 8
          %s426 = scalar_lea.vmem %s0, %s425
        $region72: #{tpu_custom_call.1} parent=67 // pred_fallthru
          _
      $region68: #{tpu_custom_call.1} parent=5 // pred_fallthru
        _
      %p427 = scmp.le.s32.totalorder 1, %s23
      %p428 = scmp.lt.s32.totalorder %s23, 3
      %p429 = pnand %p427, %p428
      %p430 = pneg %p429
      // Predicated region
      $region73: #{tpu_custom_call.1} parent=5 // pred_check
        _
      $region74: #{tpu_custom_call.1} parent=5 // pred_check_branch
        %432 = sbr.rel (%p429) target = $region76
      $region75: #{tpu_custom_call.1} parent=5 // pred_region
        %s433 = ssub.s32 %s23, 1
        %p434 = scmp.lt.s32.totalorder %s32, 1
        %s435 = scalar_select %p434, %s32, 1
        %s436 = smul.addr %s435, 8
        %s437 = scalar_lea.vmem %s0, %s436
        %p438 = pneg %p61
        %p439 = pneg %p58
        %p440 = pneg %p82
        %p441 = pneg %p79
        %p442 = pneg %p103
        %p443 = pneg %p100
        %p444 = pneg %p124
        %p445 = pneg %p121
        %p446 = pneg %p145
        %p447 = pneg %p142
        %p448 = pneg %p166
        %p449 = pneg %p163
        %p450 = pneg %p187
        %p451 = pneg %p184
        %p452 = pneg %p208
        %p453 = pneg %p205
        %p454 = pneg %p229
        %p455 = pneg %p226
        %p456 = pneg %p250
        %p457 = pneg %p247
        %p458 = pneg %p271
        %p459 = pneg %p268
        %p460 = pneg %p292
        %p461 = pneg %p289
        %p462 = pneg %p313
        %p463 = pneg %p310
        %p464 = pneg %p334
        %p465 = pneg %p331
        %p466 = pneg %p362
        %p467 = pneg %p359
        %s468 = sand.u32 %s349, 1
        %s469 = scalar_lea.sflag [#allocation6], %s468
        %s470 = sand.u32 %s349, 1
        %s471 = smul.addr %s470, 8
        %s472 = scalar_lea.vmem [#allocation5], %s471
        %p473 = scmp.lt.s32.totalorder %s32, 1
        %s474 = scalar_select %p473, %s32, 1
        %s475 = smul.addr %s474, 8
        %s476 = scalar_lea.vmem %s0, %s475
        %v478 = vld [vmem:[%s1] sm:$0x1]
        %v479 = vld [vmem:[%s2] sm:$0x1]
        %v480 = vld [vmem:[%s8] sm:$0x1]
        %v481 = vld [vmem:[%s9] sm:$0x1]
        %v482 = vld [vmem:[%s7] sm:$0x1]
        %v483 = vld [vmem:[%s11] sm:$0x1]
        %v484 = vld [vmem:[%s13] sm:$0x1]
        %p485 = scmp.eq.s32.totalorder %s33, 0
        // Predicated region
        $region77: #{tpu_custom_call.1} parent=75 // pred_check
          %p486 = pneg %p485
        $region78: #{tpu_custom_call.1} parent=75 // pred_check_branch
          %488 = sbr.rel (%p486) target = $region80
        $region79: #{tpu_custom_call.1} parent=75 // pred_region
          %v489 = vld [vmem:[%s476] sm:$0xff]
          %vm490 = vcmask 261120
          %v491 = vsel %vm490, %v489, 0.0
          %492 = vadd.xlane.f32.xlu0 %v491
          %v493 = vpop.xlane.xlu0 %492
          %v494 = vrcp.pop 32.0
          %v495 = vmul.f32 %v493, %v494
          %v496 = vsub.f32 %v489, %v495
          %v497 = vmul.f32 %v496, %v496
          %v498 = vsel %vm490, %v497, 0.0
          %499 = vadd.xlane.f32.xlu0 %v498
          %v500 = vpop.xlane.xlu0 %499
          %v501 = vmul.f32 %v500, %v494
          %v502 = vadd.f32 %v501, 1e-05
          %v503 = vrsqrt.pop %v502
          %v504 = vmul.f32 %v496, %v503
          %v506 = vlaneseq
          %v507 = vshrl.u32 %v506, 7
          %v508 = vsub.s32 0, %v507
          %v509 = vrot.slane %v478, %v508
          %v511 = vmul.f32 %v504, %v509
          %v513 = vlaneseq
          %v514 = vshrl.u32 %v513, 7
          %v515 = vsub.s32 0, %v514
          %v516 = vrot.slane %v479, %v515
          %v518 = vadd.f32 %v511, %v516
          %v519 = vpack.c.bf16 %v518, %v518
          %v520 = vld [vmem:[%s4] sm:$0xf]
          %v522 = vsel %vm490, %v520, 0
          %v525 = vsel %vm490, %v519, 0
          %527 = vmatprep.subr.bf16.mxu0 0
          %528 = vmatpush1.bf16.xpose.msra.mxu0 %v525
          %529 = vmatprep.subr.bf16.mxu0 0
          %530 = vmatpush1.bf16.xpose.msra.mxu0 0
          %531 = vmatprep.subr.bf16.mxu0 0
          %532 = vmatpush1.bf16.xpose.msra.mxu0 0
          %533 = vmatprep.subr.bf16.mxu0 0
          %534 = vmatpush1.bf16.xpose.msra.mxu0 0
          %535 = vmatprep.subr.bf16.mxu0 0
          %536 = vmatpush1.bf16.xpose.msra.mxu0 0
          %537 = vmatprep.subr.bf16.mxu0 0
          %538 = vmatpush1.bf16.xpose.msra.mxu0 0
          %539 = vmatprep.subr.bf16.mxu0 0
          %540 = vmatpush1.bf16.xpose.msra.mxu0 0
          %541 = vmatprep.subr.bf16.mxu0 0
          %542 = vmatpush1.bf16.xpose.msra.mxu0 0
          %543 = vmatprep.subr.bf16.mxu0 0
          %544 = vmatpush1.bf16.xpose.msra.mxu0 0
          %545 = vmatprep.subr.bf16.mxu0 0
          %546 = vmatpush1.bf16.xpose.msra.mxu0 0
          %547 = vmatprep.subr.bf16.mxu0 0
          %548 = vmatpush1.bf16.xpose.msra.mxu0 0
          %549 = vmatprep.subr.bf16.mxu0 0
          %550 = vmatpush1.bf16.xpose.msra.mxu0 0
          %551 = vmatprep.subr.bf16.mxu0 0
          %552 = vmatpush1.bf16.xpose.msra.mxu0 0
          %553 = vmatprep.subr.bf16.mxu0 0
          %554 = vmatpush1.bf16.xpose.msra.mxu0 0
          %555 = vmatprep.subr.bf16.mxu0 0
          %556 = vmatpush1.bf16.xpose.msra.mxu0 0
          %557 = vmatprep.subr.bf16.mxu0 0
          %558 = vmatpush1.bf16.xpose.msra.mxu0 0
          %559 = vmatprep.mubr.bf16.mxu0 0
          %560 = vmatmul.mubr.bf16.gmra.mrb[0].mxu0 %v522
          %v561 = vpop.f32.mrb[0].mxu0
          %v562 = vadd.f32 0.0, %v561
          %v563 = vpop.f32.mrb[0].mxu0
          %v564 = vpop.f32.mrb[0].mxu0
          %v565 = vpop.f32.mrb[0].mxu0
          %566 = vdwg.mxu0
          %v567 = vpack.c.bf16 %v562, %v562
          %vm568 = vcmask 60416
          %569 = vst.msk [vmem:[#allocation2] sm:$0xf] %vm568, %v567
          %v570 = vld [vmem:[%s5] sm:$0xf]
          %v571 = vld [vmem:[%s5 + $0x4] sm:$0xf]
          %v572 = vld [vmem:[%s5 + $0x8] sm:$0xf]
          %v573 = vld [vmem:[%s5 + $0xc] sm:$0xf]
          %v578 = vunpack.c.l.b16 %v570
          %v579 = vunpack.c.l.b16 %v571
          %v580 = vunpack.c.l.b16 %v572
          %v581 = vunpack.c.l.b16 %v573
          %v582 = vpack.c.b16 %v579, %v578
          %v583 = vpack.c.b16 %v581, %v580
          %586 = vmatprep.subr.bf16.mxu0 0
          %587 = vmatpush1.bf16.msra.mxu0 %v582
          %588 = vmatprep.subr.bf16.mxu0 0
          %589 = vmatpush1.bf16.msra.mxu0 %v583
          %590 = vmatprep.subr.bf16.mxu0 0
          %591 = vmatpush1.bf16.msra.mxu0 0
          %592 = vmatprep.subr.bf16.mxu0 0
          %593 = vmatpush1.bf16.msra.mxu0 0
          %594 = vmatprep.subr.bf16.mxu0 0
          %595 = vmatpush1.bf16.msra.mxu0 0
          %596 = vmatprep.subr.bf16.mxu0 0
          %597 = vmatpush1.bf16.msra.mxu0 0
          %598 = vmatprep.subr.bf16.mxu0 0
          %599 = vmatpush1.bf16.msra.mxu0 0
          %600 = vmatprep.subr.bf16.mxu0 0
          %601 = vmatpush1.bf16.msra.mxu0 0
          %602 = vmatprep.subr.bf16.mxu0 0
          %603 = vmatpush1.bf16.msra.mxu0 0
          %604 = vmatprep.subr.bf16.mxu0 0
          %605 = vmatpush1.bf16.msra.mxu0 0
          %606 = vmatprep.subr.bf16.mxu0 0
          %607 = vmatpush1.bf16.msra.mxu0 0
          %608 = vmatprep.subr.bf16.mxu0 0
          %609 = vmatpush1.bf16.msra.mxu0 0
          %610 = vmatprep.subr.bf16.mxu0 0
          %611 = vmatpush1.bf16.msra.mxu0 0
          %612 = vmatprep.subr.bf16.mxu0 0
          %613 = vmatpush1.bf16.msra.mxu0 0
          %614 = vmatprep.subr.bf16.mxu0 0
          %615 = vmatpush1.bf16.msra.mxu0 0
          %616 = vmatprep.subr.bf16.mxu0 0
          %617 = vmatpush1.bf16.msra.mxu0 0
          %618 = vmatprep.mubr.bf16.mxu0 0
          %619 = vmatmul.mubr.bf16.gmra.mrb[0].mxu0 %v525
          %v620 = vpop.f32.mrb[0].mxu0
          %v621 = vadd.f32 0.0, %v620
          %v622 = vpop.f32.mrb[0].mxu0
          %v623 = vpop.f32.mrb[0].mxu0
          %v624 = vpop.f32.mrb[0].mxu0
          %625 = vdwg.mxu0
          %v626 = vpack.c.bf16 %v621, %v621
          %627 = vst.msk [vmem:[#allocation3] sm:$0xf] %vm568, %v626
          %s628 = scalar_lea.vmem %s4, 4
          %v629 = vld [vmem:[%s628] sm:$0xf]
          %v631 = vsel %vm490, %v629, 0
          %633 = vmatprep.subr.bf16.mxu0 0
          %634 = vmatpush1.bf16.xpose.msra.mxu0 %v525
          %635 = vmatprep.subr.bf16.mxu0 0
          %636 = vmatpush1.bf16.xpose.msra.mxu0 0
          %637 = vmatprep.subr.bf16.mxu0 0
          %638 = vmatpush1.bf16.xpose.msra.mxu0 0
          %639 = vmatprep.subr.bf16.mxu0 0
          %640 = vmatpush1.bf16.xpose.msra.mxu0 0
          %641 = vmatprep.subr.bf16.mxu0 0
          %642 = vmatpush1.bf16.xpose.msra.mxu0 0
          %643 = vmatprep.subr.bf16.mxu0 0
          %644 = vmatpush1.bf16.xpose.msra.mxu0 0
          %645 = vmatprep.subr.bf16.mxu0 0
          %646 = vmatpush1.bf16.xpose.msra.mxu0 0
          %647 = vmatprep.subr.bf16.mxu0 0
          %648 = vmatpush1.bf16.xpose.msra.mxu0 0
          %649 = vmatprep.subr.bf16.mxu0 0
          %650 = vmatpush1.bf16.xpose.msra.mxu0 0
          %651 = vmatprep.subr.bf16.mxu0 0
          %652 = vmatpush1.bf16.xpose.msra.mxu0 0
          %653 = vmatprep.subr.bf16.mxu0 0
          %654 = vmatpush1.bf16.xpose.msra.mxu0 0
          %655 = vmatprep.subr.bf16.mxu0 0
          %656 = vmatpush1.bf16.xpose.msra.mxu0 0
          %657 = vmatprep.subr.bf16.mxu0 0
          %658 = vmatpush1.bf16.xpose.msra.mxu0 0
          %659 = vmatprep.subr.bf16.mxu0 0
          %660 = vmatpush1.bf16.xpose.msra.mxu0 0
          %661 = vmatprep.subr.bf16.mxu0 0
          %662 = vmatpush1.bf16.xpose.msra.mxu0 0
          %663 = vmatprep.subr.bf16.mxu0 0
          %664 = vmatpush1.bf16.xpose.msra.mxu0 0
          %665 = vmatprep.mubr.bf16.mxu0 0
          %666 = vmatmul.mubr.bf16.gmra.mrb[0].mxu0 %v631
          %v667 = vpop.f32.mrb[0].mxu0
          %v668 = vadd.f32 0.0, %v667
          %v669 = vpop.f32.mrb[0].mxu0
          %v670 = vpop.f32.mrb[0].mxu0
          %v671 = vpop.f32.mrb[0].mxu0
          %672 = vdwg.mxu0
          %v673 = vpack.c.bf16 %v668, %v668
          %s674 = scalar_lea.vmem [#allocation2], 4
          %675 = vst.msk [vmem:[%s674] sm:$0xf] %vm568, %v673
          %s676 = scalar_lea.vmem %s5, 16
          %v677 = vld [vmem:[%s676] sm:$0xf]
          %v678 = vld [vmem:[%s676 + $0x4] sm:$0xf]
          %v679 = vld [vmem:[%s676 + $0x8] sm:$0xf]
          %v680 = vld [vmem:[%s676 + $0xc] sm:$0xf]
          %v685 = vunpack.c.l.b16 %v677
          %v686 = vunpack.c.l.b16 %v678
          %v687 = vunpack.c.l.b16 %v679
          %v688 = vunpack.c.l.b16 %v680
          %v689 = vpack.c.b16 %v686, %v685
          %v690 = vpack.c.b16 %v688, %v687
          %693 = vmatprep.subr.bf16.mxu0 0
          %694 = vmatpush1.bf16.msra.mxu0 %v689
          %695 = vmatprep.subr.bf16.mxu0 0
          %696 = vmatpush1.bf16.msra.mxu0 %v690
          %697 = vmatprep.subr.bf16.mxu0 0
          %698 = vmatpush1.bf16.msra.mxu0 0
          %699 = vmatprep.subr.bf16.mxu0 0
          %700 = vmatpush1.bf16.msra.mxu0 0
          %701 = vmatprep.subr.bf16.mxu0 0
          %702 = vmatpush1.bf16.msra.mxu0 0
          %703 = vmatprep.subr.bf16.mxu0 0
          %704 = vmatpush1.bf16.msra.mxu0 0
          %705 = vmatprep.subr.bf16.mxu0 0
          %706 = vmatpush1.bf16.msra.mxu0 0
          %707 = vmatprep.subr.bf16.mxu0 0
          %708 = vmatpush1.bf16.msra.mxu0 0
          %709 = vmatprep.subr.bf16.mxu0 0
          %710 = vmatpush1.bf16.msra.mxu0 0
          %711 = vmatprep.subr.bf16.mxu0 0
          %712 = vmatpush1.bf16.msra.mxu0 0
          %713 = vmatprep.subr.bf16.mxu0 0
          %714 = vmatpush1.bf16.msra.mxu0 0
          %715 = vmatprep.subr.bf16.mxu0 0
          %716 = vmatpush1.bf16.msra.mxu0 0
          %717 = vmatprep.subr.bf16.mxu0 0
          %718 = vmatpush1.bf16.msra.mxu0 0
          %719 = vmatprep.subr.bf16.mxu0 0
          %720 = vmatpush1.bf16.msra.mxu0 0
          %721 = vmatprep.subr.bf16.mxu0 0
          %722 = vmatpush1.bf16.msra.mxu0 0
          %723 = vmatprep.subr.bf16.mxu0 0
          %724 = vmatpush1.bf16.msra.mxu0 0
          %725 = vmatprep.mubr.bf16.mxu0 0
          %726 = vmatmul.mubr.bf16.gmra.mrb[0].mxu0 %v525
          %v727 = vpop.f32.mrb[0].mxu0
          %v728 = vadd.f32 0.0, %v727
          %v729 = vpop.f32.mrb[0].mxu0
          %v730 = vpop.f32.mrb[0].mxu0
          %v731 = vpop.f32.mrb[0].mxu0
          %732 = vdwg.mxu0
          %v733 = vpack.c.bf16 %v728, %v728
          %s734 = scalar_lea.vmem [#allocation3], 4
          %735 = vst.msk [vmem:[%s734] sm:$0xf] %vm568, %v733
          %s736 = scalar_lea.vmem %s4, 8
          %v737 = vld [vmem:[%s736] sm:$0xf]
          %v739 = vsel %vm490, %v737, 0
          %741 = vmatprep.subr.bf16.mxu0 0
          %742 = vmatpush1.bf16.xpose.msra.mxu0 %v525
          %743 = vmatprep.subr.bf16.mxu0 0
          %744 = vmatpush1.bf16.xpose.msra.mxu0 0
          %745 = vmatprep.subr.bf16.mxu0 0
          %746 = vmatpush1.bf16.xpose.msra.mxu0 0
          %747 = vmatprep.subr.bf16.mxu0 0
          %748 = vmatpush1.bf16.xpose.msra.mxu0 0
          %749 = vmatprep.subr.bf16.mxu0 0
          %750 = vmatpush1.bf16.xpose.msra.mxu0 0
          %751 = vmatprep.subr.bf16.mxu0 0
          %752 = vmatpush1.bf16.xpose.msra.mxu0 0
          %753 = vmatprep.subr.bf16.mxu0 0
          %754 = vmatpush1.bf16.xpose.msra.mxu0 0
          %755 = vmatprep.subr.bf16.mxu0 0
          %756 = vmatpush1.bf16.xpose.msra.mxu0 0
          %757 = vmatprep.subr.bf16.mxu0 0
          %758 = vmatpush1.bf16.xpose.msra.mxu0 0
          %759 = vmatprep.subr.bf16.mxu0 0
          %760 = vmatpush1.bf16.xpose.msra.mxu0 0
          %761 = vmatprep.subr.bf16.mxu0 0
          %762 = vmatpush1.bf16.xpose.msra.mxu0 0
          %763 = vmatprep.subr.bf16.mxu0 0
          %764 = vmatpush1.bf16.xpose.msra.mxu0 0
          %765 = vmatprep.subr.bf16.mxu0 0
          %766 = vmatpush1.bf16.xpose.msra.mxu0 0
          %767 = vmatprep.subr.bf16.mxu0 0
          %768 = vmatpush1.bf16.xpose.msra.mxu0 0
          %769 = vmatprep.subr.bf16.mxu0 0
          %770 = vmatpush1.bf16.xpose.msra.mxu0 0
          %771 = vmatprep.subr.bf16.mxu0 0
          %772 = vmatpush1.bf16.xpose.msra.mxu0 0
          %773 = vmatprep.mubr.bf16.mxu0 0
          %774 = vmatmul.mubr.bf16.gmra.mrb[0].mxu0 %v739
          %v775 = vpop.f32.mrb[0].mxu0
          %v776 = vadd.f32 0.0, %v775
          %v777 = vpop.f32.mrb[0].mxu0
          %v778 = vpop.f32.mrb[0].mxu0
          %v779 = vpop.f32.mrb[0].mxu0
          %780 = vdwg.mxu0
          %v781 = vpack.c.bf16 %v776, %v776
          %s782 = scalar_lea.vmem [#allocation2], 8
          %783 = vst.msk [vmem:[%s782] sm:$0xf] %vm568, %v781
          %s784 = scalar_lea.vmem %s5, 32
          %v785 = vld [vmem:[%s784] sm:$0xf]
          %v786 = vld [vmem:[%s784 + $0x4] sm:$0xf]
          %v787 = vld [vmem:[%s784 + $0x8] sm:$0xf]
          %v788 = vld [vmem:[%s784 + $0xc] sm:$0xf]
          %v793 = vunpack.c.l.b16 %v785
          %v794 = vunpack.c.l.b16 %v786
          %v795 = vunpack.c.l.b16 %v787
          %v796 = vunpack.c.l.b16 %v788
          %v797 = vpack.c.b16 %v794, %v793
          %v798 = vpack.c.b16 %v796, %v795
          %801 = vmatprep.subr.bf16.mxu0 0
          %802 = vmatpush1.bf16.msra.mxu0 %v797
          %803 = vmatprep.subr.bf16.mxu0 0
          %804 = vmatpush1.bf16.msra.mxu0 %v798
          %805 = vmatprep.subr.bf16.mxu0 0
          %806 = vmatpush1.bf16.msra.mxu0 0
          %807 = vmatprep.subr.bf16.mxu0 0
          %808 = vmatpush1.bf16.msra.mxu0 0
          %809 = vmatprep.subr.bf16.mxu0 0
          %810 = vmatpush1.bf16.msra.mxu0 0
          %811 = vmatprep.subr.bf16.mxu0 0
          %812 = vmatpush1.bf16.msra.mxu0 0
          %813 = vmatprep.subr.bf16.mxu0 0
          %814 = vmatpush1.bf16.msra.mxu0 0
          %815 = vmatprep.subr.bf16.mxu0 0
          %816 = vmatpush1.bf16.msra.mxu0 0
          %817 = vmatprep.subr.bf16.mxu0 0
          %818 = vmatpush1.bf16.msra.mxu0 0
          %819 = vmatprep.subr.bf16.mxu0 0
          %820 = vmatpush1.bf16.msra.mxu0 0
          %821 = vmatprep.subr.bf16.mxu0 0
          %822 = vmatpush1.bf16.msra.mxu0 0
          %823 = vmatprep.subr.bf16.mxu0 0
          %824 = vmatpush1.bf16.msra.mxu0 0
          %825 = vmatprep.subr.bf16.mxu0 0
          %826 = vmatpush1.bf16.msra.mxu0 0
          %827 = vmatprep.subr.bf16.mxu0 0
          %828 = vmatpush1.bf16.msra.mxu0 0
          %829 = vmatprep.subr.bf16.mxu0 0
          %830 = vmatpush1.bf16.msra.mxu0 0
          %831 = vmatprep.subr.bf16.mxu0 0
          %832 = vmatpush1.bf16.msra.mxu0 0
          %833 = vmatprep.mubr.bf16.mxu0 0
          %834 = vmatmul.mubr.bf16.gmra.mrb[0].mxu0 %v525
          %v835 = vpop.f32.mrb[0].mxu0
          %v836 = vadd.f32 0.0, %v835
          %v837 = vpop.f32.mrb[0].mxu0
          %v838 = vpop.f32.mrb[0].mxu0
          %v839 = vpop.f32.mrb[0].mxu0
          %840 = vdwg.mxu0
          %v841 = vpack.c.bf16 %v836, %v836
          %s842 = scalar_lea.vmem [#allocation3], 8
          %843 = vst.msk [vmem:[%s842] sm:$0xf] %vm568, %v841
          %s844 = scalar_lea.vmem %s4, 12
          %v845 = vld [vmem:[%s844] sm:$0xf]
          %v847 = vsel %vm490, %v845, 0
          %849 = vmatprep.subr.bf16.mxu0 0
          %850 = vmatpush1.bf16.xpose.msra.mxu0 %v525
          %851 = vmatprep.subr.bf16.mxu0 0
          %852 = vmatpush1.bf16.xpose.msra.mxu0 0
          %853 = vmatprep.subr.bf16.mxu0 0
          %854 = vmatpush1.bf16.xpose.msra.mxu0 0
          %855 = vmatprep.subr.bf16.mxu0 0
          %856 = vmatpush1.bf16.xpose.msra.mxu0 0
          %857 = vmatprep.subr.bf16.mxu0 0
          %858 = vmatpush1.bf16.xpose.msra.mxu0 0
          %859 = vmatprep.subr.bf16.mxu0 0
          %860 = vmatpush1.bf16.xpose.msra.mxu0 0
          %861 = vmatprep.subr.bf16.mxu0 0
          %862 = vmatpush1.bf16.xpose.msra.mxu0 0
          %863 = vmatprep.subr.bf16.mxu0 0
          %864 = vmatpush1.bf16.xpose.msra.mxu0 0
          %865 = vmatprep.subr.bf16.mxu0 0
          %866 = vmatpush1.bf16.xpose.msra.mxu0 0
          %867 = vmatprep.subr.bf16.mxu0 0
          %868 = vmatpush1.bf16.xpose.msra.mxu0 0
          %869 = vmatprep.subr.bf16.mxu0 0
          %870 = vmatpush1.bf16.xpose.msra.mxu0 0
          %871 = vmatprep.subr.bf16.mxu0 0
          %872 = vmatpush1.bf16.xpose.msra.mxu0 0
          %873 = vmatprep.subr.bf16.mxu0 0
          %874 = vmatpush1.bf16.xpose.msra.mxu0 0
          %875 = vmatprep.subr.bf16.mxu0 0
          %876 = vmatpush1.bf16.xpose.msra.mxu0 0
          %877 = vmatprep.subr.bf16.mxu0 0
          %878 = vmatpush1.bf16.xpose.msra.mxu0 0
          %879 = vmatprep.subr.bf16.mxu0 0
          %880 = vmatpush1.bf16.xpose.msra.mxu0 0
          %881 = vmatprep.mubr.bf16.mxu0 0
          %882 = vmatmul.mubr.bf16.gmra.mrb[0].mxu0 %v847
          %v883 = vpop.f32.mrb[0].mxu0
          %v884 = vadd.f32 0.0, %v883
          %v885 = vpop.f32.mrb[0].mxu0
          %v886 = vpop.f32.mrb[0].mxu0
          %v887 = vpop.f32.mrb[0].mxu0
          %888 = vdwg.mxu0
          %v889 = vpack.c.bf16 %v884, %v884
          %s890 = scalar_lea.vmem [#allocation2], 12
          %891 = vst.msk [vmem:[%s890] sm:$0xf] %vm568, %v889
          %s892 = scalar_lea.vmem %s5, 48
          %v893 = vld [vmem:[%s892] sm:$0xf]
          %v894 = vld [vmem:[%s892 + $0x4] sm:$0xf]
          %v895 = vld [vmem:[%s892 + $0x8] sm:$0xf]
          %v896 = vld [vmem:[%s892 + $0xc] sm:$0xf]
          %v901 = vunpack.c.l.b16 %v893
          %v902 = vunpack.c.l.b16 %v894
          %v903 = vunpack.c.l.b16 %v895
          %v904 = vunpack.c.l.b16 %v896
          %v905 = vpack.c.b16 %v902, %v901
          %v906 = vpack.c.b16 %v904, %v903
          %909 = vmatprep.subr.bf16.mxu0 0
          %910 = vmatpush1.bf16.msra.mxu0 %v905
          %911 = vmatprep.subr.bf16.mxu0 0
          %912 = vmatpush1.bf16.msra.mxu0 %v906
          %913 = vmatprep.subr.bf16.mxu0 0
          %914 = vmatpush1.bf16.msra.mxu0 0
          %915 = vmatprep.subr.bf16.mxu0 0
          %916 = vmatpush1.bf16.msra.mxu0 0
          %917 = vmatprep.subr.bf16.mxu0 0
          %918 = vmatpush1.bf16.msra.mxu0 0
          %919 = vmatprep.subr.bf16.mxu0 0
          %920 = vmatpush1.bf16.msra.mxu0 0
          %921 = vmatprep.subr.bf16.mxu0 0
          %922 = vmatpush1.bf16.msra.mxu0 0
          %923 = vmatprep.subr.bf16.mxu0 0
          %924 = vmatpush1.bf16.msra.mxu0 0
          %925 = vmatprep.subr.bf16.mxu0 0
          %926 = vmatpush1.bf16.msra.mxu0 0
          %927 = vmatprep.subr.bf16.mxu0 0
          %928 = vmatpush1.bf16.msra.mxu0 0
          %929 = vmatprep.subr.bf16.mxu0 0
          %930 = vmatpush1.bf16.msra.mxu0 0
          %931 = vmatprep.subr.bf16.mxu0 0
          %932 = vmatpush1.bf16.msra.mxu0 0
          %933 = vmatprep.subr.bf16.mxu0 0
          %934 = vmatpush1.bf16.msra.mxu0 0
          %935 = vmatprep.subr.bf16.mxu0 0
          %936 = vmatpush1.bf16.msra.mxu0 0
          %937 = vmatprep.subr.bf16.mxu0 0
          %938 = vmatpush1.bf16.msra.mxu0 0
          %939 = vmatprep.subr.bf16.mxu0 0
          %940 = vmatpush1.bf16.msra.mxu0 0
          %941 = vmatprep.mubr.bf16.mxu0 0
          %942 = vmatmul.mubr.bf16.gmra.mrb[0].mxu0 %v525
          %v943 = vpop.f32.mrb[0].mxu0
          %v944 = vadd.f32 0.0, %v943
          %v945 = vpop.f32.mrb[0].mxu0
          %v946 = vpop.f32.mrb[0].mxu0
          %v947 = vpop.f32.mrb[0].mxu0
          %948 = vdwg.mxu0
          %v949 = vpack.c.bf16 %v944, %v944
          %s950 = scalar_lea.vmem [#allocation3], 12
          %951 = vst.msk [vmem:[%s950] sm:$0xf] %vm568, %v949
        $region80: #{tpu_custom_call.1} parent=75 // pred_fallthru
          _
        %s952 = smul.u32 %s33, 8
        %s953 = scalar_lea.vmem %s476, %s952
        %v954 = vld [vmem:[%s953] sm:$0xff]
        %vm955 = vcmask 261120
        %v956 = vsel %vm955, %v954, 0.0
        %957 = vadd.xlane.f32.xlu0 %v956
        %v958 = vpop.xlane.xlu0 %957
        %v959 = vrcp.pop 32.0
        %v960 = vmul.f32 %v958, %v959
        %v961 = vsub.f32 %v954, %v960
        %v962 = vmul.f32 %v961, %v961
        %v963 = vsel %vm955, %v962, 0.0
        %964 = vadd.xlane.f32.xlu0 %v963
        %v965 = vpop.xlane.xlu0 %964
        %v966 = vmul.f32 %v965, %v959
        %v967 = vadd.f32 %v966, 1e-05
        %v968 = vrsqrt.pop %v967
        %v969 = vmul.f32 %v961, %v968
        %v971 = vlaneseq
        %v972 = vshrl.u32 %v971, 7
        %v973 = vsub.s32 0, %v972
        %v974 = vrot.slane %v478, %v973
        %v976 = vmul.f32 %v969, %v974
        %v978 = vlaneseq
        %v979 = vshrl.u32 %v978, 7
        %v980 = vsub.s32 0, %v979
        %v981 = vrot.slane %v479, %v980
        %v983 = vadd.f32 %v976, %v981
        %v984 = vpack.c.bf16 %v983, %v983
        %v985 = vld [vmem:[%s3] sm:$0xf]
        %v986 = vld [vmem:[%s3 + $0x4] sm:$0xf]
        %v987 = vld [vmem:[%s3 + $0x8] sm:$0xf]
        %v988 = vld [vmem:[%s3 + $0xc] sm:$0xf]
        %v993 = vunpack.c.l.b16 %v985
        %v994 = vunpack.c.l.b16 %v986
        %v995 = vunpack.c.l.b16 %v987
        %v996 = vunpack.c.l.b16 %v988
        %v997 = vpack.c.b16 %v994, %v993
        %v998 = vpack.c.b16 %v996, %v995
        %v1002 = vsel %vm955, %v984, 0
        %1004 = vmatprep.subr.bf16.mxu0 0
        %1005 = vmatpush1.bf16.msra.mxu0 %v997
        %1006 = vmatprep.subr.bf16.mxu0 0
        %1007 = vmatpush1.bf16.msra.mxu0 %v998
        %1008 = vmatprep.subr.bf16.mxu0 0
        %1009 = vmatpush1.bf16.msra.mxu0 0
        %1010 = vmatprep.subr.bf16.mxu0 0
        %1011 = vmatpush1.bf16.msra.mxu0 0
        %1012 = vmatprep.subr.bf16.mxu0 0
        %1013 = vmatpush1.bf16.msra.mxu0 0
        %1014 = vmatprep.subr.bf16.mxu0 0
        %1015 = vmatpush1.bf16.msra.mxu0 0
        %1016 = vmatprep.subr.bf16.mxu0 0
        %1017 = vmatpush1.bf16.msra.mxu0 0
        %1018 = vmatprep.subr.bf16.mxu0 0
        %1019 = vmatpush1.bf16.msra.mxu0 0
        %1020 = vmatprep.subr.bf16.mxu0 0
        %1021 = vmatpush1.bf16.msra.mxu0 0
        %1022 = vmatprep.subr.bf16.mxu0 0
        %1023 = vmatpush1.bf16.msra.mxu0 0
        %1024 = vmatprep.subr.bf16.mxu0 0
        %1025 = vmatpush1.bf16.msra.mxu0 0
        %1026 = vmatprep.subr.bf16.mxu0 0
        %1027 = vmatpush1.bf16.msra.mxu0 0
        %1028 = vmatprep.subr.bf16.mxu0 0
        %1029 = vmatpush1.bf16.msra.mxu0 0
        %1030 = vmatprep.subr.bf16.mxu0 0
        %1031 = vmatpush1.bf16.msra.mxu0 0
        %1032 = vmatprep.subr.bf16.mxu0 0
        %1033 = vmatpush1.bf16.msra.mxu0 0
        %1034 = vmatprep.subr.bf16.mxu0 0
        %1035 = vmatpush1.bf16.msra.mxu0 0
        %1036 = vmatprep.mubr.bf16.mxu0 0
        %1037 = vmatmul.mubr.bf16.gmra.mrb[0].mxu0 %v1002
        %v1038 = vpop.f32.mrb[0].mxu0
        %v1039 = vadd.f32 0.0, %v1038
        %v1040 = vpop.f32.mrb[0].mxu0
        %v1041 = vpop.f32.mrb[0].mxu0
        %v1042 = vpop.f32.mrb[0].mxu0
        %1043 = vdwg.mxu0
        %v1044 = vpack.c.bf16 %v1039, %v1039
        %v1045 = vld [vmem:[#allocation2] sm:$0xf]
        %vm1046 = vcmask 64512
        %v1048 = vsel %vm1046, %v1044, 0
        %vm1050 = vcmask 1043456
        %v1052 = vsel %vm1050, %v1045, 0
        %1054 = vmatprep.subr.bf16.mxu0 0
        %1055 = vmatpush1.bf16.msra.mxu0 %v1052
        %1056 = vmatprep.subr.bf16.mxu0 0
        %1057 = vmatpush1.bf16.msra.mxu0 0
        %1058 = vmatprep.subr.bf16.mxu0 0
        %1059 = vmatpush1.bf16.msra.mxu0 0
        %1060 = vmatprep.subr.bf16.mxu0 0
        %1061 = vmatpush1.bf16.msra.mxu0 0
        %1062 = vmatprep.subr.bf16.mxu0 0
        %1063 = vmatpush1.bf16.msra.mxu0 0
        %1064 = vmatprep.subr.bf16.mxu0 0
        %1065 = vmatpush1.bf16.msra.mxu0 0
        %1066 = vmatprep.subr.bf16.mxu0 0
        %1067 = vmatpush1.bf16.msra.mxu0 0
        %1068 = vmatprep.subr.bf16.mxu0 0
        %1069 = vmatpush1.bf16.msra.mxu0 0
        %1070 = vmatprep.subr.bf16.mxu0 0
        %1071 = vmatpush1.bf16.msra.mxu0 0
        %1072 = vmatprep.subr.bf16.mxu0 0
        %1073 = vmatpush1.bf16.msra.mxu0 0
        %1074 = vmatprep.subr.bf16.mxu0 0
        %1075 = vmatpush1.bf16.msra.mxu0 0
        %1076 = vmatprep.subr.bf16.mxu0 0
        %1077 = vmatpush1.bf16.msra.mxu0 0
        %1078 = vmatprep.subr.bf16.mxu0 0
        %1079 = vmatpush1.bf16.msra.mxu0 0
        %1080 = vmatprep.subr.bf16.mxu0 0
        %1081 = vmatpush1.bf16.msra.mxu0 0
        %1082 = vmatprep.subr.bf16.mxu0 0
        %1083 = vmatpush1.bf16.msra.mxu0 0
        %1084 = vmatprep.subr.bf16.mxu0 0
        %1085 = vmatpush1.bf16.msra.mxu0 0
        %1086 = vmatprep.mubr.bf16.mxu0 0
        %1087 = vmatmul.mubr.bf16.gmra.mrb[0].mxu0 %v1048
        %v1088 = vpop.f32.mrb[0].mxu0
        %v1089 = vadd.f32 0.0, %v1088
        %v1090 = vpop.f32.mrb[0].mxu0
        %v1091 = vpop.f32.mrb[0].mxu0
        %v1092 = vpop.f32.mrb[0].mxu0
        %1093 = vdwg.mxu0
        %v1094 = vsel %vm1046, %v1089, -inf
        %1095 = vmax.xlane.f32.xlu0 %v1094
        %v1096 = vpop.xlane.xlu0 %1095
        %v1097 = vsub.f32 %v1089, %v1096
        %v1098 = vmul.f32 %v1097, 1.442695
        %v1099 = vpow.pop %v1098
        %v1100 = vsel %vm1046, %v1099, 0.0
        %1101 = vadd.xlane.f32.xlu0 %v1100
        %v1102 = vpop.xlane.xlu0 %1101
        %v1103 = vrcp.pop %v1102
        %v1104 = vmul.f32 %v1099, %v1103
        %v1105 = vpack.c.bf16 %v1104, %v1104
        %v1106 = vld [vmem:[#allocation3] sm:$0xf]
        %v1108 = vsel %vm1046, %v1105, 0
        %v1111 = vsel %vm1050, %v1106, 0
        %1113 = vmatprep.subr.bf16.mxu0 0
        %1114 = vmatpush1.bf16.msra.mxu0 %v1111
        %1115 = vmatprep.subr.bf16.mxu0 0
        %1116 = vmatpush1.bf16.msra.mxu0 0
        %1117 = vmatprep.subr.bf16.mxu0 0
        %1118 = vmatpush1.bf16.msra.mxu0 0
        %1119 = vmatprep.subr.bf16.mxu0 0
        %1120 = vmatpush1.bf16.msra.mxu0 0
        %1121 = vmatprep.subr.bf16.mxu0 0
        %1122 = vmatpush1.bf16.msra.mxu0 0
        %1123 = vmatprep.subr.bf16.mxu0 0
        %1124 = vmatpush1.bf16.msra.mxu0 0
        %1125 = vmatprep.subr.bf16.mxu0 0
        %1126 = vmatpush1.bf16.msra.mxu0 0
        %1127 = vmatprep.subr.bf16.mxu0 0
        %1128 = vmatpush1.bf16.msra.mxu0 0
        %1129 = vmatprep.subr.bf16.mxu0 0
        %1130 = vmatpush1.bf16.msra.mxu0 0
        %1131 = vmatprep.subr.bf16.mxu0 0
        %1132 = vmatpush1.bf16.msra.mxu0 0
        %1133 = vmatprep.subr.bf16.mxu0 0
        %1134 = vmatpush1.bf16.msra.mxu0 0
        %1135 = vmatprep.subr.bf16.mxu0 0
        %1136 = vmatpush1.bf16.msra.mxu0 0
        %1137 = vmatprep.subr.bf16.mxu0 0
        %1138 = vmatpush1.bf16.msra.mxu0 0
        %1139 = vmatprep.subr.bf16.mxu0 0
        %1140 = vmatpush1.bf16.msra.mxu0 0
        %1141 = vmatprep.subr.bf16.mxu0 0
        %1142 = vmatpush1.bf16.msra.mxu0 0
        %1143 = vmatprep.subr.bf16.mxu0 0
        %1144 = vmatpush1.bf16.msra.mxu0 0
        %1145 = vmatprep.mubr.bf16.mxu0 0
        %1146 = vmatmul.mubr.bf16.gmra.mrb[0].mxu0 %v1108
        %v1147 = vpop.f32.mrb[0].mxu0
        %v1148 = vadd.f32 0.0, %v1147
        %v1149 = vpop.f32.mrb[0].mxu0
        %v1150 = vpop.f32.mrb[0].mxu0
        %v1151 = vpop.f32.mrb[0].mxu0
        %1152 = vdwg.mxu0
        %v1153 = vpack.c.bf16 %v1148, %v1148
        %vm1154 = vcmask 60416
        %1155 = vst.msk [vmem:[#allocation4] sm:$0xf] %vm1154, %v1153
        %s1156 = scalar_lea.vmem [#allocation2], 4
        %v1157 = vld [vmem:[%s1156] sm:$0xf]
        %1159 = vrot.lane.b32.xlu0 %v1044, 120
        %v1160 = vpop.permute.xlu0 %1159
        %v1162 = vsel %vm1046, %v1160, 0
        %v1165 = vsel %vm1050, %v1157, 0
        %1167 = vmatprep.subr.bf16.mxu0 0
        %1168 = vmatpush1.bf16.msra.mxu0 %v1165
        %1169 = vmatprep.subr.bf16.mxu0 0
        %1170 = vmatpush1.bf16.msra.mxu0 0
        %1171 = vmatprep.subr.bf16.mxu0 0
        %1172 = vmatpush1.bf16.msra.mxu0 0
        %1173 = vmatprep.subr.bf16.mxu0 0
        %1174 = vmatpush1.bf16.msra.mxu0 0
        %1175 = vmatprep.subr.bf16.mxu0 0
        %1176 = vmatpush1.bf16.msra.mxu0 0
        %1177 = vmatprep.subr.bf16.mxu0 0
        %1178 = vmatpush1.bf16.msra.mxu0 0
        %1179 = vmatprep.subr.bf16.mxu0 0
        %1180 = vmatpush1.bf16.msra.mxu0 0
        %1181 = vmatprep.subr.bf16.mxu0 0
        %1182 = vmatpush1.bf16.msra.mxu0 0
        %1183 = vmatprep.subr.bf16.mxu0 0
        %1184 = vmatpush1.bf16.msra.mxu0 0
        %1185 = vmatprep.subr.bf16.mxu0 0
        %1186 = vmatpush1.bf16.msra.mxu0 0
        %1187 = vmatprep.subr.bf16.mxu0 0
        %1188 = vmatpush1.bf16.msra.mxu0 0
        %1189 = vmatprep.subr.bf16.mxu0 0
        %1190 = vmatpush1.bf16.msra.mxu0 0
        %1191 = vmatprep.subr.bf16.mxu0 0
        %1192 = vmatpush1.bf16.msra.mxu0 0
        %1193 = vmatprep.subr.bf16.mxu0 0
        %1194 = vmatpush1.bf16.msra.mxu0 0
        %1195 = vmatprep.subr.bf16.mxu0 0
        %1196 = vmatpush1.bf16.msra.mxu0 0
        %1197 = vmatprep.subr.bf16.mxu0 0
        %1198 = vmatpush1.bf16.msra.mxu0 0
        %1199 = vmatprep.mubr.bf16.mxu0 0
        %1200 = vmatmul.mubr.bf16.gmra.mrb[0].mxu0 %v1162
        %v1201 = vpop.f32.mrb[0].mxu0
        %v1202 = vadd.f32 0.0, %v1201
        %v1203 = vpop.f32.mrb[0].mxu0
        %v1204 = vpop.f32.mrb[0].mxu0
        %v1205 = vpop.f32.mrb[0].mxu0
        %1206 = vdwg.mxu0
        %v1207 = vsel %vm1046, %v1202, -inf
        %1208 = vmax.xlane.f32.xlu0 %v1207
        %v1209 = vpop.xlane.xlu0 %1208
        %v1210 = vsub.f32 %v1202, %v1209
        %v1211 = vmul.f32 %v1210, 1.442695
        %v1212 = vpow.pop %v1211
        %v1213 = vsel %vm1046, %v1212, 0.0
        %1214 = vadd.xlane.f32.xlu0 %v1213
        %v1215 = vpop.xlane.xlu0 %1214
        %v1216 = vrcp.pop %v1215
        %v1217 = vmul.f32 %v1212, %v1216
        %v1218 = vpack.c.bf16 %v1217, %v1217
        %s1219 = scalar_lea.vmem [#allocation3], 4
        %v1220 = vld [vmem:[%s1219] sm:$0xf]
        %v1222 = vsel %vm1046, %v1218, 0
        %v1225 = vsel %vm1050, %v1220, 0
        %1227 = vmatprep.subr.bf16.mxu0 0
        %1228 = vmatpush1.bf16.msra.mxu0 %v1225
        %1229 = vmatprep.subr.bf16.mxu0 0
        %1230 = vmatpush1.bf16.msra.mxu0 0
        %1231 = vmatprep.subr.bf16.mxu0 0
        %1232 = vmatpush1.bf16.msra.mxu0 0
        %1233 = vmatprep.subr.bf16.mxu0 0
        %1234 = vmatpush1.bf16.msra.mxu0 0
        %1235 = vmatprep.subr.bf16.mxu0 0
        %1236 = vmatpush1.bf16.msra.mxu0 0
        %1237 = vmatprep.subr.bf16.mxu0 0
        %1238 = vmatpush1.bf16.msra.mxu0 0
        %1239 = vmatprep.subr.bf16.mxu0 0
        %1240 = vmatpush1.bf16.msra.mxu0 0
        %1241 = vmatprep.subr.bf16.mxu0 0
        %1242 = vmatpush1.bf16.msra.mxu0 0
        %1243 = vmatprep.subr.bf16.mxu0 0
        %1244 = vmatpush1.bf16.msra.mxu0 0
        %1245 = vmatprep.subr.bf16.mxu0 0
        %1246 = vmatpush1.bf16.msra.mxu0 0
        %1247 = vmatprep.subr.bf16.mxu0 0
        %1248 = vmatpush1.bf16.msra.mxu0 0
        %1249 = vmatprep.subr.bf16.mxu0 0
        %1250 = vmatpush1.bf16.msra.mxu0 0
        %1251 = vmatprep.subr.bf16.mxu0 0
        %1252 = vmatpush1.bf16.msra.mxu0 0
        %1253 = vmatprep.subr.bf16.mxu0 0
        %1254 = vmatpush1.bf16.msra.mxu0 0
        %1255 = vmatprep.subr.bf16.mxu0 0
        %1256 = vmatpush1.bf16.msra.mxu0 0
        %1257 = vmatprep.subr.bf16.mxu0 0
        %1258 = vmatpush1.bf16.msra.mxu0 0
        %1259 = vmatprep.mubr.bf16.mxu0 0
        %1260 = vmatmul.mubr.bf16.gmra.mrb[0].mxu0 %v1222
        %v1261 = vpop.f32.mrb[0].mxu0
        %v1262 = vadd.f32 0.0, %v1261
        %v1263 = vpop.f32.mrb[0].mxu0
        %v1264 = vpop.f32.mrb[0].mxu0
        %v1265 = vpop.f32.mrb[0].mxu0
        %1266 = vdwg.mxu0
        %v1267 = vpack.c.bf16 %v1262, %v1262
        %v1269 = vunpack.c.l.b16 %v1267
        %v1270 = vpack.c.b16 %v1269, %v1269
        %1271 = vrot.lane.b32.xlu0 %v1270, 8
        %v1272 = vpop.permute.xlu0 %1271
        %vm1274 = vcmask 126016
        %1275 = vst.msk [vmem:[#allocation4] sm:$0xf] %vm1274, %v1272
        %s1276 = scalar_lea.vmem [#allocation2], 8
        %v1277 = vld [vmem:[%s1276] sm:$0xf]
        %1278 = vrot.lane.b32.xlu0 %v1044, 112
        %v1279 = vpop.permute.xlu0 %1278
        %v1281 = vsel %vm1046, %v1279, 0
        %v1284 = vsel %vm1050, %v1277, 0
        %1286 = vmatprep.subr.bf16.mxu0 0
        %1287 = vmatpush1.bf16.msra.mxu0 %v1284
        %1288 = vmatprep.subr.bf16.mxu0 0
        %1289 = vmatpush1.bf16.msra.mxu0 0
        %1290 = vmatprep.subr.bf16.mxu0 0
        %1291 = vmatpush1.bf16.msra.mxu0 0
        %1292 = vmatprep.subr.bf16.mxu0 0
        %1293 = vmatpush1.bf16.msra.mxu0 0
        %1294 = vmatprep.subr.bf16.mxu0 0
        %1295 = vmatpush1.bf16.msra.mxu0 0
        %1296 = vmatprep.subr.bf16.mxu0 0
        %1297 = vmatpush1.bf16.msra.mxu0 0
        %1298 = vmatprep.subr.bf16.mxu0 0
        %1299 = vmatpush1.bf16.msra.mxu0 0
        %1300 = vmatprep.subr.bf16.mxu0 0
        %1301 = vmatpush1.bf16.msra.mxu0 0
        %1302 = vmatprep.subr.bf16.mxu0 0
        %1303 = vmatpush1.bf16.msra.mxu0 0
        %1304 = vmatprep.subr.bf16.mxu0 0
        %1305 = vmatpush1.bf16.msra.mxu0 0
        %1306 = vmatprep.subr.bf16.mxu0 0
        %1307 = vmatpush1.bf16.msra.mxu0 0
        %1308 = vmatprep.subr.bf16.mxu0 0
        %1309 = vmatpush1.bf16.msra.mxu0 0
        %1310 = vmatprep.subr.bf16.mxu0 0
        %1311 = vmatpush1.bf16.msra.mxu0 0
        %1312 = vmatprep.subr.bf16.mxu0 0
        %1313 = vmatpush1.bf16.msra.mxu0 0
        %1314 = vmatprep.subr.bf16.mxu0 0
        %1315 = vmatpush1.bf16.msra.mxu0 0
        %1316 = vmatprep.subr.bf16.mxu0 0
        %1317 = vmatpush1.bf16.msra.mxu0 0
        %1318 = vmatprep.mubr.bf16.mxu0 0
        %1319 = vmatmul.mubr.bf16.gmra.mrb[0].mxu0 %v1281
        %v1320 = vpop.f32.mrb[0].mxu0
        %v1321 = vadd.f32 0.0, %v1320
        %v1322 = vpop.f32.mrb[0].mxu0
        %v1323 = vpop.f32.mrb[0].mxu0
        %v1324 = vpop.f32.mrb[0].mxu0
        %1325 = vdwg.mxu0
        %v1326 = vsel %vm1046, %v1321, -inf
        %1327 = vmax.xlane.f32.xlu0 %v1326
        %v1328 = vpop.xlane.xlu0 %1327
        %v1329 = vsub.f32 %v1321, %v1328
        %v1330 = vmul.f32 %v1329, 1.442695
        %v1331 = vpow.pop %v1330
        %v1332 = vsel %vm1046, %v1331, 0.0
        %1333 = vadd.xlane.f32.xlu0 %v1332
        %v1334 = vpop.xlane.xlu0 %1333
        %v1335 = vrcp.pop %v1334
        %v1336 = vmul.f32 %v1331, %v1335
        %v1337 = vpack.c.bf16 %v1336, %v1336
        %s1338 = scalar_lea.vmem [#allocation3], 8
        %v1339 = vld [vmem:[%s1338] sm:$0xf]
        %v1341 = vsel %vm1046, %v1337, 0
        %v1344 = vsel %vm1050, %v1339, 0
        %1346 = vmatprep.subr.bf16.mxu0 0
        %1347 = vmatpush1.bf16.msra.mxu0 %v1344
        %1348 = vmatprep.subr.bf16.mxu0 0
        %1349 = vmatpush1.bf16.msra.mxu0 0
        %1350 = vmatprep.subr.bf16.mxu0 0
        %1351 = vmatpush1.bf16.msra.mxu0 0
        %1352 = vmatprep.subr.bf16.mxu0 0
        %1353 = vmatpush1.bf16.msra.mxu0 0
        %1354 = vmatprep.subr.bf16.mxu0 0
        %1355 = vmatpush1.bf16.msra.mxu0 0
        %1356 = vmatprep.subr.bf16.mxu0 0
        %1357 = vmatpush1.bf16.msra.mxu0 0
        %1358 = vmatprep.subr.bf16.mxu0 0
        %1359 = vmatpush1.bf16.msra.mxu0 0
        %1360 = vmatprep.subr.bf16.mxu0 0
        %1361 = vmatpush1.bf16.msra.mxu0 0
        %1362 = vmatprep.subr.bf16.mxu0 0
        %1363 = vmatpush1.bf16.msra.mxu0 0
        %1364 = vmatprep.subr.bf16.mxu0 0
        %1365 = vmatpush1.bf16.msra.mxu0 0
        %1366 = vmatprep.subr.bf16.mxu0 0
        %1367 = vmatpush1.bf16.msra.mxu0 0
        %1368 = vmatprep.subr.bf16.mxu0 0
        %1369 = vmatpush1.bf16.msra.mxu0 0
        %1370 = vmatprep.subr.bf16.mxu0 0
        %1371 = vmatpush1.bf16.msra.mxu0 0
        %1372 = vmatprep.subr.bf16.mxu0 0
        %1373 = vmatpush1.bf16.msra.mxu0 0
        %1374 = vmatprep.subr.bf16.mxu0 0
        %1375 = vmatpush1.bf16.msra.mxu0 0
        %1376 = vmatprep.subr.bf16.mxu0 0
        %1377 = vmatpush1.bf16.msra.mxu0 0
        %1378 = vmatprep.mubr.bf16.mxu0 0
        %1379 = vmatmul.mubr.bf16.gmra.mrb[0].mxu0 %v1341
        %v1380 = vpop.f32.mrb[0].mxu0
        %v1381 = vadd.f32 0.0, %v1380
        %v1382 = vpop.f32.mrb[0].mxu0
        %v1383 = vpop.f32.mrb[0].mxu0
        %v1384 = vpop.f32.mrb[0].mxu0
        %1385 = vdwg.mxu0
        %v1386 = vpack.c.bf16 %v1381, %v1381
        %v1388 = vunpack.c.l.b16 %v1386
        %v1389 = vpack.c.b16 %v1388, %v1388
        %1390 = vrot.lane.b32.xlu0 %v1389, 16
        %v1391 = vpop.permute.xlu0 %1390
        %vm1393 = vcmask 191616
        %1394 = vst.msk [vmem:[#allocation4] sm:$0xf] %vm1393, %v1391
        %s1395 = scalar_lea.vmem [#allocation2], 12
        %v1396 = vld [vmem:[%s1395] sm:$0xf]
        %1397 = vrot.lane.b32.xlu0 %v1044, 104
        %v1398 = vpop.permute.xlu0 %1397
        %v1400 = vsel %vm1046, %v1398, 0
        %v1403 = vsel %vm1050, %v1396, 0
        %1405 = vmatprep.subr.bf16.mxu0 0
        %1406 = vmatpush1.bf16.msra.mxu0 %v1403
        %1407 = vmatprep.subr.bf16.mxu0 0
        %1408 = vmatpush1.bf16.msra.mxu0 0
        %1409 = vmatprep.subr.bf16.mxu0 0
        %1410 = vmatpush1.bf16.msra.mxu0 0
        %1411 = vmatprep.subr.bf16.mxu0 0
        %1412 = vmatpush1.bf16.msra.mxu0 0
        %1413 = vmatprep.subr.bf16.mxu0 0
        %1414 = vmatpush1.bf16.msra.mxu0 0
        %1415 = vmatprep.subr.bf16.mxu0 0
        %1416 = vmatpush1.bf16.msra.mxu0 0
        %1417 = vmatprep.subr.bf16.mxu0 0
        %1418 = vmatpush1.bf16.msra.mxu0 0
        %1419 = vmatprep.subr.bf16.mxu0 0
        %1420 = vmatpush1.bf16.msra.mxu0 0
        %1421 = vmatprep.subr.bf16.mxu0 0
        %1422 = vmatpush1.bf16.msra.mxu0 0
        %1423 = vmatprep.subr.bf16.mxu0 0
        %1424 = vmatpush1.bf16.msra.mxu0 0
        %1425 = vmatprep.subr.bf16.mxu0 0
        %1426 = vmatpush1.bf16.msra.mxu0 0
        %1427 = vmatprep.subr.bf16.mxu0 0
        %1428 = vmatpush1.bf16.msra.mxu0 0
        %1429 = vmatprep.subr.bf16.mxu0 0
        %1430 = vmatpush1.bf16.msra.mxu0 0
        %1431 = vmatprep.subr.bf16.mxu0 0
        %1432 = vmatpush1.bf16.msra.mxu0 0
        %1433 = vmatprep.subr.bf16.mxu0 0
        %1434 = vmatpush1.bf16.msra.mxu0 0
        %1435 = vmatprep.subr.bf16.mxu0 0
        %1436 = vmatpush1.bf16.msra.mxu0 0
        %1437 = vmatprep.mubr.bf16.mxu0 0
        %1438 = vmatmul.mubr.bf16.gmra.mrb[0].mxu0 %v1400
        %v1439 = vpop.f32.mrb[0].mxu0
        %v1440 = vadd.f32 0.0, %v1439
        %v1441 = vpop.f32.mrb[0].mxu0
        %v1442 = vpop.f32.mrb[0].mxu0
        %v1443 = vpop.f32.mrb[0].mxu0
        %1444 = vdwg.mxu0
        %v1445 = vsel %vm1046, %v1440, -inf
        %1446 = vmax.xlane.f32.xlu0 %v1445
        %v1447 = vpop.xlane.xlu0 %1446
        %v1448 = vsub.f32 %v1440, %v1447
        %v1449 = vmul.f32 %v1448, 1.442695
        %v1450 = vpow.pop %v1449
        %v1451 = vsel %vm1046, %v1450, 0.0
        %1452 = vadd.xlane.f32.xlu0 %v1451
        %v1453 = vpop.xlane.xlu0 %1452
        %v1454 = vrcp.pop %v1453
        %v1455 = vmul.f32 %v1450, %v1454
        %v1456 = vpack.c.bf16 %v1455, %v1455
        %s1457 = scalar_lea.vmem [#allocation3], 12
        %v1458 = vld [vmem:[%s1457] sm:$0xf]
        %v1460 = vsel %vm1046, %v1456, 0
        %v1463 = vsel %vm1050, %v1458, 0
        %1465 = vmatprep.subr.bf16.mxu0 0
        %1466 = vmatpush1.bf16.msra.mxu0 %v1463
        %1467 = vmatprep.subr.bf16.mxu0 0
        %1468 = vmatpush1.bf16.msra.mxu0 0
        %1469 = vmatprep.subr.bf16.mxu0 0
        %1470 = vmatpush1.bf16.msra.mxu0 0
        %1471 = vmatprep.subr.bf16.mxu0 0
        %1472 = vmatpush1.bf16.msra.mxu0 0
        %1473 = vmatprep.subr.bf16.mxu0 0
        %1474 = vmatpush1.bf16.msra.mxu0 0
        %1475 = vmatprep.subr.bf16.mxu0 0
        %1476 = vmatpush1.bf16.msra.mxu0 0
        %1477 = vmatprep.subr.bf16.mxu0 0
        %1478 = vmatpush1.bf16.msra.mxu0 0
        %1479 = vmatprep.subr.bf16.mxu0 0
        %1480 = vmatpush1.bf16.msra.mxu0 0
        %1481 = vmatprep.subr.bf16.mxu0 0
        %1482 = vmatpush1.bf16.msra.mxu0 0
        %1483 = vmatprep.subr.bf16.mxu0 0
        %1484 = vmatpush1.bf16.msra.mxu0 0
        %1485 = vmatprep.subr.bf16.mxu0 0
        %1486 = vmatpush1.bf16.msra.mxu0 0
        %1487 = vmatprep.subr.bf16.mxu0 0
        %1488 = vmatpush1.bf16.msra.mxu0 0
        %1489 = vmatprep.subr.bf16.mxu0 0
        %1490 = vmatpush1.bf16.msra.mxu0 0
        %1491 = vmatprep.subr.bf16.mxu0 0
        %1492 = vmatpush1.bf16.msra.mxu0 0
        %1493 = vmatprep.subr.bf16.mxu0 0
        %1494 = vmatpush1.bf16.msra.mxu0 0
        %1495 = vmatprep.subr.bf16.mxu0 0
        %1496 = vmatpush1.bf16.msra.mxu0 0
        %1497 = vmatprep.mubr.bf16.mxu0 0
        %1498 = vmatmul.mubr.bf16.gmra.mrb[0].mxu0 %v1460
        %v1499 = vpop.f32.mrb[0].mxu0
        %v1500 = vadd.f32 0.0, %v1499
        %v1501 = vpop.f32.mrb[0].mxu0
        %v1502 = vpop.f32.mrb[0].mxu0
        %v1503 = vpop.f32.mrb[0].mxu0
        %1504 = vdwg.mxu0
        %v1505 = vpack.c.bf16 %v1500, %v1500
        %v1507 = vunpack.c.l.b16 %v1505
        %v1508 = vpack.c.b16 %v1507, %v1507
        %1509 = vrot.lane.b32.xlu0 %v1508, 24
        %v1510 = vpop.permute.xlu0 %1509
        %vm1512 = vcmask 257216
        %1513 = vst.msk [vmem:[#allocation4] sm:$0xf] %vm1512, %v1510
        %v1514 = vld [vmem:[#allocation4] sm:$0xf]
        %v1515 = vld [vmem:[%s6] sm:$0xf]
        %v1516 = vld [vmem:[%s6 + $0x4] sm:$0xf]
        %v1517 = vld [vmem:[%s6 + $0x8] sm:$0xf]
        %v1518 = vld [vmem:[%s6 + $0xc] sm:$0xf]
        %v1523 = vunpack.c.l.b16 %v1515
        %v1524 = vunpack.c.l.b16 %v1516
        %v1525 = vunpack.c.l.b16 %v1517
        %v1526 = vunpack.c.l.b16 %v1518
        %v1527 = vpack.c.b16 %v1524, %v1523
        %v1528 = vpack.c.b16 %v1526, %v1525
        %v1532 = vsel %vm955, %v1514, 0
        %1534 = vmatprep.subr.bf16.mxu0 0
        %1535 = vmatpush1.bf16.msra.mxu0 %v1527
        %1536 = vmatprep.subr.bf16.mxu0 0
        %1537 = vmatpush1.bf16.msra.mxu0 %v1528
        %1538 = vmatprep.subr.bf16.mxu0 0
        %1539 = vmatpush1.bf16.msra.mxu0 0
        %1540 = vmatprep.subr.bf16.mxu0 0
        %1541 = vmatpush1.bf16.msra.mxu0 0
        %1542 = vmatprep.subr.bf16.mxu0 0
        %1543 = vmatpush1.bf16.msra.mxu0 0
        %1544 = vmatprep.subr.bf16.mxu0 0
        %1545 = vmatpush1.bf16.msra.mxu0 0
        %1546 = vmatprep.subr.bf16.mxu0 0
        %1547 = vmatpush1.bf16.msra.mxu0 0
        %1548 = vmatprep.subr.bf16.mxu0 0
        %1549 = vmatpush1.bf16.msra.mxu0 0
        %1550 = vmatprep.subr.bf16.mxu0 0
        %1551 = vmatpush1.bf16.msra.mxu0 0
        %1552 = vmatprep.subr.bf16.mxu0 0
        %1553 = vmatpush1.bf16.msra.mxu0 0
        %1554 = vmatprep.subr.bf16.mxu0 0
        %1555 = vmatpush1.bf16.msra.mxu0 0
        %1556 = vmatprep.subr.bf16.mxu0 0
        %1557 = vmatpush1.bf16.msra.mxu0 0
        %1558 = vmatprep.subr.bf16.mxu0 0
        %1559 = vmatpush1.bf16.msra.mxu0 0
        %1560 = vmatprep.subr.bf16.mxu0 0
        %1561 = vmatpush1.bf16.msra.mxu0 0
        %1562 = vmatprep.subr.bf16.mxu0 0
        %1563 = vmatpush1.bf16.msra.mxu0 0
        %1564 = vmatprep.subr.bf16.mxu0 0
        %1565 = vmatpush1.bf16.msra.mxu0 0
        %1566 = vmatprep.mubr.bf16.mxu0 0
        %1567 = vmatmul.mubr.bf16.gmra.mrb[0].mxu0 %v1532
        %v1568 = vpop.f32.mrb[0].mxu0
        %v1569 = vadd.f32 0.0, %v1568
        %v1570 = vpop.f32.mrb[0].mxu0
        %v1571 = vpop.f32.mrb[0].mxu0
        %v1572 = vpop.f32.mrb[0].mxu0
        %1573 = vdwg.mxu0
        %v1574 = vadd.f32 %v954, %v1569
        %v1576 = vlaneseq
        %v1577 = vshrl.u32 %v1576, 7
        %v1578 = vsub.s32 0, %v1577
        %v1579 = vrot.slane %v482, %v1578
        %v1581 = vadd.f32 %v1574, %v1579
        %v1582 = vsel %vm955, %v1581, 0.0
        %1583 = vadd.xlane.f32.xlu0 %v1582
        %v1584 = vpop.xlane.xlu0 %1583
        %v1585 = vmul.f32 %v1584, %v959
        %v1586 = vsub.f32 %v1581, %v1585
        %v1587 = vmul.f32 %v1586, %v1586
        %v1588 = vsel %vm955, %v1587, 0.0
        %1589 = vadd.xlane.f32.xlu0 %v1588
        %v1590 = vpop.xlane.xlu0 %1589
        %v1591 = vmul.f32 %v1590, %v959
        %v1592 = vadd.f32 %v1591, 1e-05
        %v1593 = vrsqrt.pop %v1592
        %v1594 = vmul.f32 %v1586, %v1593
        %v1596 = vlaneseq
        %v1597 = vshrl.u32 %v1596, 7
        %v1598 = vsub.s32 0, %v1597
        %v1599 = vrot.slane %v480, %v1598
        %v1601 = vmul.f32 %v1594, %v1599
        %v1603 = vlaneseq
        %v1604 = vshrl.u32 %v1603, 7
        %v1605 = vsub.s32 0, %v1604
        %v1606 = vrot.slane %v481, %v1605
        %v1608 = vadd.f32 %v1601, %v1606
        %v1609 = vpack.c.bf16 %v1608, %v1608
        %v1610 = vld [vmem:[%s10] sm:$0xf]
        %v1611 = vld [vmem:[%s10 + $0x4] sm:$0xf]
        %v1612 = vld [vmem:[%s10 + $0x8] sm:$0xf]
        %v1613 = vld [vmem:[%s10 + $0xc] sm:$0xf]
        %v1615 = vlaneseq
        %v1616 = vshrl.u32 %v1615, 7
        %v1617 = vsub.s32 0, %v1616
        %v1618 = vrot.slane %v483, %v1617
        %v1624 = vunpack.c.l.b16 %v1610
        %v1625 = vunpack.c.l.b16 %v1611
        %v1626 = vunpack.c.l.b16 %v1612
        %v1627 = vunpack.c.l.b16 %v1613
        %v1628 = vpack.c.b16 %v1625, %v1624
        %v1629 = vpack.c.b16 %v1627, %v1626
        %v1633 = vsel %vm955, %v1609, 0
        %1635 = vmatprep.subr.bf16.mxu0 0
        %1636 = vmatpush1.bf16.msra.mxu0 %v1628
        %1637 = vmatprep.subr.bf16.mxu0 0
        %1638 = vmatpush1.bf16.msra.mxu0 %v1629
        %1639 = vmatprep.subr.bf16.mxu0 0
        %1640 = vmatpush1.bf16.msra.mxu0 0
        %1641 = vmatprep.subr.bf16.mxu0 0
        %1642 = vmatpush1.bf16.msra.mxu0 0
        %1643 = vmatprep.subr.bf16.mxu0 0
        %1644 = vmatpush1.bf16.msra.mxu0 0
        %1645 = vmatprep.subr.bf16.mxu0 0
        %1646 = vmatpush1.bf16.msra.mxu0 0
        %1647 = vmatprep.subr.bf16.mxu0 0
        %1648 = vmatpush1.bf16.msra.mxu0 0
        %1649 = vmatprep.subr.bf16.mxu0 0
        %1650 = vmatpush1.bf16.msra.mxu0 0
        %1651 = vmatprep.subr.bf16.mxu0 0
        %1652 = vmatpush1.bf16.msra.mxu0 0
        %1653 = vmatprep.subr.bf16.mxu0 0
        %1654 = vmatpush1.bf16.msra.mxu0 0
        %1655 = vmatprep.subr.bf16.mxu0 0
        %1656 = vmatpush1.bf16.msra.mxu0 0
        %1657 = vmatprep.subr.bf16.mxu0 0
        %1658 = vmatpush1.bf16.msra.mxu0 0
        %1659 = vmatprep.subr.bf16.mxu0 0
        %1660 = vmatpush1.bf16.msra.mxu0 0
        %1661 = vmatprep.subr.bf16.mxu0 0
        %1662 = vmatpush1.bf16.msra.mxu0 0
        %1663 = vmatprep.subr.bf16.mxu0 0
        %1664 = vmatpush1.bf16.msra.mxu0 0
        %1665 = vmatprep.subr.bf16.mxu0 0
        %1666 = vmatpush1.bf16.msra.mxu0 0
        %1667 = vmatprep.mubr.bf16.mxu0 0
        %1668 = vmatmul.mubr.bf16.gmra.mrb[0].mxu0 %v1633
        %v1669 = vpop.f32.mrb[0].mxu0
        %v1670 = vadd.f32 %v1618, %v1669
        %v1671 = vpop.f32.mrb[0].mxu0
        %v1672 = vpop.f32.mrb[0].mxu0
        %v1673 = vpop.f32.mrb[0].mxu0
        %1674 = vdwg.mxu0
        %v1675 = vmul.f32 %v1670, 0.5
        %v1676 = vmul.f32 %v1670, 0.70710677
        %v1677 = verf.f32.pop %v1676
        %v1678 = vadd.f32 %v1677, 1.0
        %v1679 = vmul.f32 %v1675, %v1678
        %v1680 = vpack.c.bf16 %v1679, %v1679
        %v1681 = vld [vmem:[%s12] sm:$0xf]
        %v1682 = vld [vmem:[%s12 + $0x4] sm:$0xf]
        %v1683 = vld [vmem:[%s12 + $0x8] sm:$0xf]
        %v1684 = vld [vmem:[%s12 + $0xc] sm:$0xf]
        %v1685 = vld [vmem:[%s12 + $0x10] sm:$0xf]
        %v1686 = vld [vmem:[%s12 + $0x14] sm:$0xf]
        %v1687 = vld [vmem:[%s12 + $0x18] sm:$0xf]
        %v1688 = vld [vmem:[%s12 + $0x1c] sm:$0xf]
        %v1690 = vlaneseq
        %v1691 = vshrl.u32 %v1690, 7
        %v1692 = vsub.s32 0, %v1691
        %v1693 = vrot.slane %v484, %v1692
        %v1703 = vunpack.c.l.b16 %v1681
        %v1704 = vunpack.c.l.b16 %v1682
        %v1705 = vunpack.c.l.b16 %v1683
        %v1706 = vunpack.c.l.b16 %v1684
        %v1707 = vunpack.c.l.b16 %v1685
        %v1708 = vunpack.c.l.b16 %v1686
        %v1709 = vunpack.c.l.b16 %v1687
        %v1710 = vunpack.c.l.b16 %v1688
        %v1711 = vpack.c.b16 %v1704, %v1703
        %v1712 = vpack.c.b16 %v1706, %v1705
        %v1713 = vpack.c.b16 %v1708, %v1707
        %v1714 = vpack.c.b16 %v1710, %v1709
        %vm1719 = vcmask 523264
        %v1721 = vsel %vm1719, %v1680, 0
        %1723 = vmatprep.subr.bf16.mxu0 0
        %1724 = vmatpush1.bf16.msra.mxu0 %v1711
        %1725 = vmatprep.subr.bf16.mxu0 0
        %1726 = vmatpush1.bf16.msra.mxu0 %v1712
        %1727 = vmatprep.subr.bf16.mxu0 0
        %1728 = vmatpush1.bf16.msra.mxu0 %v1713
        %1729 = vmatprep.subr.bf16.mxu0 0
        %1730 = vmatpush1.bf16.msra.mxu0 %v1714
        %1731 = vmatprep.subr.bf16.mxu0 0
        %1732 = vmatpush1.bf16.msra.mxu0 0
        %1733 = vmatprep.subr.bf16.mxu0 0
        %1734 = vmatpush1.bf16.msra.mxu0 0
        %1735 = vmatprep.subr.bf16.mxu0 0
        %1736 = vmatpush1.bf16.msra.mxu0 0
        %1737 = vmatprep.subr.bf16.mxu0 0
        %1738 = vmatpush1.bf16.msra.mxu0 0
        %1739 = vmatprep.subr.bf16.mxu0 0
        %1740 = vmatpush1.bf16.msra.mxu0 0
        %1741 = vmatprep.subr.bf16.mxu0 0
        %1742 = vmatpush1.bf16.msra.mxu0 0
        %1743 = vmatprep.subr.bf16.mxu0 0
        %1744 = vmatpush1.bf16.msra.mxu0 0
        %1745 = vmatprep.subr.bf16.mxu0 0
        %1746 = vmatpush1.bf16.msra.mxu0 0
        %1747 = vmatprep.subr.bf16.mxu0 0
        %1748 = vmatpush1.bf16.msra.mxu0 0
        %1749 = vmatprep.subr.bf16.mxu0 0
        %1750 = vmatpush1.bf16.msra.mxu0 0
        %1751 = vmatprep.subr.bf16.mxu0 0
        %1752 = vmatpush1.bf16.msra.mxu0 0
        %1753 = vmatprep.subr.bf16.mxu0 0
        %1754 = vmatpush1.bf16.msra.mxu0 0
        %1755 = vmatprep.mubr.bf16.mxu0 0
        %1756 = vmatmul.mubr.bf16.gmra.mrb[0].mxu0 %v1721
        %v1757 = vpop.f32.mrb[0].mxu0
        %v1758 = vadd.f32 %v1693, %v1757
        %v1759 = vpop.f32.mrb[0].mxu0
        %v1760 = vpop.f32.mrb[0].mxu0
        %v1761 = vpop.f32.mrb[0].mxu0
        %1762 = vdwg.mxu0
        %v1763 = vadd.f32 %v1581, %v1758
        %1764 = vst.msk [vmem:[%s472] sm:$0xff] %vm955, %v1763
        %s1765 = sand.u32 %s349, 1
        %s1766 = scalar_lea.sflag [#allocation6], %s1765
        %s1767 = sand.u32 %s349, 1
        %s1768 = smul.addr %s1767, 8
        %s1769 = scalar_lea.vmem [#allocation5], %s1768
        // Predicated region
        $region81: #{tpu_custom_call.1} parent=75 // pred_check
          %p1770 = pneg %p359
        $region82: #{tpu_custom_call.1} parent=75 // pred_check_branch
          %1772 = sbr.rel (%p1770) target = $region84
        $region83: #{tpu_custom_call.1} parent=75 // pred_region
          %s1774 = ssub.s32 128, 128
          %1775 = vsyncadd %s1766, %s1774
          %s1776 = sadd.s32 %s33, %s32
          %s1777 = smul.addr %s1776, 128
          %s1778 = scalar_lea.hbm %s14, %s1777
          %s1780 = sshll.u32 %s1769, 4
          %s1781 = int_to_ptr.vmem [resolvable:$true] %s1780
          %1783 = dma.vmem_to_hbm [thread:$0]  %s1781, 128, %s1778, %s1766
        $region84: #{tpu_custom_call.1} parent=75 // pred_fallthru
          _
      $region76: #{tpu_custom_call.1} parent=5 // pred_fallthru
        _
      %p1784 = scmp.le.s32.totalorder 2, %s23
      // Predicated region
      $region85: #{tpu_custom_call.1} parent=5 // pred_check
        %p1785 = pneg %p1784
      $region86: #{tpu_custom_call.1} parent=5 // pred_check_branch
        %1787 = sbr.rel (%p1785) target = $region88
      $region87: #{tpu_custom_call.1} parent=5 // pred_region
        %s1788 = ssub.s32 %s23, 2
        // Predicated region
        $region89: #{tpu_custom_call.1} parent=87 // pred_check
          %p1789 = pneg %p365
        $region90: #{tpu_custom_call.1} parent=87 // pred_check_branch
          %1791 = sbr.rel (%p1789) target = $region92
        $region91: #{tpu_custom_call.1} parent=87 // pred_region
          %s1792 = sand.u32 %s350, 1
          %s1793 = scalar_lea.sflag [#allocation6], %s1792
          %s1794 = sand.u32 %s350, 1
          %s1795 = smul.addr %s1794, 8
          %s1796 = scalar_lea.vmem [#allocation5], %s1795
          %1797 = dma.done %s1793, 128
        $region92: #{tpu_custom_call.1} parent=87 // pred_fallthru
          _
      $region88: #{tpu_custom_call.1} parent=5 // pred_fallthru
        _
    $region6: #{tpu_custom_call.1} parent=1 // loop_footer
      %s27 = sadd.s32 1, %s23
    $region7: #{tpu_custom_call.1} parent=1 // loop_footer_branch
      %22 = sbr.rel target = $region3
    $region8: #{tpu_custom_call.1} parent=1 // loop_exit
      _
    %1798 = vsyncpa [#allocation6], 1
    %s1799 = scalar_lea.sflag [#allocation6], 1
    %1800 = vsyncpa %s1799, 1

// kernel: tpu_custom_call.1
$region0: #{tpu_custom_call.1}
  #allocation0 [shape = 'u32[]', space=smem, size = 0x4, offset = 0x4, fixed_abs, tag = 'smem constant byte address 0x4 - core index']
  #allocation1 [shape = 'u32[144,128]{1,0:T(1,128)}', space=vmem, size = 0x12000, scoped, tag = 'internal scratch']
  #allocation2 [shape = 'bf16[4,8,8]{2,1,0:T(8,128)(2,1)}', space=vmem, size = 0x2000, scoped, tag = 'scratch operand']
  #allocation3 [shape = 'bf16[4,8,8]{2,1,0:T(8,128)(2,1)}', space=vmem, size = 0x2000, scoped, tag = 'scratch operand']
  #allocation4 [shape = 'bf16[8,32]{1,0:T(8,128)(2,1)}', space=vmem, size = 0x800, scoped, tag = 'scratch operand']
  %s0 = inlined_call_operand.vmem [shape: f32[2,8,32], index: 0, kind: input, shape index: {}]
  %s1 = inlined_call_operand.vmem [shape: f32[1,32], index: 1, kind: input, shape index: {}]
  %s2 = inlined_call_operand.vmem [shape: f32[1,32], index: 2, kind: input, shape index: {}]
  %s3 = inlined_call_operand.vmem [shape: bf16[32,32], index: 3, kind: input, shape index: {}]
  %s4 = inlined_call_operand.vmem [shape: bf16[4,8,32], index: 4, kind: input, shape index: {}]
  %s5 = inlined_call_operand.vmem [shape: bf16[4,32,8], index: 5, kind: input, shape index: {}]
  %s6 = inlined_call_operand.vmem [shape: bf16[32,32], index: 6, kind: input, shape index: {}]
  %s7 = inlined_call_operand.vmem [shape: f32[1,32], index: 7, kind: input, shape index: {}]
  %s8 = inlined_call_operand.vmem [shape: f32[1,32], index: 8, kind: input, shape index: {}]
  %s9 = inlined_call_operand.vmem [shape: f32[1,32], index: 9, kind: input, shape index: {}]
  %s10 = inlined_call_operand.vmem [shape: bf16[32,64], index: 10, kind: input, shape index: {}]
  %s11 = inlined_call_operand.vmem [shape: f32[1,64], index: 11, kind: input, shape index: {}]
  %s12 = inlined_call_operand.vmem [shape: bf16[64,32], index: 12, kind: input, shape index: {}]
  %s13 = inlined_call_operand.vmem [shape: f32[1,32], index: 13, kind: input, shape index: {}]
  %s14 = inlined_call_operand.hbm [shape: f32[2,8,32], index: 14, kind: output, shape index: {}]
  %s15 = sld [smem:[#allocation0]]
  $region93: #{tpu_custom_call.1} parent=0
    _
  %s17 = ssub.s32 1, %s15
  %s18 = scalar_select 0, %s17, %s15
  $region1: #{tpu_custom_call.1} parent=0
    #allocation5 [shape = 'u8[8192]{0}', space=vmem, size = 0x2000, scoped, tag = 'output window, operand 0']
    #allocation6 [shape = 's32[2]{0}', space=sflag, size = 0x8, scoped, tag = 'scoped memory for tpu_custom_call.1']
    %19 = vsyncpa [#allocation6], 0
    %s20 = scalar_lea.sflag [#allocation6], 1
    %21 = vsyncpa %s20, 0
    loop: start=0, step=1, limit=4
    $region2: #{tpu_custom_call.1} parent=1 // loop_pre_header
      _
    $region3: #{tpu_custom_call.1} parent=1 // loop_header
      %s23 = sphi 0, %s27
      %p24 = scmp.ge.s32.totalorder %s23, 4
      %s30 = sphi 0, %s42
      %s31 = sphi 0, %s38
      %s32 = sphi 0, %s30
      %s33 = sphi 0, %s31
      %s34 = sphi 0, %s32
      %s35 = sphi 0, %s33
      %s45 = sphi 0, %s47
      %s48 = sphi 0, %s45
      %s49 = sphi 0, %s48
      %s65 = sphi 0, %s49
      %s69 = sphi 0, %s69
      %s71 = sphi 0, %s69
      %s72 = sphi 0, %s71
      %s86 = sphi 0, %s72
      %s90 = sphi 0, %s90
      %s92 = sphi 0, %s90
      %s93 = sphi 0, %s92
      %s107 = sphi 0, %s93
      %s111 = sphi 0, %s111
      %s113 = sphi 0, %s111
      %s114 = sphi 0, %s113
      %s128 = sphi 0, %s114
      %s132 = sphi 0, %s132
      %s134 = sphi 0, %s132
      %s135 = sphi 0, %s134
      %s149 = sphi 0, %s135
      %s153 = sphi 0, %s153
      %s155 = sphi 0, %s153
      %s156 = sphi 0, %s155
      %s170 = sphi 0, %s156
      %s174 = sphi 0, %s174
      %s176 = sphi 0, %s174
      %s177 = sphi 0, %s176
      %s191 = sphi 0, %s177
      %s195 = sphi 0, %s195
      %s197 = sphi 0, %s195
      %s198 = sphi 0, %s197
      %s212 = sphi 0, %s198
      %s216 = sphi 0, %s216
      %s218 = sphi 0, %s216
      %s219 = sphi 0, %s218
      %s233 = sphi 0, %s219
      %s237 = sphi 0, %s237
      %s239 = sphi 0, %s237
      %s240 = sphi 0, %s239
      %s254 = sphi 0, %s240
      %s258 = sphi 0, %s258
      %s260 = sphi 0, %s258
      %s261 = sphi 0, %s260
      %s275 = sphi 0, %s261
      %s279 = sphi 0, %s279
      %s281 = sphi 0, %s279
      %s282 = sphi 0, %s281
      %s296 = sphi 0, %s282
      %s300 = sphi 0, %s300
      %s302 = sphi 0, %s300
      %s303 = sphi 0, %s302
      %s317 = sphi 0, %s303
      %s321 = sphi 0, %s321
      %s323 = sphi 0, %s321
      %s324 = sphi 0, %s323
      %s338 = sphi 0, %s324
      %s346 = sphi 0, %s348
      %s349 = sphi 0, %s346
      %s350 = sphi 0, %s349
      %s366 = sphi 0, %s350
    $region4: #{tpu_custom_call.1} parent=1 // loop_header_branch
      %26 = sbr.rel (%p24) target = $region8
    $region5: #{tpu_custom_call.1} parent=1 // loop_body
      %s28 = ssub.s32 %s23, 1
      %s29 = ssub.s32 %s23, 2
      %s36 = sadd.s32 1, %s31
      %p37 = scmp.ge.s32.totalorder %s36, 1
      %s38 = scalar_select %p37, 0, %s36
      %s39 = sadd.s32 1, %s30
      %s40 = scalar_select %p37, %s39, %s30
      %p41 = scmp.ge.s32.totalorder %s40, 2
      %s42 = scalar_select %p41, 0, %s40
      %s43 = ssub.s32 %s30, %s42
      %p44 = scmp.eq.s32.totalorder %s43, 0
      %s46 = sadd.s32 %s45, 1
      %s47 = scalar_select %p44, %s45, %s46
      %p50 = pneg %p44
      %p51 = scmp.eq.s32.totalorder %s23, 1
      %p52 = por %p50, %p51
      %p53 = scmp.ne.s32.totalorder %s45, %s48
      %p54 = scmp.eq.s32.totalorder %s23, 0
      %p55 = por %p53, %p54
      %p56 = scmp.ne.s32.totalorder %s45, %s48
      %p57 = scmp.eq.s32.totalorder %s28, 1
      %p58 = por %p56, %p57
      %p59 = scmp.ne.s32.totalorder %s48, %s49
      %p60 = scmp.eq.s32.totalorder %s28, 0
      %p61 = por %p59, %p60
      %p62 = scmp.ne.s32.totalorder %s48, %s49
      %p63 = scmp.eq.s32.totalorder %s29, 1
      %p64 = por %p62, %p63
      %p66 = scmp.ne.s32.totalorder %s49, %s65
      %p67 = scmp.eq.s32.totalorder %s29, 0
      %p68 = por %p66, %p67
      %s70 = sadd.s32 %s69, 1
      %p73 = scmp.eq.s32.totalorder %s23, 1
      %p74 = scmp.ne.s32.totalorder %s69, %s71
      %p75 = scmp.eq.s32.totalorder %s23, 0
      %p76 = por %p74, %p75
      %p77 = scmp.ne.s32.totalorder %s69, %s71
      %p78 = scmp.eq.s32.totalorder %s28, 1
      %p79 = por %p77, %p78
      %p80 = scmp.ne.s32.totalorder %s71, %s72
      %p81 = scmp.eq.s32.totalorder %s28, 0
      %p82 = por %p80, %p81
      %p83 = scmp.ne.s32.totalorder %s71, %s72
      %p84 = scmp.eq.s32.totalorder %s29, 1
      %p85 = por %p83, %p84
      %p87 = scmp.ne.s32.totalorder %s72, %s86
      %p88 = scmp.eq.s32.totalorder %s29, 0
      %p89 = por %p87, %p88
      %s91 = sadd.s32 %s90, 1
      %p94 = scmp.eq.s32.totalorder %s23, 1
      %p95 = scmp.ne.s32.totalorder %s90, %s92
      %p96 = scmp.eq.s32.totalorder %s23, 0
      %p97 = por %p95, %p96
      %p98 = scmp.ne.s32.totalorder %s90, %s92
      %p99 = scmp.eq.s32.totalorder %s28, 1
      %p100 = por %p98, %p99
      %p101 = scmp.ne.s32.totalorder %s92, %s93
      %p102 = scmp.eq.s32.totalorder %s28, 0
      %p103 = por %p101, %p102
      %p104 = scmp.ne.s32.totalorder %s92, %s93
      %p105 = scmp.eq.s32.totalorder %s29, 1
      %p106 = por %p104, %p105
      %p108 = scmp.ne.s32.totalorder %s93, %s107
      %p109 = scmp.eq.s32.totalorder %s29, 0
      %p110 = por %p108, %p109
      %s112 = sadd.s32 %s111, 1
      %p115 = scmp.eq.s32.totalorder %s23, 1
      %p116 = scmp.ne.s32.totalorder %s111, %s113
      %p117 = scmp.eq.s32.totalorder %s23, 0
      %p118 = por %p116, %p117
      %p119 = scmp.ne.s32.totalorder %s111, %s113
      %p120 = scmp.eq.s32.totalorder %s28, 1
      %p121 = por %p119, %p120
      %p122 = scmp.ne.s32.totalorder %s113, %s114
      %p123 = scmp.eq.s32.totalorder %s28, 0
      %p124 = por %p122, %p123
      %p125 = scmp.ne.s32.totalorder %s113, %s114
      %p126 = scmp.eq.s32.totalorder %s29, 1
      %p127 = por %p125, %p126
      %p129 = scmp.ne.s32.totalorder %s114, %s128
      %p130 = scmp.eq.s32.totalorder %s29, 0
      %p131 = por %p129, %p130
      %s133 = sadd.s32 %s132, 1
      %p136 = scmp.eq.s32.totalorder %s23, 1
      %p137 = scmp.ne.s32.totalorder %s132, %s134
      %p138 = scmp.eq.s32.totalorder %s23, 0
      %p139 = por %p137, %p138
      %p140 = scmp.ne.s32.totalorder %s132, %s134
      %p141 = scmp.eq.s32.totalorder %s28, 1
      %p142 = por %p140, %p141
      %p143 = scmp.ne.s32.totalorder %s134, %s135
      %p144 = scmp.eq.s32.totalorder %s28, 0
      %p145 = por %p143, %p144
      %p146 = scmp.ne.s32.totalorder %s134, %s135
      %p147 = scmp.eq.s32.totalorder %s29, 1
      %p148 = por %p146, %p147
      %p150 = scmp.ne.s32.totalorder %s135, %s149
      %p151 = scmp.eq.s32.totalorder %s29, 0
      %p152 = por %p150, %p151
      %s154 = sadd.s32 %s153, 1
      %p157 = scmp.eq.s32.totalorder %s23, 1
      %p158 = scmp.ne.s32.totalorder %s153, %s155
      %p159 = scmp.eq.s32.totalorder %s23, 0
      %p160 = por %p158, %p159
      %p161 = scmp.ne.s32.totalorder %s153, %s155
      %p162 = scmp.eq.s32.totalorder %s28, 1
      %p163 = por %p161, %p162
      %p164 = scmp.ne.s32.totalorder %s155, %s156
      %p165 = scmp.eq.s32.totalorder %s28, 0
      %p166 = por %p164, %p165
      %p167 = scmp.ne.s32.totalorder %s155, %s156
      %p168 = scmp.eq.s32.totalorder %s29, 1
      %p169 = por %p167, %p168
      %p171 = scmp.ne.s32.totalorder %s156, %s170
      %p172 = scmp.eq.s32.totalorder %s29, 0
      %p173 = por %p171, %p172
      %s175 = sadd.s32 %s174, 1
      %p178 = scmp.eq.s32.totalorder %s23, 1
      %p179 = scmp.ne.s32.totalorder %s174, %s176
      %p180 = scmp.eq.s32.totalorder %s23, 0
      %p181 = por %p179, %p180
      %p182 = scmp.ne.s32.totalorder %s174, %s176
      %p183 = scmp.eq.s32.totalorder %s28, 1
      %p184 = por %p182, %p183
      %p185 = scmp.ne.s32.totalorder %s176, %s177
      %p186 = scmp.eq.s32.totalorder %s28, 0
      %p187 = por %p185, %p186
      %p188 = scmp.ne.s32.totalorder %s176, %s177
      %p189 = scmp.eq.s32.totalorder %s29, 1
      %p190 = por %p188, %p189
      %p192 = scmp.ne.s32.totalorder %s177, %s191
      %p193 = scmp.eq.s32.totalorder %s29, 0
      %p194 = por %p192, %p193
      %s196 = sadd.s32 %s195, 1
      %p199 = scmp.eq.s32.totalorder %s23, 1
      %p200 = scmp.ne.s32.totalorder %s195, %s197
      %p201 = scmp.eq.s32.totalorder %s23, 0
      %p202 = por %p200, %p201
      %p203 = scmp.ne.s32.totalorder %s195, %s197
      %p204 = scmp.eq.s32.totalorder %s28, 1
      %p205 = por %p203, %p204
      %p206 = scmp.ne.s32.totalorder %s197, %s198
      %p207 = scmp.eq.s32.totalorder %s28, 0
      %p208 = por %p206, %p207
      %p209 = scmp.ne.s32.totalorder %s197, %s198
      %p210 = scmp.eq.s32.totalorder %s29, 1
      %p211 = por %p209, %p210
      %p213 = scmp.ne.s32.totalorder %s198, %s212
      %p214 = scmp.eq.s32.totalorder %s29, 0
      %p215 = por %p213, %p214
      %s217 = sadd.s32 %s216, 1
      %p220 = scmp.eq.s32.totalorder %s23, 1
      %p221 = scmp.ne.s32.totalorder %s216, %s218
      %p222 = scmp.eq.s32.totalorder %s23, 0
      %p223 = por %p221, %p222
      %p224 = scmp.ne.s32.totalorder %s216, %s218
      %p225 = scmp.eq.s32.totalorder %s28, 1
      %p226 = por %p224, %p225
      %p227 = scmp.ne.s32.totalorder %s218, %s219
      %p228 = scmp.eq.s32.totalorder %s28, 0
      %p229 = por %p227, %p228
      %p230 = scmp.ne.s32.totalorder %s218, %s219
      %p231 = scmp.eq.s32.totalorder %s29, 1
      %p232 = por %p230, %p231
      %p234 = scmp.ne.s32.totalorder %s219, %s233
      %p235 = scmp.eq.s32.totalorder %s29, 0
      %p236 = por %p234, %p235
      %s238 = sadd.s32 %s237, 1
      %p241 = scmp.eq.s32.totalorder %s23, 1
      %p242 = scmp.ne.s32.totalorder %s237, %s239
      %p243 = scmp.eq.s32.totalorder %s23, 0
      %p244 = por %p242, %p243
      %p245 = scmp.ne.s32.totalorder %s237, %s239
      %p246 = scmp.eq.s32.totalorder %s28, 1
      %p247 = por %p245, %p246
      %p248 = scmp.ne.s32.totalorder %s239, %s240
      %p249 = scmp.eq.s32.totalorder %s28, 0
      %p250 = por %p248, %p249
      %p251 = scmp.ne.s32.totalorder %s239, %s240
      %p252 = scmp.eq.s32.totalorder %s29, 1
      %p253 = por %p251, %p252
      %p255 = scmp.ne.s32.totalorder %s240, %s254
      %p256 = scmp.eq.s32.totalorder %s29, 0
      %p257 = por %p255, %p256
      %s259 = sadd.s32 %s258, 1
      %p262 = scmp.eq.s32.totalorder %s23, 1
      %p263 = scmp.ne.s32.totalorder %s258, %s260
      %p264 = scmp.eq.s32.totalorder %s23, 0
      %p265 = por %p263, %p264
      %p266 = scmp.ne.s32.totalorder %s258, %s260
      %p267 = scmp.eq.s32.totalorder %s28, 1
      %p268 = por %p266, %p267
      %p269 = scmp.ne.s32.totalorder %s260, %s261
      %p270 = scmp.eq.s32.totalorder %s28, 0
      %p271 = por %p269, %p270
      %p272 = scmp.ne.s32.totalorder %s260, %s261
      %p273 = scmp.eq.s32.totalorder %s29, 1
      %p274 = por %p272, %p273
      %p276 = scmp.ne.s32.totalorder %s261, %s275
      %p277 = scmp.eq.s32.totalorder %s29, 0
      %p278 = por %p276, %p277
      %s280 = sadd.s32 %s279, 1
      %p283 = scmp.eq.s32.totalorder %s23, 1
      %p284 = scmp.ne.s32.totalorder %s279, %s281
      %p285 = scmp.eq.s32.totalorder %s23, 0
      %p286 = por %p284, %p285
      %p287 = scmp.ne.s32.totalorder %s279, %s281
      %p288 = scmp.eq.s32.totalorder %s28, 1
      %p289 = por %p287, %p288
      %p290 = scmp.ne.s32.totalorder %s281, %s282
      %p291 = scmp.eq.s32.totalorder %s28, 0
      %p292 = por %p290, %p291
      %p293 = scmp.ne.s32.totalorder %s281, %s282
      %p294 = scmp.eq.s32.totalorder %s29, 1
      %p295 = por %p293, %p294
      %p297 = scmp.ne.s32.totalorder %s282, %s296
      %p298 = scmp.eq.s32.totalorder %s29, 0
      %p299 = por %p297, %p298
      %s301 = sadd.s32 %s300, 1
      %p304 = scmp.eq.s32.totalorder %s23, 1
      %p305 = scmp.ne.s32.totalorder %s300, %s302
      %p306 = scmp.eq.s32.totalorder %s23, 0
      %p307 = por %p305, %p306
      %p308 = scmp.ne.s32.totalorder %s300, %s302
      %p309 = scmp.eq.s32.totalorder %s28, 1
      %p310 = por %p308, %p309
      %p311 = scmp.ne.s32.totalorder %s302, %s303
      %p312 = scmp.eq.s32.totalorder %s28, 0
      %p313 = por %p311, %p312
      %p314 = scmp.ne.s32.totalorder %s302, %s303
      %p315 = scmp.eq.s32.totalorder %s29, 1
      %p316 = por %p314, %p315
      %p318 = scmp.ne.s32.totalorder %s303, %s317
      %p319 = scmp.eq.s32.totalorder %s29, 0
      %p320 = por %p318, %p319
      %s322 = sadd.s32 %s321, 1
      %p325 = scmp.eq.s32.totalorder %s23, 1
      %p326 = scmp.ne.s32.totalorder %s321, %s323
      %p327 = scmp.eq.s32.totalorder %s23, 0
      %p328 = por %p326, %p327
      %p329 = scmp.ne.s32.totalorder %s321, %s323
      %p330 = scmp.eq.s32.totalorder %s28, 1
      %p331 = por %p329, %p330
      %p332 = scmp.ne.s32.totalorder %s323, %s324
      %p333 = scmp.eq.s32.totalorder %s28, 0
      %p334 = por %p332, %p333
      %p335 = scmp.ne.s32.totalorder %s323, %s324
      %p336 = scmp.eq.s32.totalorder %s29, 1
      %p337 = por %p335, %p336
      %p339 = scmp.ne.s32.totalorder %s324, %s338
      %p340 = scmp.eq.s32.totalorder %s29, 0
      %p341 = por %p339, %p340
      %s342 = ssub.s32 %s30, %s42
      %s343 = ssub.s32 %s31, %s38
      %s344 = sor.u32 %s342, %s343
      %p345 = scmp.eq.s32.totalorder %s344, 0
      %s347 = sadd.s32 %s346, 1
      %s348 = scalar_select %p345, %s346, %s347
      %p351 = pneg %p345
      %p352 = scmp.eq.s32.totalorder %s23, 1
      %p353 = por %p351, %p352
      %p354 = scmp.ne.s32.totalorder %s346, %s349
      %p355 = scmp.eq.s32.totalorder %s23, 0
      %p356 = por %p354, %p355
      %p357 = scmp.ne.s32.totalorder %s346, %s349
      %p358 = scmp.eq.s32.totalorder %s28, 1
      %p359 = por %p357, %p358
      %p360 = scmp.ne.s32.totalorder %s349, %s350
      %p361 = scmp.eq.s32.totalorder %s28, 0
      %p362 = por %p360, %p361
      %p363 = scmp.ne.s32.totalorder %s349, %s350
      %p364 = scmp.eq.s32.totalorder %s29, 1
      %p365 = por %p363, %p364
      %p367 = scmp.ne.s32.totalorder %s350, %s366
      %p368 = scmp.eq.s32.totalorder %s29, 0
      %p369 = por %p367, %p368
      %p370 = scmp.le.s32.totalorder 1, %s23
      %p371 = scmp.lt.s32.totalorder %s23, 3
      %p372 = pnand %p370, %p371
      %p373 = pneg %p372
      // Predicated region
      $region9: #{tpu_custom_call.1} parent=5 // pred_check
        _
      $region10: #{tpu_custom_call.1} parent=5 // pred_check_branch
        %375 = sbr.rel (%p372) target = $region12
      $region11: #{tpu_custom_call.1} parent=5 // pred_region
        %s376 = ssub.s32 %s23, 1
        // Predicated region
        $region13: #{tpu_custom_call.1} parent=11 // pred_check
          %p377 = pneg %p82
        $region14: #{tpu_custom_call.1} parent=11 // pred_check_branch
          %379 = sbr.rel (%p377) target = $region16
        $region15: #{tpu_custom_call.1} parent=11 // pred_region
          _
        $region16: #{tpu_custom_call.1} parent=11 // pred_fallthru
          _
        // Predicated region
        $region17: #{tpu_custom_call.1} parent=11 // pred_check
          %p380 = pneg %p103
        $region18: #{tpu_custom_call.1} parent=11 // pred_check_branch
          %382 = sbr.rel (%p380) target = $region20
        $region19: #{tpu_custom_call.1} parent=11 // pred_region
          _
        $region20: #{tpu_custom_call.1} parent=11 // pred_fallthru
          _
        // Predicated region
        $region21: #{tpu_custom_call.1} parent=11 // pred_check
          %p383 = pneg %p124
        $region22: #{tpu_custom_call.1} parent=11 // pred_check_branch
          %385 = sbr.rel (%p383) target = $region24
        $region23: #{tpu_custom_call.1} parent=11 // pred_region
          _
        $region24: #{tpu_custom_call.1} parent=11 // pred_fallthru
          _
        // Predicated region
        $region25: #{tpu_custom_call.1} parent=11 // pred_check
          %p386 = pneg %p145
        $region26: #{tpu_custom_call.1} parent=11 // pred_check_branch
          %388 = sbr.rel (%p386) target = $region28
        $region27: #{tpu_custom_call.1} parent=11 // pred_region
          _
        $region28: #{tpu_custom_call.1} parent=11 // pred_fallthru
          _
        // Predicated region
        $region29: #{tpu_custom_call.1} parent=11 // pred_check
          %p389 = pneg %p166
        $region30: #{tpu_custom_call.1} parent=11 // pred_check_branch
          %391 = sbr.rel (%p389) target = $region32
        $region31: #{tpu_custom_call.1} parent=11 // pred_region
          _
        $region32: #{tpu_custom_call.1} parent=11 // pred_fallthru
          _
        // Predicated region
        $region33: #{tpu_custom_call.1} parent=11 // pred_check
          %p392 = pneg %p187
        $region34: #{tpu_custom_call.1} parent=11 // pred_check_branch
          %394 = sbr.rel (%p392) target = $region36
        $region35: #{tpu_custom_call.1} parent=11 // pred_region
          _
        $region36: #{tpu_custom_call.1} parent=11 // pred_fallthru
          _
        // Predicated region
        $region37: #{tpu_custom_call.1} parent=11 // pred_check
          %p395 = pneg %p208
        $region38: #{tpu_custom_call.1} parent=11 // pred_check_branch
          %397 = sbr.rel (%p395) target = $region40
        $region39: #{tpu_custom_call.1} parent=11 // pred_region
          _
        $region40: #{tpu_custom_call.1} parent=11 // pred_fallthru
          _
        // Predicated region
        $region41: #{tpu_custom_call.1} parent=11 // pred_check
          %p398 = pneg %p229
        $region42: #{tpu_custom_call.1} parent=11 // pred_check_branch
          %400 = sbr.rel (%p398) target = $region44
        $region43: #{tpu_custom_call.1} parent=11 // pred_region
          _
        $region44: #{tpu_custom_call.1} parent=11 // pred_fallthru
          _
        // Predicated region
        $region45: #{tpu_custom_call.1} parent=11 // pred_check
          %p401 = pneg %p250
        $region46: #{tpu_custom_call.1} parent=11 // pred_check_branch
          %403 = sbr.rel (%p401) target = $region48
        $region47: #{tpu_custom_call.1} parent=11 // pred_region
          _
        $region48: #{tpu_custom_call.1} parent=11 // pred_fallthru
          _
        // Predicated region
        $region49: #{tpu_custom_call.1} parent=11 // pred_check
          %p404 = pneg %p271
        $region50: #{tpu_custom_call.1} parent=11 // pred_check_branch
          %406 = sbr.rel (%p404) target = $region52
        $region51: #{tpu_custom_call.1} parent=11 // pred_region
          _
        $region52: #{tpu_custom_call.1} parent=11 // pred_fallthru
          _
        // Predicated region
        $region53: #{tpu_custom_call.1} parent=11 // pred_check
          %p407 = pneg %p292
        $region54: #{tpu_custom_call.1} parent=11 // pred_check_branch
          %409 = sbr.rel (%p407) target = $region56
        $region55: #{tpu_custom_call.1} parent=11 // pred_region
          _
        $region56: #{tpu_custom_call.1} parent=11 // pred_fallthru
          _
        // Predicated region
        $region57: #{tpu_custom_call.1} parent=11 // pred_check
          %p410 = pneg %p313
        $region58: #{tpu_custom_call.1} parent=11 // pred_check_branch
          %412 = sbr.rel (%p410) target = $region60
        $region59: #{tpu_custom_call.1} parent=11 // pred_region
          _
        $region60: #{tpu_custom_call.1} parent=11 // pred_fallthru
          _
        // Predicated region
        $region61: #{tpu_custom_call.1} parent=11 // pred_check
          %p413 = pneg %p334
        $region62: #{tpu_custom_call.1} parent=11 // pred_check_branch
          %415 = sbr.rel (%p413) target = $region64
        $region63: #{tpu_custom_call.1} parent=11 // pred_region
          _
        $region64: #{tpu_custom_call.1} parent=11 // pred_fallthru
          _
      $region12: #{tpu_custom_call.1} parent=5 // pred_fallthru
        _
      %p416 = scmp.lt.s32.totalorder %s23, 2
      // Predicated region
      $region65: #{tpu_custom_call.1} parent=5 // pred_check
        %p417 = pneg %p416
      $region66: #{tpu_custom_call.1} parent=5 // pred_check_branch
        %419 = sbr.rel (%p417) target = $region68
      $region67: #{tpu_custom_call.1} parent=5 // pred_region
        // Predicated region
        $region69: #{tpu_custom_call.1} parent=67 // pred_check
          %p420 = pneg %p55
        $region70: #{tpu_custom_call.1} parent=67 // pred_check_branch
          %422 = sbr.rel (%p420) target = $region72
        $region71: #{tpu_custom_call.1} parent=67 // pred_region
          %p423 = scmp.lt.s32.totalorder %s30, 1
          %s424 = scalar_select %p423, %s30, 1
          %s425 = smul.addr %s424, 8
          %s426 = scalar_lea.vmem %s0, %s425
        $region72: #{tpu_custom_call.1} parent=67 // pred_fallthru
          _
      $region68: #{tpu_custom_call.1} parent=5 // pred_fallthru
        _
      %p427 = scmp.le.s32.totalorder 1, %s23
      %p428 = scmp.lt.s32.totalorder %s23, 3
      %p429 = pnand %p427, %p428
      %p430 = pneg %p429
      // Predicated region
      $region73: #{tpu_custom_call.1} parent=5 // pred_check
        _
      $region74: #{tpu_custom_call.1} parent=5 // pred_check_branch
        %432 = sbr.rel (%p429) target = $region76
      $region75: #{tpu_custom_call.1} parent=5 // pred_region
        %s433 = ssub.s32 %s23, 1
        %p434 = scmp.lt.s32.totalorder %s32, 1
        %s435 = scalar_select %p434, %s32, 1
        %s436 = smul.addr %s435, 8
        %s437 = scalar_lea.vmem %s0, %s436
        %p438 = pneg %p61
        %p439 = pneg %p58
        %p440 = pneg %p82
        %p441 = pneg %p79
        %p442 = pneg %p103
        %p443 = pneg %p100
        %p444 = pneg %p124
        %p445 = pneg %p121
        %p446 = pneg %p145
        %p447 = pneg %p142
        %p448 = pneg %p166
        %p449 = pneg %p163
        %p450 = pneg %p187
        %p451 = pneg %p184
        %p452 = pneg %p208
        %p453 = pneg %p205
        %p454 = pneg %p229
        %p455 = pneg %p226
        %p456 = pneg %p250
        %p457 = pneg %p247
        %p458 = pneg %p271
        %p459 = pneg %p268
        %p460 = pneg %p292
        %p461 = pneg %p289
        %p462 = pneg %p313
        %p463 = pneg %p310
        %p464 = pneg %p334
        %p465 = pneg %p331
        %p466 = pneg %p362
        %p467 = pneg %p359
        %s468 = sand.u32 %s349, 1
        %s469 = scalar_lea.sflag [#allocation6], %s468
        %s470 = sand.u32 %s349, 1
        %s471 = smul.addr %s470, 8
        %s472 = scalar_lea.vmem [#allocation5], %s471
        %p473 = scmp.lt.s32.totalorder %s32, 1
        %s474 = scalar_select %p473, %s32, 1
        %s475 = smul.addr %s474, 8
        %s476 = scalar_lea.vmem %s0, %s475
        %v478 = vld [vmem:[%s1] sm:$0x1]
        %v479 = vld [vmem:[%s2] sm:$0x1]
        %v480 = vld [vmem:[%s8] sm:$0x1]
        %v481 = vld [vmem:[%s9] sm:$0x1]
        %v482 = vld [vmem:[%s7] sm:$0x1]
        %v483 = vld [vmem:[%s11] sm:$0x1]
        %v484 = vld [vmem:[%s13] sm:$0x1]
        %p485 = scmp.eq.s32.totalorder %s33, 0
        // Predicated region
        $region77: #{tpu_custom_call.1} parent=75 // pred_check
          %p486 = pneg %p485
        $region78: #{tpu_custom_call.1} parent=75 // pred_check_branch
          %488 = sbr.rel (%p486) target = $region80
        $region79: #{tpu_custom_call.1} parent=75 // pred_region
          %v489 = vld [vmem:[%s476] sm:$0xff]
          %vm490 = vcmask 261120
          %v491 = vsel %vm490, %v489, 0.0
          %492 = vadd.xlane.f32.xlu0 %v491
          %v493 = vpop.xlane.xlu0 %492
          %v494 = vrcp.pop 32.0
          %v495 = vmul.f32 %v493, %v494
          %v496 = vsub.f32 %v489, %v495
          %v497 = vmul.f32 %v496, %v496
          %v498 = vsel %vm490, %v497, 0.0
          %499 = vadd.xlane.f32.xlu0 %v498
          %v500 = vpop.xlane.xlu0 %499
          %v501 = vmul.f32 %v500, %v494
          %v502 = vadd.f32 %v501, 1e-05
          %v503 = vrsqrt.pop %v502
          %v504 = vmul.f32 %v496, %v503
          %v506 = vlaneseq
          %v507 = vshrl.u32 %v506, 7
          %v508 = vsub.s32 0, %v507
          %v509 = vrot.slane %v478, %v508
          %v511 = vmul.f32 %v504, %v509
          %v513 = vlaneseq
          %v514 = vshrl.u32 %v513, 7
          %v515 = vsub.s32 0, %v514
          %v516 = vrot.slane %v479, %v515
          %v518 = vadd.f32 %v511, %v516
          %v519 = vpack.c.bf16 %v518, %v518
          %v520 = vld [vmem:[%s4] sm:$0xf]
          %v522 = vsel %vm490, %v520, 0
          %v525 = vsel %vm490, %v519, 0
          %527 = vmatprep.subr.bf16.mxu0 0
          %528 = vmatpush1.bf16.xpose.msra.mxu0 %v525
          %529 = vmatprep.subr.bf16.mxu0 0
          %530 = vmatpush1.bf16.xpose.msra.mxu0 0
          %531 = vmatprep.subr.bf16.mxu0 0
          %532 = vmatpush1.bf16.xpose.msra.mxu0 0
          %533 = vmatprep.subr.bf16.mxu0 0
          %534 = vmatpush1.bf16.xpose.msra.mxu0 0
          %535 = vmatprep.subr.bf16.mxu0 0
          %536 = vmatpush1.bf16.xpose.msra.mxu0 0
          %537 = vmatprep.subr.bf16.mxu0 0
          %538 = vmatpush1.bf16.xpose.msra.mxu0 0
          %539 = vmatprep.subr.bf16.mxu0 0
          %540 = vmatpush1.bf16.xpose.msra.mxu0 0
          %541 = vmatprep.subr.bf16.mxu0 0
          %542 = vmatpush1.bf16.xpose.msra.mxu0 0
          %543 = vmatprep.subr.bf16.mxu0 0
          %544 = vmatpush1.bf16.xpose.msra.mxu0 0
          %545 = vmatprep.subr.bf16.mxu0 0
          %546 = vmatpush1.bf16.xpose.msra.mxu0 0
          %547 = vmatprep.subr.bf16.mxu0 0
          %548 = vmatpush1.bf16.xpose.msra.mxu0 0
          %549 = vmatprep.subr.bf16.mxu0 0
          %550 = vmatpush1.bf16.xpose.msra.mxu0 0
          %551 = vmatprep.subr.bf16.mxu0 0
          %552 = vmatpush1.bf16.xpose.msra.mxu0 0
          %553 = vmatprep.subr.bf16.mxu0 0
          %554 = vmatpush1.bf16.xpose.msra.mxu0 0
          %555 = vmatprep.subr.bf16.mxu0 0
          %556 = vmatpush1.bf16.xpose.msra.mxu0 0
          %557 = vmatprep.subr.bf16.mxu0 0
          %558 = vmatpush1.bf16.xpose.msra.mxu0 0
          %559 = vmatprep.mubr.bf16.mxu0 0
          %560 = vmatmul.mubr.bf16.gmra.mrb[0].mxu0 %v522
          %v561 = vpop.f32.mrb[0].mxu0
          %v562 = vadd.f32 0.0, %v561
          %v563 = vpop.f32.mrb[0].mxu0
          %v564 = vpop.f32.mrb[0].mxu0
          %v565 = vpop.f32.mrb[0].mxu0
          %566 = vdwg.mxu0
          %v567 = vpack.c.bf16 %v562, %v562
          %vm568 = vcmask 60416
          %569 = vst.msk [vmem:[#allocation2] sm:$0xf] %vm568, %v567
          %v570 = vld [vmem:[%s5] sm:$0xf]
          %v571 = vld [vmem:[%s5 + $0x4] sm:$0xf]
          %v572 = vld [vmem:[%s5 + $0x8] sm:$0xf]
          %v573 = vld [vmem:[%s5 + $0xc] sm:$0xf]
          %v578 = vunpack.c.l.b16 %v570
          %v579 = vunpack.c.l.b16 %v571
          %v580 = vunpack.c.l.b16 %v572
          %v581 = vunpack.c.l.b16 %v573
          %v582 = vpack.c.b16 %v579, %v578
          %v583 = vpack.c.b16 %v581, %v580
          %586 = vmatprep.subr.bf16.mxu0 0
          %587 = vmatpush1.bf16.msra.mxu0 %v582
          %588 = vmatprep.subr.bf16.mxu0 0
          %589 = vmatpush1.bf16.msra.mxu0 %v583
          %590 = vmatprep.subr.bf16.mxu0 0
          %591 = vmatpush1.bf16.msra.mxu0 0
          %592 = vmatprep.subr.bf16.mxu0 0
          %593 = vmatpush1.bf16.msra.mxu0 0
          %594 = vmatprep.subr.bf16.mxu0 0
          %595 = vmatpush1.bf16.msra.mxu0 0
          %596 = vmatprep.subr.bf16.mxu0 0
          %597 = vmatpush1.bf16.msra.mxu0 0
          %598 = vmatprep.subr.bf16.mxu0 0
          %599 = vmatpush1.bf16.msra.mxu0 0
          %600 = vmatprep.subr.bf16.mxu0 0
          %601 = vmatpush1.bf16.msra.mxu0 0
          %602 = vmatprep.subr.bf16.mxu0 0
          %603 = vmatpush1.bf16.msra.mxu0 0
          %604 = vmatprep.subr.bf16.mxu0 0
          %605 = vmatpush1.bf16.msra.mxu0 0
          %606 = vmatprep.subr.bf16.mxu0 0
          %607 = vmatpush1.bf16.msra.mxu0 0
          %608 = vmatprep.subr.bf16.mxu0 0
          %609 = vmatpush1.bf16.msra.mxu0 0
          %610 = vmatprep.subr.bf16.mxu0 0
          %611 = vmatpush1.bf16.msra.mxu0 0
          %612 = vmatprep.subr.bf16.mxu0 0
          %613 = vmatpush1.bf16.msra.mxu0 0
          %614 = vmatprep.subr.bf16.mxu0 0
          %615 = vmatpush1.bf16.msra.mxu0 0
          %616 = vmatprep.subr.bf16.mxu0 0
          %617 = vmatpush1.bf16.msra.mxu0 0
          %618 = vmatprep.mubr.bf16.mxu0 0
          %619 = vmatmul.mubr.bf16.gmra.mrb[0].mxu0 %v525
          %v620 = vpop.f32.mrb[0].mxu0
          %v621 = vadd.f32 0.0, %v620
          %v622 = vpop.f32.mrb[0].mxu0
          %v623 = vpop.f32.mrb[0].mxu0
          %v624 = vpop.f32.mrb[0].mxu0
          %625 = vdwg.mxu0
          %v626 = vpack.c.bf16 %v621, %v621
          %627 = vst.msk [vmem:[#allocation3] sm:$0xf] %vm568, %v626
          %s628 = scalar_lea.vmem %s4, 4
          %v629 = vld [vmem:[%s628] sm:$0xf]
          %v631 = vsel %vm490, %v629, 0
          %633 = vmatprep.subr.bf16.mxu0 0
          %634 = vmatpush1.bf16.xpose.msra.mxu0 %v525
          %635 = vmatprep.subr.bf16.mxu0 0
          %636 = vmatpush1.bf16.xpose.msra.mxu0 0
          %637 = vmatprep.subr.bf16.mxu0 0
          %638 = vmatpush1.bf16.xpose.msra.mxu0 0
          %639 = vmatprep.subr.bf16.mxu0 0
          %640 = vmatpush1.bf16.xpose.msra.mxu0 0
          %641 = vmatprep.subr.bf16.mxu0 0
          %642 = vmatpush1.bf16.xpose.msra.mxu0 0
          %643 = vmatprep.subr.bf16.mxu0 0
          %644 = vmatpush1.bf16.xpose.msra.mxu0 0
          %645 = vmatprep.subr.bf16.mxu0 0
          %646 = vmatpush1.bf16.xpose.msra.mxu0 0
          %647 = vmatprep.subr.bf16.mxu0 0
          %648 = vmatpush1.bf16.xpose.msra.mxu0 0
          %649 = vmatprep.subr.bf16.mxu0 0
          %650 = vmatpush1.bf16.xpose.msra.mxu0 0
          %651 = vmatprep.subr.bf16.mxu0 0
          %652 = vmatpush1.bf16.xpose.msra.mxu0 0
          %653 = vmatprep.subr.bf16.mxu0 0
          %654 = vmatpush1.bf16.xpose.msra.mxu0 0
          %655 = vmatprep.subr.bf16.mxu0 0
          %656 = vmatpush1.bf16.xpose.msra.mxu0 0
          %657 = vmatprep.subr.bf16.mxu0 0
          %658 = vmatpush1.bf16.xpose.msra.mxu0 0
          %659 = vmatprep.subr.bf16.mxu0 0
          %660 = vmatpush1.bf16.xpose.msra.mxu0 0
          %661 = vmatprep.subr.bf16.mxu0 0
          %662 = vmatpush1.bf16.xpose.msra.mxu0 0
          %663 = vmatprep.subr.bf16.mxu0 0
          %664 = vmatpush1.bf16.xpose.msra.mxu0 0
          %665 = vmatprep.mubr.bf16.mxu0 0
          %666 = vmatmul.mubr.bf16.gmra.mrb[0].mxu0 %v631
          %v667 = vpop.f32.mrb[0].mxu0
          %v668 = vadd.f32 0.0, %v667
          %v669 = vpop.f32.mrb[0].mxu0
          %v670 = vpop.f32.mrb[0].mxu0
          %v671 = vpop.f32.mrb[0].mxu0
          %672 = vdwg.mxu0
          %v673 = vpack.c.bf16 %v668, %v668
          %s674 = scalar_lea.vmem [#allocation2], 4
          %675 = vst.msk [vmem:[%s674] sm:$0xf] %vm568, %v673
          %s676 = scalar_lea.vmem %s5, 16
          %v677 = vld [vmem:[%s676] sm:$0xf]
          %v678 = vld [vmem:[%s676 + $0x4] sm:$0xf]
          %v679 = vld [vmem:[%s676 + $0x8] sm:$0xf]
          %v680 = vld [vmem:[%s676 + $0xc] sm:$0xf]
          %v685 = vunpack.c.l.b16 %v677
          %v686 = vunpack.c.l.b16 %v678
          %v687 = vunpack.c.l.b16 %v679
          %v688 = vunpack.c.l.b16 %v680
          %v689 = vpack.c.b16 %v686, %v685
          %v690 = vpack.c.b16 %v688, %v687
          %693 = vmatprep.subr.bf16.mxu0 0
          %694 = vmatpush1.bf16.msra.mxu0 %v689
          %695 = vmatprep.subr.bf16.mxu0 0
          %696 = vmatpush1.bf16.msra.mxu0 %v690
          %697 = vmatprep.subr.bf16.mxu0 0
          %698 = vmatpush1.bf16.msra.mxu0 0
          %699 = vmatprep.subr.bf16.mxu0 0
          %700 = vmatpush1.bf16.msra.mxu0 0
          %701 = vmatprep.subr.bf16.mxu0 0
          %702 = vmatpush1.bf16.msra.mxu0 0
          %703 = vmatprep.subr.bf16.mxu0 0
          %704 = vmatpush1.bf16.msra.mxu0 0
          %705 = vmatprep.subr.bf16.mxu0 0
          %706 = vmatpush1.bf16.msra.mxu0 0
          %707 = vmatprep.subr.bf16.mxu0 0
          %708 = vmatpush1.bf16.msra.mxu0 0
          %709 = vmatprep.subr.bf16.mxu0 0
          %710 = vmatpush1.bf16.msra.mxu0 0
          %711 = vmatprep.subr.bf16.mxu0 0
          %712 = vmatpush1.bf16.msra.mxu0 0
          %713 = vmatprep.subr.bf16.mxu0 0
          %714 = vmatpush1.bf16.msra.mxu0 0
          %715 = vmatprep.subr.bf16.mxu0 0
          %716 = vmatpush1.bf16.msra.mxu0 0
          %717 = vmatprep.subr.bf16.mxu0 0
          %718 = vmatpush1.bf16.msra.mxu0 0
          %719 = vmatprep.subr.bf16.mxu0 0
          %720 = vmatpush1.bf16.msra.mxu0 0
          %721 = vmatprep.subr.bf16.mxu0 0
          %722 = vmatpush1.bf16.msra.mxu0 0
          %723 = vmatprep.subr.bf16.mxu0 0
          %724 = vmatpush1.bf16.msra.mxu0 0
          %725 = vmatprep.mubr.bf16.mxu0 0
          %726 = vmatmul.mubr.bf16.gmra.mrb[0].mxu0 %v525
          %v727 = vpop.f32.mrb[0].mxu0
          %v728 = vadd.f32 0.0, %v727
          %v729 = vpop.f32.mrb[0].mxu0
          %v730 = vpop.f32.mrb[0].mxu0
          %v731 = vpop.f32.mrb[0].mxu0
          %732 = vdwg.mxu0
          %v733 = vpack.c.bf16 %v728, %v728
          %s734 = scalar_lea.vmem [#allocation3], 4
          %735 = vst.msk [vmem:[%s734] sm:$0xf] %vm568, %v733
          %s736 = scalar_lea.vmem %s4, 8
          %v737 = vld [vmem:[%s736] sm:$0xf]
          %v739 = vsel %vm490, %v737, 0
          %741 = vmatprep.subr.bf16.mxu0 0
          %742 = vmatpush1.bf16.xpose.msra.mxu0 %v525
          %743 = vmatprep.subr.bf16.mxu0 0
          %744 = vmatpush1.bf16.xpose.msra.mxu0 0
          %745 = vmatprep.subr.bf16.mxu0 0
          %746 = vmatpush1.bf16.xpose.msra.mxu0 0
          %747 = vmatprep.subr.bf16.mxu0 0
          %748 = vmatpush1.bf16.xpose.msra.mxu0 0
          %749 = vmatprep.subr.bf16.mxu0 0
          %750 = vmatpush1.bf16.xpose.msra.mxu0 0
          %751 = vmatprep.subr.bf16.mxu0 0
          %752 = vmatpush1.bf16.xpose.msra.mxu0 0
          %753 = vmatprep.subr.bf16.mxu0 0
          %754 = vmatpush1.bf16.xpose.msra.mxu0 0
          %755 = vmatprep.subr.bf16.mxu0 0
          %756 = vmatpush1.bf16.xpose.msra.mxu0 0
          %757 = vmatprep.subr.bf16.mxu0 0
          %758 = vmatpush1.bf16.xpose.msra.mxu0 0
          %759 = vmatprep.subr.bf16.mxu0 0
          %760 = vmatpush1.bf16.xpose.msra.mxu0 0
          %761 = vmatprep.subr.bf16.mxu0 0
          %762 = vmatpush1.bf16.xpose.msra.mxu0 0
          %763 = vmatprep.subr.bf16.mxu0 0
          %764 = vmatpush1.bf16.xpose.msra.mxu0 0
          %765 = vmatprep.subr.bf16.mxu0 0
          %766 = vmatpush1.bf16.xpose.msra.mxu0 0
          %767 = vmatprep.subr.bf16.mxu0 0
          %768 = vmatpush1.bf16.xpose.msra.mxu0 0
          %769 = vmatprep.subr.bf16.mxu0 0
          %770 = vmatpush1.bf16.xpose.msra.mxu0 0
          %771 = vmatprep.subr.bf16.mxu0 0
          %772 = vmatpush1.bf16.xpose.msra.mxu0 0
          %773 = vmatprep.mubr.bf16.mxu0 0
          %774 = vmatmul.mubr.bf16.gmra.mrb[0].mxu0 %v739
          %v775 = vpop.f32.mrb[0].mxu0
          %v776 = vadd.f32 0.0, %v775
          %v777 = vpop.f32.mrb[0].mxu0
          %v778 = vpop.f32.mrb[0].mxu0
          %v779 = vpop.f32.mrb[0].mxu0
          %780 = vdwg.mxu0
          %v781 = vpack.c.bf16 %v776, %v776
          %s782 = scalar_lea.vmem [#allocation2], 8
          %783 = vst.msk [vmem:[%s782] sm:$0xf] %vm568, %v781
          %s784 = scalar_lea.vmem %s5, 32
          %v785 = vld [vmem:[%s784] sm:$0xf]
          %v786 = vld [vmem:[%s784 + $0x4] sm:$0xf]
          %v787 = vld [vmem:[%s784 + $0x8] sm:$0xf]
          %v788 = vld [vmem:[%s784 + $0xc] sm:$0xf]
          %v793 = vunpack.c.l.b16 %v785
          %v794 = vunpack.c.l.b16 %v786
          %v795 = vunpack.c.l.b16 %v787
          %v796 = vunpack.c.l.b16 %v788
          %v797 = vpack.c.b16 %v794, %v793
          %v798 = vpack.c.b16 %v796, %v795
          %801 = vmatprep.subr.bf16.mxu0 0
          %802 = vmatpush1.bf16.msra.mxu0 %v797
          %803 = vmatprep.subr.bf16.mxu0 0
          %804 = vmatpush1.bf16.msra.mxu0 %v798
          %805 = vmatprep.subr.bf16.mxu0 0
          %806 = vmatpush1.bf16.msra.mxu0 0
          %807 = vmatprep.subr.bf16.mxu0 0
          %808 = vmatpush1.bf16.msra.mxu0 0
          %809 = vmatprep.subr.bf16.mxu0 0
          %810 = vmatpush1.bf16.msra.mxu0 0
          %811 = vmatprep.subr.bf16.mxu0 0
          %812 = vmatpush1.bf16.msra.mxu0 0
          %813 = vmatprep.subr.bf16.mxu0 0
          %814 = vmatpush1.bf16.msra.mxu0 0
          %815 = vmatprep.subr.bf16.mxu0 0
          %816 = vmatpush1.bf16.msra.mxu0 0
          %817 = vmatprep.subr.bf16.mxu0 0
          %818 = vmatpush1.bf16.msra.mxu0 0
          %819 = vmatprep.subr.bf16.mxu0 0
          %820 = vmatpush1.bf16.msra.mxu0 0
          %821 = vmatprep.subr.bf16.mxu0 0
          %822 = vmatpush1.bf16.msra.mxu0 0
          %823 = vmatprep.subr.bf16.mxu0 0
          %824 = vmatpush1.bf16.msra.mxu0 0
          %825 = vmatprep.subr.bf16.mxu0 0
          %826 = vmatpush1.bf16.msra.mxu0 0
          %827 = vmatprep.subr.bf16.mxu0 0
          %828 = vmatpush1.bf16.msra.mxu0 0
          %829 = vmatprep.subr.bf16.mxu0 0
          %830 = vmatpush1.bf16.msra.mxu0 0
          %831 = vmatprep.subr.bf16.mxu0 0
          %832 = vmatpush1.bf16.msra.mxu0 0
          %833 = vmatprep.mubr.bf16.mxu0 0
          %834 = vmatmul.mubr.bf16.gmra.mrb[0].mxu0 %v525
          %v835 = vpop.f32.mrb[0].mxu0
          %v836 = vadd.f32 0.0, %v835
          %v837 = vpop.f32.mrb[0].mxu0
          %v838 = vpop.f32.mrb[0].mxu0
          %v839 = vpop.f32.mrb[0].mxu0
          %840 = vdwg.mxu0
          %v841 = vpack.c.bf16 %v836, %v836
          %s842 = scalar_lea.vmem [#allocation3], 8
          %843 = vst.msk [vmem:[%s842] sm:$0xf] %vm568, %v841
          %s844 = scalar_lea.vmem %s4, 12
          %v845 = vld [vmem:[%s844] sm:$0xf]
          %v847 = vsel %vm490, %v845, 0
          %849 = vmatprep.subr.bf16.mxu0 0
          %850 = vmatpush1.bf16.xpose.msra.mxu0 %v525
          %851 = vmatprep.subr.bf16.mxu0 0
          %852 = vmatpush1.bf16.xpose.msra.mxu0 0
          %853 = vmatprep.subr.bf16.mxu0 0
          %854 = vmatpush1.bf16.xpose.msra.mxu0 0
          %855 = vmatprep.subr.bf16.mxu0 0
          %856 = vmatpush1.bf16.xpose.msra.mxu0 0
          %857 = vmatprep.subr.bf16.mxu0 0
          %858 = vmatpush1.bf16.xpose.msra.mxu0 0
          %859 = vmatprep.subr.bf16.mxu0 0
          %860 = vmatpush1.bf16.xpose.msra.mxu0 0
          %861 = vmatprep.subr.bf16.mxu0 0
          %862 = vmatpush1.bf16.xpose.msra.mxu0 0
          %863 = vmatprep.subr.bf16.mxu0 0
          %864 = vmatpush1.bf16.xpose.msra.mxu0 0
          %865 = vmatprep.subr.bf16.mxu0 0
          %866 = vmatpush1.bf16.xpose.msra.mxu0 0
          %867 = vmatprep.subr.bf16.mxu0 0
          %868 = vmatpush1.bf16.xpose.msra.mxu0 0
          %869 = vmatprep.subr.bf16.mxu0 0
          %870 = vmatpush1.bf16.xpose.msra.mxu0 0
          %871 = vmatprep.subr.bf16.mxu0 0
          %872 = vmatpush1.bf16.xpose.msra.mxu0 0
          %873 = vmatprep.subr.bf16.mxu0 0
          %874 = vmatpush1.bf16.xpose.msra.mxu0 0
          %875 = vmatprep.subr.bf16.mxu0 0
          %876 = vmatpush1.bf16.xpose.msra.mxu0 0
          %877 = vmatprep.subr.bf16.mxu0 0
          %878 = vmatpush1.bf16.xpose.msra.mxu0 0
          %879 = vmatprep.subr.bf16.mxu0 0
          %880 = vmatpush1.bf16.xpose.msra.mxu0 0
          %881 = vmatprep.mubr.bf16.mxu0 0
          %882 = vmatmul.mubr.bf16.gmra.mrb[0].mxu0 %v847
          %v883 = vpop.f32.mrb[0].mxu0
          %v884 = vadd.f32 0.0, %v883
          %v885 = vpop.f32.mrb[0].mxu0
          %v886 = vpop.f32.mrb[0].mxu0
          %v887 = vpop.f32.mrb[0].mxu0
          %888 = vdwg.mxu0
          %v889 = vpack.c.bf16 %v884, %v884
          %s890 = scalar_lea.vmem [#allocation2], 12
          %891 = vst.msk [vmem:[%s890] sm:$0xf] %vm568, %v889
          %s892 = scalar_lea.vmem %s5, 48
          %v893 = vld [vmem:[%s892] sm:$0xf]
          %v894 = vld [vmem:[%s892 + $0x4] sm:$0xf]
          %v895 = vld [vmem:[%s892 + $0x8] sm:$0xf]
          %v896 = vld [vmem:[%s892 + $0xc] sm:$0xf]
          %v901 = vunpack.c.l.b16 %v893
          %v902 = vunpack.c.l.b16 %v894
          %v903 = vunpack.c.l.b16 %v895
          %v904 = vunpack.c.l.b16 %v896
          %v905 = vpack.c.b16 %v902, %v901
          %v906 = vpack.c.b16 %v904, %v903
          %909 = vmatprep.subr.bf16.mxu0 0
          %910 = vmatpush1.bf16.msra.mxu0 %v905
          %911 = vmatprep.subr.bf16.mxu0 0
          %912 = vmatpush1.bf16.msra.mxu0 %v906
          %913 = vmatprep.subr.bf16.mxu0 0
          %914 = vmatpush1.bf16.msra.mxu0 0
          %915 = vmatprep.subr.bf16.mxu0 0
          %916 = vmatpush1.bf16.msra.mxu0 0
          %917 = vmatprep.subr.bf16.mxu0 0
          %918 = vmatpush1.bf16.msra.mxu0 0
          %919 = vmatprep.subr.bf16.mxu0 0
          %920 = vmatpush1.bf16.msra.mxu0 0
          %921 = vmatprep.subr.bf16.mxu0 0
          %922 = vmatpush1.bf16.msra.mxu0 0
          %923 = vmatprep.subr.bf16.mxu0 0
          %924 = vmatpush1.bf16.msra.mxu0 0
          %925 = vmatprep.subr.bf16.mxu0 0
          %926 = vmatpush1.bf16.msra.mxu0 0
          %927 = vmatprep.subr.bf16.mxu0 0
          %928 = vmatpush1.bf16.msra.mxu0 0
          %929 = vmatprep.subr.bf16.mxu0 0
          %930 = vmatpush1.bf16.msra.mxu0 0
          %931 = vmatprep.subr.bf16.mxu0 0
          %932 = vmatpush1.bf16.msra.mxu0 0
          %933 = vmatprep.subr.bf16.mxu0 0
          %934 = vmatpush1.bf16.msra.mxu0 0
          %935 = vmatprep.subr.bf16.mxu0 0
          %936 = vmatpush1.bf16.msra.mxu0 0
          %937 = vmatprep.subr.bf16.mxu0 0
          %938 = vmatpush1.bf16.msra.mxu0 0
          %939 = vmatprep.subr.bf16.mxu0 0
          %940 = vmatpush1.bf16.msra.mxu0 0
          %941 = vmatprep.mubr.bf16.mxu0 0
          %942 = vmatmul.mubr.bf16.gmra.mrb[0].mxu0 %v525
          %v943 = vpop.f32.mrb[0].mxu0
          %v944 = vadd.f32 0.0, %v943
          %v945 = vpop.f32.mrb[0].mxu0
          %v946 = vpop.f32.mrb[0].mxu0
          %v947 = vpop.f32.mrb[0].mxu0
          %948 = vdwg.mxu0
          %v949 = vpack.c.bf16 %v944, %v944
          %s950 = scalar_lea.vmem [#allocation3], 12
          %951 = vst.msk [vmem:[%s950] sm:$0xf] %vm568, %v949
        $region80: #{tpu_custom_call.1} parent=75 // pred_fallthru
          _
        %s952 = smul.u32 %s33, 8
        %s953 = scalar_lea.vmem %s476, %s952
        %v954 = vld [vmem:[%s953] sm:$0xff]
        %vm955 = vcmask 261120
        %v956 = vsel %vm955, %v954, 0.0
        %957 = vadd.xlane.f32.xlu0 %v956
        %v958 = vpop.xlane.xlu0 %957
        %v959 = vrcp.pop 32.0
        %v960 = vmul.f32 %v958, %v959
        %v961 = vsub.f32 %v954, %v960
        %v962 = vmul.f32 %v961, %v961
        %v963 = vsel %vm955, %v962, 0.0
        %964 = vadd.xlane.f32.xlu0 %v963
        %v965 = vpop.xlane.xlu0 %964
        %v966 = vmul.f32 %v965, %v959
        %v967 = vadd.f32 %v966, 1e-05
        %v968 = vrsqrt.pop %v967
        %v969 = vmul.f32 %v961, %v968
        %v971 = vlaneseq
        %v972 = vshrl.u32 %v971, 7
        %v973 = vsub.s32 0, %v972
        %v974 = vrot.slane %v478, %v973
        %v976 = vmul.f32 %v969, %v974
        %v978 = vlaneseq
        %v979 = vshrl.u32 %v978, 7
        %v980 = vsub.s32 0, %v979
        %v981 = vrot.slane %v479, %v980
        %v983 = vadd.f32 %v976, %v981
        %v984 = vpack.c.bf16 %v983, %v983
        %v985 = vld [vmem:[%s3] sm:$0xf]
        %v986 = vld [vmem:[%s3 + $0x4] sm:$0xf]
        %v987 = vld [vmem:[%s3 + $0x8] sm:$0xf]
        %v988 = vld [vmem:[%s3 + $0xc] sm:$0xf]
        %v993 = vunpack.c.l.b16 %v985
        %v994 = vunpack.c.l.b16 %v986
        %v995 = vunpack.c.l.b16 %v987
        %v996 = vunpack.c.l.b16 %v988
        %v997 = vpack.c.b16 %v994, %v993
        %v998 = vpack.c.b16 %v996, %v995
        %v1002 = vsel %vm955, %v984, 0
        %1004 = vmatprep.subr.bf16.mxu0 0
        %1005 = vmatpush1.bf16.msra.mxu0 %v997
        %1006 = vmatprep.subr.bf16.mxu0 0
        %1007 = vmatpush1.bf16.msra.mxu0 %v998
        %1008 = vmatprep.subr.bf16.mxu0 0
        %1009 = vmatpush1.bf16.msra.mxu0 0
        %1010 = vmatprep.subr.bf16.mxu0 0
        %1011 = vmatpush1.bf16.msra.mxu0 0
        %1012 = vmatprep.subr.bf16.mxu0 0
        %1013 = vmatpush1.bf16.msra.mxu0 0
        %1014 = vmatprep.subr.bf16.mxu0 0
        %1015 = vmatpush1.bf16.msra.mxu0 0
        %1016 = vmatprep.subr.bf16.mxu0 0
        %1017 = vmatpush1.bf16.msra.mxu0 0
        %1018 = vmatprep.subr.bf16.mxu0 0
        %1019 = vmatpush1.bf16.msra.mxu0 0
        %1020 = vmatprep.subr.bf16.mxu0 0
        %1021 = vmatpush1.bf16.msra.mxu0 0
        %1022 = vmatprep.subr.bf16.mxu0 0
        %1023 = vmatpush1.bf16.msra.mxu0 0
        %1024 = vmatprep.subr.bf16.mxu0 0
        %1025 = vmatpush1.bf16.msra.mxu0 0
        %1026 = vmatprep.subr.bf16.mxu0 0
        %1027 = vmatpush1.bf16.msra.mxu0 0
        %1028 = vmatprep.subr.bf16.mxu0 0
        %1029 = vmatpush1.bf16.msra.mxu0 0
        %1030 = vmatprep.subr.bf16.mxu0 0
        %1031 = vmatpush1.bf16.msra.mxu0 0
        %1032 = vmatprep.subr.bf16.mxu0 0
        %1033 = vmatpush1.bf16.msra.mxu0 0
        %1034 = vmatprep.subr.bf16.mxu0 0
        %1035 = vmatpush1.bf16.msra.mxu0 0
        %1036 = vmatprep.mubr.bf16.mxu0 0
        %1037 = vmatmul.mubr.bf16.gmra.mrb[0].mxu0 %v1002
        %v1038 = vpop.f32.mrb[0].mxu0
        %v1039 = vadd.f32 0.0, %v1038
        %v1040 = vpop.f32.mrb[0].mxu0
        %v1041 = vpop.f32.mrb[0].mxu0
        %v1042 = vpop.f32.mrb[0].mxu0
        %1043 = vdwg.mxu0
        %v1044 = vpack.c.bf16 %v1039, %v1039
        %v1045 = vld [vmem:[#allocation2] sm:$0xf]
        %vm1046 = vcmask 64512
        %v1048 = vsel %vm1046, %v1044, 0
        %vm1050 = vcmask 1043456
        %v1052 = vsel %vm1050, %v1045, 0
        %1054 = vmatprep.subr.bf16.mxu0 0
        %1055 = vmatpush1.bf16.msra.mxu0 %v1052
        %1056 = vmatprep.subr.bf16.mxu0 0
        %1057 = vmatpush1.bf16.msra.mxu0 0
        %1058 = vmatprep.subr.bf16.mxu0 0
        %1059 = vmatpush1.bf16.msra.mxu0 0
        %1060 = vmatprep.subr.bf16.mxu0 0
        %1061 = vmatpush1.bf16.msra.mxu0 0
        %1062 = vmatprep.subr.bf16.mxu0 0
        %1063 = vmatpush1.bf16.msra.mxu0 0
        %1064 = vmatprep.subr.bf16.mxu0 0
        %1065 = vmatpush1.bf16.msra.mxu0 0
        %1066 = vmatprep.subr.bf16.mxu0 0
        %1067 = vmatpush1.bf16.msra.mxu0 0
        %1068 = vmatprep.subr.bf16.mxu0 0
        %1069 = vmatpush1.bf16.msra.mxu0 0
        %1070 = vmatprep.subr.bf16.mxu0 0
        %1071 = vmatpush1.bf16.msra.mxu0 0
        %1072 = vmatprep.subr.bf16.mxu0 0
        %1073 = vmatpush1.bf16.msra.mxu0 0
        %1074 = vmatprep.subr.bf16.mxu0 0
        %1075 = vmatpush1.bf16.msra.mxu0 0
        %1076 = vmatprep.subr.bf16.mxu0 0
        %1077 = vmatpush1.bf16.msra.mxu0 0
        %1078 = vmatprep.subr.bf16.mxu0 0
        %1079 = vmatpush1.bf16.msra.mxu0 0
        %1080 = vmatprep.subr.bf16.mxu0 0
        %1081 = vmatpush1.bf16.msra.mxu0 0
        %1082 = vmatprep.subr.bf16.mxu0 0
        %1083 = vmatpush1.bf16.msra.mxu0 0
        %1084 = vmatprep.subr.bf16.mxu0 0
        %1085 = vmatpush1.bf16.msra.mxu0 0
        %1086 = vmatprep.mubr.bf16.mxu0 0
        %1087 = vmatmul.mubr.bf16.gmra.mrb[0].mxu0 %v1048
        %v1088 = vpop.f32.mrb[0].mxu0
        %v1089 = vadd.f32 0.0, %v1088
        %v1090 = vpop.f32.mrb[0].mxu0
        %v1091 = vpop.f32.mrb[0].mxu0
        %v1092 = vpop.f32.mrb[0].mxu0
        %1093 = vdwg.mxu0
        %v1094 = vsel %vm1046, %v1089, -inf
        %1095 = vmax.xlane.f32.xlu0 %v1094
        %v1096 = vpop.xlane.xlu0 %1095
        %v1097 = vsub.f32 %v1089, %v1096
        %v1098 = vmul.f32 %v1097, 1.442695
        %v1099 = vpow.pop %v1098
        %v1100 = vsel %vm1046, %v1099, 0.0
        %1101 = vadd.xlane.f32.xlu0 %v1100
        %v1102 = vpop.xlane.xlu0 %1101
        %v1103 = vrcp.pop %v1102
        %v1104 = vmul.f32 %v1099, %v1103
        %v1105 = vpack.c.bf16 %v1104, %v1104
        %v1106 = vld [vmem:[#allocation3] sm:$0xf]
        %v1108 = vsel %vm1046, %v1105, 0
        %v1111 = vsel %vm1050, %v1106, 0
        %1113 = vmatprep.subr.bf16.mxu0 0
        %1114 = vmatpush1.bf16.msra.mxu0 %v1111
        %1115 = vmatprep.subr.bf16.mxu0 0
        %1116 = vmatpush1.bf16.msra.mxu0 0
        %1117 = vmatprep.subr.bf16.mxu0 0
        %1118 = vmatpush1.bf16.msra.mxu0 0
        %1119 = vmatprep.subr.bf16.mxu0 0
        %1120 = vmatpush1.bf16.msra.mxu0 0
        %1121 = vmatprep.subr.bf16.mxu0 0
        %1122 = vmatpush1.bf16.msra.mxu0 0
        %1123 = vmatprep.subr.bf16.mxu0 0
        %1124 = vmatpush1.bf16.msra.mxu0 0
        %1125 = vmatprep.subr.bf16.mxu0 0
        %1126 = vmatpush1.bf16.msra.mxu0 0
        %1127 = vmatprep.subr.bf16.mxu0 0
        %1128 = vmatpush1.bf16.msra.mxu0 0
        %1129 = vmatprep.subr.bf16.mxu0 0
        %1130 = vmatpush1.bf16.msra.mxu0 0
        %1131 = vmatprep.subr.bf16.mxu0 0
        %1132 = vmatpush1.bf16.msra.mxu0 0
        %1133 = vmatprep.subr.bf16.mxu0 0
        %1134 = vmatpush1.bf16.msra.mxu0 0
        %1135 = vmatprep.subr.bf16.mxu0 0
        %1136 = vmatpush1.bf16.msra.mxu0 0
        %1137 = vmatprep.subr.bf16.mxu0 0
        %1138 = vmatpush1.bf16.msra.mxu0 0
        %1139 = vmatprep.subr.bf16.mxu0 0
        %1140 = vmatpush1.bf16.msra.mxu0 0
        %1141 = vmatprep.subr.bf16.mxu0 0
        %1142 = vmatpush1.bf16.msra.mxu0 0
        %1143 = vmatprep.subr.bf16.mxu0 0
        %1144 = vmatpush1.bf16.msra.mxu0 0
        %1145 = vmatprep.mubr.bf16.mxu0 0
        %1146 = vmatmul.mubr.bf16.gmra.mrb[0].mxu0 %v1108
        %v1147 = vpop.f32.mrb[0].mxu0
        %v1148 = vadd.f32 0.0, %v1147
        %v1149 = vpop.f32.mrb[0].mxu0
        %v1150 = vpop.f32.mrb[0].mxu0
        %v1151 = vpop.f32.mrb[0].mxu0
        %1152 = vdwg.mxu0
        %v1153 = vpack.c.bf16 %v1148, %v1148
        %vm1154 = vcmask 60416
        %1155 = vst.msk [vmem:[#allocation4] sm:$0xf] %vm1154, %v1153
        %s1156 = scalar_lea.vmem [#allocation2], 4
        %v1157 = vld [vmem:[%s1156] sm:$0xf]
        %1159 = vrot.lane.b32.xlu0 %v1044, 120
        %v1160 = vpop.permute.xlu0 %1159
        %v1162 = vsel %vm1046, %v1160, 0
        %v1165 = vsel %vm1050, %v1157, 0
        %1167 = vmatprep.subr.bf16.mxu0 0
        %1168 = vmatpush1.bf16.msra.mxu0 %v1165
        %1169 = vmatprep.subr.bf16.mxu0 0
        %1170 = vmatpush1.bf16.msra.mxu0 0
        %1171 = vmatprep.subr.bf16.mxu0 0
        %1172 = vmatpush1.bf16.msra.mxu0 0
        %1173 = vmatprep.subr.bf16.mxu0 0
        %1174 = vmatpush1.bf16.msra.mxu0 0
        %1175 = vmatprep.subr.bf16.mxu0 0
        %1176 = vmatpush1.bf16.msra.mxu0 0
        %1177 = vmatprep.subr.bf16.mxu0 0
        %1178 = vmatpush1.bf16.msra.mxu0 0
        %1179 = vmatprep.subr.bf16.mxu0 0
        %1180 = vmatpush1.bf16.msra.mxu0 0
        %1181 = vmatprep.subr.bf16.mxu0 0
        %1182 = vmatpush1.bf16.msra.mxu0 0
        %1183 = vmatprep.subr.bf16.mxu0 0
        %1184 = vmatpush1.bf16.msra.mxu0 0
        %1185 = vmatprep.subr.bf16.mxu0 0
        %1186 = vmatpush1.bf16.msra.mxu0 0
        %1187 = vmatprep.subr.bf16.mxu0 0
        %1188 = vmatpush1.bf16.msra.mxu0 0
        %1189 = vmatprep.subr.bf16.mxu0 0
        %1190 = vmatpush1.bf16.msra.mxu0 0
        %1191 = vmatprep.subr.bf16.mxu0 0
        %1192 = vmatpush1.bf16.msra.mxu0 0
        %1193 = vmatprep.subr.bf16.mxu0 0
        %1194 = vmatpush1.bf16.msra.mxu0 0
        %1195 = vmatprep.subr.bf16.mxu0 0
        %1196 = vmatpush1.bf16.msra.mxu0 0
        %1197 = vmatprep.subr.bf16.mxu0 0
        %1198 = vmatpush1.bf16.msra.mxu0 0
        %1199 = vmatprep.mubr.bf16.mxu0 0
        %1200 = vmatmul.mubr.bf16.gmra.mrb[0].mxu0 %v1162
        %v1201 = vpop.f32.mrb[0].mxu0
        %v1202 = vadd.f32 0.0, %v1201
        %v1203 = vpop.f32.mrb[0].mxu0
        %v1204 = vpop.f32.mrb[0].mxu0
        %v1205 = vpop.f32.mrb[0].mxu0
        %1206 = vdwg.mxu0
        %v1207 = vsel %vm1046, %v1202, -inf
        %1208 = vmax.xlane.f32.xlu0 %v1207
        %v1209 = vpop.xlane.xlu0 %1208
        %v1210 = vsub.f32 %v1202, %v1209
        %v1211 = vmul.f32 %v1210, 1.442695
        %v1212 = vpow.pop %v1211
        %v1213 = vsel %vm1046, %v1212, 0.0
        %1214 = vadd.xlane.f32.xlu0 %v1213
        %v1215 = vpop.xlane.xlu0 %1214
        %v1216 = vrcp.pop %v1215
        %v1217 = vmul.f32 %v1212, %v1216
        %v1218 = vpack.c.bf16 %v1217, %v1217
        %s1219 = scalar_lea.vmem [#allocation3], 4
        %v1220 = vld [vmem:[%s1219] sm:$0xf]
        %v1222 = vsel %vm1046, %v1218, 0
        %v1225 = vsel %vm1050, %v1220, 0
        %1227 = vmatprep.subr.bf16.mxu0 0
        %1228 = vmatpush1.bf16.msra.mxu0 %v1225
        %1229 = vmatprep.subr.bf16.mxu0 0
        %1230 = vmatpush1.bf16.msra.mxu0 0
        %1231 = vmatprep.subr.bf16.mxu0 0
        %1232 = vmatpush1.bf16.msra.mxu0 0
        %1233 = vmatprep.subr.bf16.mxu0 0
        %1234 = vmatpush1.bf16.msra.mxu0 0
        %1235 = vmatprep.subr.bf16.mxu0 0
        %1236 = vmatpush1.bf16.msra.mxu0 0
        %1237 = vmatprep.subr.bf16.mxu0 0
        %1238 = vmatpush1.bf16.msra.mxu0 0
        %1239 = vmatprep.subr.bf16.mxu0 0
        %1240 = vmatpush1.bf16.msra.mxu0 0
        %1241 = vmatprep.subr.bf16.mxu0 0
        %1242 = vmatpush1.bf16.msra.mxu0 0
        %1243 = vmatprep.subr.bf16.mxu0 0
        %1244 = vmatpush1.bf16.msra.mxu0 0
        %1245 = vmatprep.subr.bf16.mxu0 0
        %1246 = vmatpush1.bf16.msra.mxu0 0
        %1247 = vmatprep.subr.bf16.mxu0 0
        %1248 = vmatpush1.bf16.msra.mxu0 0
        %1249 = vmatprep.subr.bf16.mxu0 0
        %1250 = vmatpush1.bf16.msra.mxu0 0
        %1251 = vmatprep.subr.bf16.mxu0 0
        %1252 = vmatpush1.bf16.msra.mxu0 0
        %1253 = vmatprep.subr.bf16.mxu0 0
        %1254 = vmatpush1.bf16.msra.mxu0 0
        %1255 = vmatprep.subr.bf16.mxu0 0
        %1256 = vmatpush1.bf16.msra.mxu0 0
        %1257 = vmatprep.subr.bf16.mxu0 0
        %1258 = vmatpush1.bf16.msra.mxu0 0
        %1259 = vmatprep.mubr.bf16.mxu0 0
        %1260 = vmatmul.mubr.bf16.gmra.mrb[0].mxu0 %v1222
        %v1261 = vpop.f32.mrb[0].mxu0
        %v1262 = vadd.f32 0.0, %v1261
        %v1263 = vpop.f32.mrb[0].mxu0
        %v1264 = vpop.f32.mrb[0].mxu0
        %v1265 = vpop.f32.mrb[0].mxu0
        %1266 = vdwg.mxu0
        %v1267 = vpack.c.bf16 %v1262, %v1262
        %v1269 = vunpack.c.l.b16 %v1267
        %v1270 = vpack.c.b16 %v1269, %v1269
        %1271 = vrot.lane.b32.xlu0 %v1270, 8
        %v1272 = vpop.permute.xlu0 %1271
        %vm1274 = vcmask 126016
        %1275 = vst.msk [vmem:[#allocation4] sm:$0xf] %vm1274, %v1272
        %s1276 = scalar_lea.vmem [#allocation2], 8
        %v1277 = vld [vmem:[%s1276] sm:$0xf]
        %1278 = vrot.lane.b32.xlu0 %v1044, 112
        %v1279 = vpop.permute.xlu0 %1278
        %v1281 = vsel %vm1046, %v1279, 0
        %v1284 = vsel %vm1050, %v1277, 0
        %1286 = vmatprep.subr.bf16.mxu0 0
        %1287 = vmatpush1.bf16.msra.mxu0 %v1284
        %1288 = vmatprep.subr.bf16.mxu0 0
        %1289 = vmatpush1.bf16.msra.mxu0 0
        %1290 = vmatprep.subr.bf16.mxu0 0
        %1291 = vmatpush1.bf16.msra.mxu0 0
        %1292 = vmatprep.subr.bf16.mxu0 0
        %1293 = vmatpush1.bf16.msra.mxu0 0
        %1294 = vmatprep.subr.bf16.mxu0 0
        %1295 = vmatpush1.bf16.msra.mxu0 0
        %1296 = vmatprep.subr.bf16.mxu0 0
        %1297 = vmatpush1.bf16.msra.mxu0 0
        %1298 = vmatprep.subr.bf16.mxu0 0
        %1299 = vmatpush1.bf16.msra.mxu0 0
        %1300 = vmatprep.subr.bf16.mxu0 0
        %1301 = vmatpush1.bf16.msra.mxu0 0
        %1302 = vmatprep.subr.bf16.mxu0 0
        %1303 = vmatpush1.bf16.msra.mxu0 0
        %1304 = vmatprep.subr.bf16.mxu0 0
        %1305 = vmatpush1.bf16.msra.mxu0 0
        %1306 = vmatprep.subr.bf16.mxu0 0
        %1307 = vmatpush1.bf16.msra.mxu0 0
        %1308 = vmatprep.subr.bf16.mxu0 0
        %1309 = vmatpush1.bf16.msra.mxu0 0
        %1310 = vmatprep.subr.bf16.mxu0 0
        %1311 = vmatpush1.bf16.msra.mxu0 0
        %1312 = vmatprep.subr.bf16.mxu0 0
        %1313 = vmatpush1.bf16.msra.mxu0 0
        %1314 = vmatprep.subr.bf16.mxu0 0
        %1315 = vmatpush1.bf16.msra.mxu0 0
        %1316 = vmatprep.subr.bf16.mxu0 0
        %1317 = vmatpush1.bf16.msra.mxu0 0
        %1318 = vmatprep.mubr.bf16.mxu0 0
        %1319 = vmatmul.mubr.bf16.gmra.mrb[0].mxu0 %v1281
        %v1320 = vpop.f32.mrb[0].mxu0
        %v1321 = vadd.f32 0.0, %v1320
        %v1322 = vpop.f32.mrb[0].mxu0
        %v1323 = vpop.f32.mrb[0].mxu0
        %v1324 = vpop.f32.mrb[0].mxu0
        %1325 = vdwg.mxu0
        %v1326 = vsel %vm1046, %v1321, -inf
        %1327 = vmax.xlane.f32.xlu0 %v1326
        %v1328 = vpop.xlane.xlu0 %1327
        %v1329 = vsub.f32 %v1321, %v1328
        %v1330 = vmul.f32 %v1329, 1.442695
        %v1331 = vpow.pop %v1330
        %v1332 = vsel %vm1046, %v1331, 0.0
        %1333 = vadd.xlane.f32.xlu0 %v1332
        %v1334 = vpop.xlane.xlu0 %1333
        %v1335 = vrcp.pop %v1334
        %v1336 = vmul.f32 %v1331, %v1335
        %v1337 = vpack.c.bf16 %v1336, %v1336
        %s1338 = scalar_lea.vmem [#allocation3], 8
        %v1339 = vld [vmem:[%s1338] sm:$0xf]
        %v1341 = vsel %vm1046, %v1337, 0
        %v1344 = vsel %vm1050, %v1339, 0
        %1346 = vmatprep.subr.bf16.mxu0 0
        %1347 = vmatpush1.bf16.msra.mxu0 %v1344
        %1348 = vmatprep.subr.bf16.mxu0 0
        %1349 = vmatpush1.bf16.msra.mxu0 0
        %1350 = vmatprep.subr.bf16.mxu0 0
        %1351 = vmatpush1.bf16.msra.mxu0 0
        %1352 = vmatprep.subr.bf16.mxu0 0
        %1353 = vmatpush1.bf16.msra.mxu0 0
        %1354 = vmatprep.subr.bf16.mxu0 0
        %1355 = vmatpush1.bf16.msra.mxu0 0
        %1356 = vmatprep.subr.bf16.mxu0 0
        %1357 = vmatpush1.bf16.msra.mxu0 0
        %1358 = vmatprep.subr.bf16.mxu0 0
        %1359 = vmatpush1.bf16.msra.mxu0 0
        %1360 = vmatprep.subr.bf16.mxu0 0
        %1361 = vmatpush1.bf16.msra.mxu0 0
        %1362 = vmatprep.subr.bf16.mxu0 0
        %1363 = vmatpush1.bf16.msra.mxu0 0
        %1364 = vmatprep.subr.bf16.mxu0 0
        %1365 = vmatpush1.bf16.msra.mxu0 0
        %1366 = vmatprep.subr.bf16.mxu0 0
        %1367 = vmatpush1.bf16.msra.mxu0 0
        %1368 = vmatprep.subr.bf16.mxu0 0
        %1369 = vmatpush1.bf16.msra.mxu0 0
        %1370 = vmatprep.subr.bf16.mxu0 0
        %1371 = vmatpush1.bf16.msra.mxu0 0
        %1372 = vmatprep.subr.bf16.mxu0 0
        %1373 = vmatpush1.bf16.msra.mxu0 0
        %1374 = vmatprep.subr.bf16.mxu0 0
        %1375 = vmatpush1.bf16.msra.mxu0 0
        %1376 = vmatprep.subr.bf16.mxu0 0
        %1377 = vmatpush1.bf16.msra.mxu0 0
        %1378 = vmatprep.mubr.bf16.mxu0 0
        %1379 = vmatmul.mubr.bf16.gmra.mrb[0].mxu0 %v1341
        %v1380 = vpop.f32.mrb[0].mxu0
        %v1381 = vadd.f32 0.0, %v1380
        %v1382 = vpop.f32.mrb[0].mxu0
        %v1383 = vpop.f32.mrb[0].mxu0
        %v1384 = vpop.f32.mrb[0].mxu0
        %1385 = vdwg.mxu0
        %v1386 = vpack.c.bf16 %v1381, %v1381
        %v1388 = vunpack.c.l.b16 %v1386
        %v1389 = vpack.c.b16 %v1388, %v1388
        %1390 = vrot.lane.b32.xlu0 %v1389, 16
        %v1391 = vpop.permute.xlu0 %1390
        %vm1393 = vcmask 191616
        %1394 = vst.msk [vmem:[#allocation4] sm:$0xf] %vm1393, %v1391
        %s1395 = scalar_lea.vmem [#allocation2], 12
        %v1396 = vld [vmem:[%s1395] sm:$0xf]
        %1397 = vrot.lane.b32.xlu0 %v1044, 104
        %v1398 = vpop.permute.xlu0 %1397
        %v1400 = vsel %vm1046, %v1398, 0
        %v1403 = vsel %vm1050, %v1396, 0
        %1405 = vmatprep.subr.bf16.mxu0 0
        %1406 = vmatpush1.bf16.msra.mxu0 %v1403
        %1407 = vmatprep.subr.bf16.mxu0 0
        %1408 = vmatpush1.bf16.msra.mxu0 0
        %1409 = vmatprep.subr.bf16.mxu0 0
        %1410 = vmatpush1.bf16.msra.mxu0 0
        %1411 = vmatprep.subr.bf16.mxu0 0
        %1412 = vmatpush1.bf16.msra.mxu0 0
        %1413 = vmatprep.subr.bf16.mxu0 0
        %1414 = vmatpush1.bf16.msra.mxu0 0
        %1415 = vmatprep.subr.bf16.mxu0 0
        %1416 = vmatpush1.bf16.msra.mxu0 0
        %1417 = vmatprep.subr.bf16.mxu0 0
        %1418 = vmatpush1.bf16.msra.mxu0 0
        %1419 = vmatprep.subr.bf16.mxu0 0
        %1420 = vmatpush1.bf16.msra.mxu0 0
        %1421 = vmatprep.subr.bf16.mxu0 0
        %1422 = vmatpush1.bf16.msra.mxu0 0
        %1423 = vmatprep.subr.bf16.mxu0 0
        %1424 = vmatpush1.bf16.msra.mxu0 0
        %1425 = vmatprep.subr.bf16.mxu0 0
        %1426 = vmatpush1.bf16.msra.mxu0 0
        %1427 = vmatprep.subr.bf16.mxu0 0
        %1428 = vmatpush1.bf16.msra.mxu0 0
        %1429 = vmatprep.subr.bf16.mxu0 0
        %1430 = vmatpush1.bf16.msra.mxu0 0
        %1431 = vmatprep.subr.bf16.mxu0 0
        %1432 = vmatpush1.bf16.msra.mxu0 0
        %1433 = vmatprep.subr.bf16.mxu0 0
        %1434 = vmatpush1.bf16.msra.mxu0 0
        %1435 = vmatprep.subr.bf16.mxu0 0
        %1436 = vmatpush1.bf16.msra.mxu0 0
        %1437 = vmatprep.mubr.bf16.mxu0 0
        %1438 = vmatmul.mubr.bf16.gmra.mrb[0].mxu0 %v1400
        %v1439 = vpop.f32.mrb[0].mxu0
        %v1440 = vadd.f32 0.0, %v1439
        %v1441 = vpop.f32.mrb[0].mxu0
        %v1442 = vpop.f32.mrb[0].mxu0
        %v1443 = vpop.f32.mrb[0].mxu0
        %1444 = vdwg.mxu0
        %v1445 = vsel %vm1046, %v1440, -inf
        %1446 = vmax.xlane.f32.xlu0 %v1445
        %v1447 = vpop.xlane.xlu0 %1446
        %v1448 = vsub.f32 %v1440, %v1447
        %v1449 = vmul.f32 %v1448, 1.442695
        %v1450 = vpow.pop %v1449
        %v1451 = vsel %vm1046, %v1450, 0.0
        %1452 = vadd.xlane.f32.xlu0 %v1451
        %v1453 = vpop.xlane.xlu0 %1452
        %v1454 = vrcp.pop %v1453
        %v1455 = vmul.f32 %v1450, %v1454
        %v1456 = vpack.c.bf16 %v1455, %v1455
        %s1457 = scalar_lea.vmem [#allocation3], 12
        %v1458 = vld [vmem:[%s1457] sm:$0xf]
        %v1460 = vsel %vm1046, %v1456, 0
        %v1463 = vsel %vm1050, %v1458, 0
        %1465 = vmatprep.subr.bf16.mxu0 0
        %1466 = vmatpush1.bf16.msra.mxu0 %v1463
        %1467 = vmatprep.subr.bf16.mxu0 0
        %1468 = vmatpush1.bf16.msra.mxu0 0
        %1469 = vmatprep.subr.bf16.mxu0 0
        %1470 = vmatpush1.bf16.msra.mxu0 0
        %1471 = vmatprep.subr.bf16.mxu0 0
        %1472 = vmatpush1.bf16.msra.mxu0 0
        %1473 = vmatprep.subr.bf16.mxu0 0
        %1474 = vmatpush1.bf16.msra.mxu0 0
        %1475 = vmatprep.subr.bf16.mxu0 0
        %1476 = vmatpush1.bf16.msra.mxu0 0
        %1477 = vmatprep.subr.bf16.mxu0 0
        %1478 = vmatpush1.bf16.msra.mxu0 0
        %1479 = vmatprep.subr.bf16.mxu0 0
        %1480 = vmatpush1.bf16.msra.mxu0 0
        %1481 = vmatprep.subr.bf16.mxu0 0
        %1482 = vmatpush1.bf16.msra.mxu0 0
        %1483 = vmatprep.subr.bf16.mxu0 0
        %1484 = vmatpush1.bf16.msra.mxu0 0
        %1485 = vmatprep.subr.bf16.mxu0 0
        %1486 = vmatpush1.bf16.msra.mxu0 0
        %1487 = vmatprep.subr.bf16.mxu0 0
        %1488 = vmatpush1.bf16.msra.mxu0 0
        %1489 = vmatprep.subr.bf16.mxu0 0
        %1490 = vmatpush1.bf16.msra.mxu0 0
        %1491 = vmatprep.subr.bf16.mxu0 0
        %1492 = vmatpush1.bf16.msra.mxu0 0
        %1493 = vmatprep.subr.bf16.mxu0 0
        %1494 = vmatpush1.bf16.msra.mxu0 0
        %1495 = vmatprep.subr.bf16.mxu0 0
        %1496 = vmatpush1.bf16.msra.mxu0 0
        %1497 = vmatprep.mubr.bf16.mxu0 0
        %1498 = vmatmul.mubr.bf16.gmra.mrb[0].mxu0 %v1460
        %v1499 = vpop.f32.mrb[0].mxu0
        %v1500 = vadd.f32 0.0, %v1499
        %v1501 = vpop.f32.mrb[0].mxu0
        %v1502 = vpop.f32.mrb[0].mxu0
        %v1503 = vpop.f32.mrb[0].mxu0
        %1504 = vdwg.mxu0
        %v1505 = vpack.c.bf16 %v1500, %v1500
        %v1507 = vunpack.c.l.b16 %v1505
        %v1508 = vpack.c.b16 %v1507, %v1507
        %1509 = vrot.lane.b32.xlu0 %v1508, 24
        %v1510 = vpop.permute.xlu0 %1509
        %vm1512 = vcmask 257216
        %1513 = vst.msk [vmem:[#allocation4] sm:$0xf] %vm1512, %v1510
        %v1514 = vld [vmem:[#allocation4] sm:$0xf]
        %v1515 = vld [vmem:[%s6] sm:$0xf]
        %v1516 = vld [vmem:[%s6 + $0x4] sm:$0xf]
        %v1517 = vld [vmem:[%s6 + $0x8] sm:$0xf]
        %v1518 = vld [vmem:[%s6 + $0xc] sm:$0xf]
        %v1523 = vunpack.c.l.b16 %v1515
        %v1524 = vunpack.c.l.b16 %v1516
        %v1525 = vunpack.c.l.b16 %v1517
        %v1526 = vunpack.c.l.b16 %v1518
        %v1527 = vpack.c.b16 %v1524, %v1523
        %v1528 = vpack.c.b16 %v1526, %v1525
        %v1532 = vsel %vm955, %v1514, 0
        %1534 = vmatprep.subr.bf16.mxu0 0
        %1535 = vmatpush1.bf16.msra.mxu0 %v1527
        %1536 = vmatprep.subr.bf16.mxu0 0
        %1537 = vmatpush1.bf16.msra.mxu0 %v1528
        %1538 = vmatprep.subr.bf16.mxu0 0
        %1539 = vmatpush1.bf16.msra.mxu0 0
        %1540 = vmatprep.subr.bf16.mxu0 0
        %1541 = vmatpush1.bf16.msra.mxu0 0
        %1542 = vmatprep.subr.bf16.mxu0 0
        %1543 = vmatpush1.bf16.msra.mxu0 0
        %1544 = vmatprep.subr.bf16.mxu0 0
        %1545 = vmatpush1.bf16.msra.mxu0 0
        %1546 = vmatprep.subr.bf16.mxu0 0
        %1547 = vmatpush1.bf16.msra.mxu0 0
        %1548 = vmatprep.subr.bf16.mxu0 0
        %1549 = vmatpush1.bf16.msra.mxu0 0
        %1550 = vmatprep.subr.bf16.mxu0 0
        %1551 = vmatpush1.bf16.msra.mxu0 0
        %1552 = vmatprep.subr.bf16.mxu0 0
        %1553 = vmatpush1.bf16.msra.mxu0 0
        %1554 = vmatprep.subr.bf16.mxu0 0
        %1555 = vmatpush1.bf16.msra.mxu0 0
        %1556 = vmatprep.subr.bf16.mxu0 0
        %1557 = vmatpush1.bf16.msra.mxu0 0
        %1558 = vmatprep.subr.bf16.mxu0 0
        %1559 = vmatpush1.bf16.msra.mxu0 0
        %1560 = vmatprep.subr.bf16.mxu0 0
        %1561 = vmatpush1.bf16.msra.mxu0 0
        %1562 = vmatprep.subr.bf16.mxu0 0
        %1563 = vmatpush1.bf16.msra.mxu0 0
        %1564 = vmatprep.subr.bf16.mxu0 0
        %1565 = vmatpush1.bf16.msra.mxu0 0
        %1566 = vmatprep.mubr.bf16.mxu0 0
        %1567 = vmatmul.mubr.bf16.gmra.mrb[0].mxu0 %v1532
        %v1568 = vpop.f32.mrb[0].mxu0
        %v1569 = vadd.f32 0.0, %v1568
        %v1570 = vpop.f32.mrb[0].mxu0
        %v1571 = vpop.f32.mrb[0].mxu0
        %v1572 = vpop.f32.mrb[0].mxu0
        %1573 = vdwg.mxu0
        %v1574 = vadd.f32 %v954, %v1569
        %v1576 = vlaneseq
        %v1577 = vshrl.u32 %v1576, 7
        %v1578 = vsub.s32 0, %v1577
        %v1579 = vrot.slane %v482, %v1578
        %v1581 = vadd.f32 %v1574, %v1579
        %v1582 = vsel %vm955, %v1581, 0.0
        %1583 = vadd.xlane.f32.xlu0 %v1582
        %v1584 = vpop.xlane.xlu0 %1583
        %v1585 = vmul.f32 %v1584, %v959
        %v1586 = vsub.f32 %v1581, %v1585
        %v1587 = vmul.f32 %v1586, %v1586
        %v1588 = vsel %vm955, %v1587, 0.0
        %1589 = vadd.xlane.f32.xlu0 %v1588
        %v1590 = vpop.xlane.xlu0 %1589
        %v1591 = vmul.f32 %v1590, %v959
        %v1592 = vadd.f32 %v1591, 1e-05
        %v1593 = vrsqrt.pop %v1592
        %v1594 = vmul.f32 %v1586, %v1593
        %v1596 = vlaneseq
        %v1597 = vshrl.u32 %v1596, 7
        %v1598 = vsub.s32 0, %v1597
        %v1599 = vrot.slane %v480, %v1598
        %v1601 = vmul.f32 %v1594, %v1599
        %v1603 = vlaneseq
        %v1604 = vshrl.u32 %v1603, 7
        %v1605 = vsub.s32 0, %v1604
        %v1606 = vrot.slane %v481, %v1605
        %v1608 = vadd.f32 %v1601, %v1606
        %v1609 = vpack.c.bf16 %v1608, %v1608
        %v1610 = vld [vmem:[%s10] sm:$0xf]
        %v1611 = vld [vmem:[%s10 + $0x4] sm:$0xf]
        %v1612 = vld [vmem:[%s10 + $0x8] sm:$0xf]
        %v1613 = vld [vmem:[%s10 + $0xc] sm:$0xf]
        %v1615 = vlaneseq
        %v1616 = vshrl.u32 %v1615, 7
        %v1617 = vsub.s32 0, %v1616
        %v1618 = vrot.slane %v483, %v1617
        %v1624 = vunpack.c.l.b16 %v1610
        %v1625 = vunpack.c.l.b16 %v1611
        %v1626 = vunpack.c.l.b16 %v1612
        %v1627 = vunpack.c.l.b16 %v1613
        %v1628 = vpack.c.b16 %v1625, %v1624
        %v1629 = vpack.c.b16 %v1627, %v1626
        %v1633 = vsel %vm955, %v1609, 0
        %1635 = vmatprep.subr.bf16.mxu0 0
        %1636 = vmatpush1.bf16.msra.mxu0 %v1628
        %1637 = vmatprep.subr.bf16.mxu0 0
        %1638 = vmatpush1.bf16.msra.mxu0 %v1629
        %1639 = vmatprep.subr.bf16.mxu0 0
        %1640 = vmatpush1.bf16.msra.mxu0 0
        %1641 = vmatprep.subr.bf16.mxu0 0
        %1642 = vmatpush1.bf16.msra.mxu0 0
        %1643 = vmatprep.subr.bf16.mxu0 0
        %1644 = vmatpush1.bf16.msra.mxu0 0
        %1645 = vmatprep.subr.bf16.mxu0 0
        %1646 = vmatpush1.bf16.msra.mxu0 0
        %1647 = vmatprep.subr.bf16.mxu0 0
        %1648 = vmatpush1.bf16.msra.mxu0 0
        %1649 = vmatprep.subr.bf16.mxu0 0
        %1650 = vmatpush1.bf16.msra.mxu0 0
        %1651 = vmatprep.subr.bf16.mxu0 0
        %1652 = vmatpush1.bf16.msra.mxu0 0
        %1653 = vmatprep.subr.bf16.mxu0 0
        %1654 = vmatpush1.bf16.msra.mxu0 0
        %1655 = vmatprep.subr.bf16.mxu0 0
        %1656 = vmatpush1.bf16.msra.mxu0 0
        %1657 = vmatprep.subr.bf16.mxu0 0
        %1658 = vmatpush1.bf16.msra.mxu0 0
        %1659 = vmatprep.subr.bf16.mxu0 0
        %1660 = vmatpush1.bf16.msra.mxu0 0
        %1661 = vmatprep.subr.bf16.mxu0 0
        %1662 = vmatpush1.bf16.msra.mxu0 0
        %1663 = vmatprep.subr.bf16.mxu0 0
        %1664 = vmatpush1.bf16.msra.mxu0 0
        %1665 = vmatprep.subr.bf16.mxu0 0
        %1666 = vmatpush1.bf16.msra.mxu0 0
        %1667 = vmatprep.mubr.bf16.mxu0 0
        %1668 = vmatmul.mubr.bf16.gmra.mrb[0].mxu0 %v1633
        %v1669 = vpop.f32.mrb[0].mxu0
        %v1670 = vadd.f32 %v1618, %v1669
        %v1671 = vpop.f32.mrb[0].mxu0
        %v1672 = vpop.f32.mrb[0].mxu0
        %v1673 = vpop.f32.mrb[0].mxu0
        %1674 = vdwg.mxu0
        %v1675 = vmul.f32 %v1670, 0.5
        %v1676 = vmul.f32 %v1670, 0.70710677
        %v1677 = verf.f32.pop %v1676
        %v1678 = vadd.f32 %v1677, 1.0
        %v1679 = vmul.f32 %v1675, %v1678
        %v1680 = vpack.c.bf16 %v1679, %v1679
        %v1681 = vld [vmem:[%s12] sm:$0xf]
        %v1682 = vld [vmem:[%s12 + $0x4] sm:$0xf]
        %v1683 = vld [vmem:[%s12 + $0x8] sm:$0xf]
        %v1684 = vld [vmem:[%s12 + $0xc] sm:$0xf]
        %v1685 = vld [vmem:[%s12 + $0x10] sm:$0xf]
        %v1686 = vld [vmem:[%s12 + $0x14] sm:$0xf]
        %v1687 = vld [vmem:[%s12 + $0x18] sm:$0xf]
        %v1688 = vld [vmem:[%s12 + $0x1c] sm:$0xf]
        %v1690 = vlaneseq
        %v1691 = vshrl.u32 %v1690, 7
        %v1692 = vsub.s32 0, %v1691
        %v1693 = vrot.slane %v484, %v1692
        %v1703 = vunpack.c.l.b16 %v1681
        %v1704 = vunpack.c.l.b16 %v1682
        %v1705 = vunpack.c.l.b16 %v1683
        %v1706 = vunpack.c.l.b16 %v1684
        %v1707 = vunpack.c.l.b16 %v1685
        %v1708 = vunpack.c.l.b16 %v1686
        %v1709 = vunpack.c.l.b16 %v1687
        %v1710 = vunpack.c.l.b16 %v1688
        %v1711 = vpack.c.b16 %v1704, %v1703
        %v1712 = vpack.c.b16 %v1706, %v1705
        %v1713 = vpack.c.b16 %v1708, %v1707
        %v1714 = vpack.c.b16 %v1710, %v1709
        %vm1719 = vcmask 523264
        %v1721 = vsel %vm1719, %v1680, 0
        %1723 = vmatprep.subr.bf16.mxu0 0
        %1724 = vmatpush1.bf16.msra.mxu0 %v1711
        %1725 = vmatprep.subr.bf16.mxu0 0
        %1726 = vmatpush1.bf16.msra.mxu0 %v1712
        %1727 = vmatprep.subr.bf16.mxu0 0
        %1728 = vmatpush1.bf16.msra.mxu0 %v1713
        %1729 = vmatprep.subr.bf16.mxu0 0
        %1730 = vmatpush1.bf16.msra.mxu0 %v1714
        %1731 = vmatprep.subr.bf16.mxu0 0
        %1732 = vmatpush1.bf16.msra.mxu0 0
        %1733 = vmatprep.subr.bf16.mxu0 0
        %1734 = vmatpush1.bf16.msra.mxu0 0
        %1735 = vmatprep.subr.bf16.mxu0 0
        %1736 = vmatpush1.bf16.msra.mxu0 0
        %1737 = vmatprep.subr.bf16.mxu0 0
        %1738 = vmatpush1.bf16.msra.mxu0 0
        %1739 = vmatprep.subr.bf16.mxu0 0
        %1740 = vmatpush1.bf16.msra.mxu0 0
        %1741 = vmatprep.subr.bf16.mxu0 0
        %1742 = vmatpush1.bf16.msra.mxu0 0
        %1743 = vmatprep.subr.bf16.mxu0 0
        %1744 = vmatpush1.bf16.msra.mxu0 0
        %1745 = vmatprep.subr.bf16.mxu0 0
        %1746 = vmatpush1.bf16.msra.mxu0 0
        %1747 = vmatprep.subr.bf16.mxu0 0
        %1748 = vmatpush1.bf16.msra.mxu0 0
        %1749 = vmatprep.subr.bf16.mxu0 0
        %1750 = vmatpush1.bf16.msra.mxu0 0
        %1751 = vmatprep.subr.bf16.mxu0 0
        %1752 = vmatpush1.bf16.msra.mxu0 0
        %1753 = vmatprep.subr.bf16.mxu0 0
        %1754 = vmatpush1.bf16.msra.mxu0 0
        %1755 = vmatprep.mubr.bf16.mxu0 0
        %1756 = vmatmul.mubr.bf16.gmra.mrb[0].mxu0 %v1721
        %v1757 = vpop.f32.mrb[0].mxu0
        %v1758 = vadd.f32 %v1693, %v1757
        %v1759 = vpop.f32.mrb[0].mxu0
        %v1760 = vpop.f32.mrb[0].mxu0
        %v1761 = vpop.f32.mrb[0].mxu0
        %1762 = vdwg.mxu0
        %v1763 = vadd.f32 %v1581, %v1758
        %1764 = vst.msk [vmem:[%s472] sm:$0xff] %vm955, %v1763
        %s1765 = sand.u32 %s349, 1
        %s1766 = scalar_lea.sflag [#allocation6], %s1765
        %s1767 = sand.u32 %s349, 1
        %s1768 = smul.addr %s1767, 8
        %s1769 = scalar_lea.vmem [#allocation5], %s1768
        // Predicated region
        $region81: #{tpu_custom_call.1} parent=75 // pred_check
          %p1770 = pneg %p359
        $region82: #{tpu_custom_call.1} parent=75 // pred_check_branch
          %1772 = sbr.rel (%p1770) target = $region84
        $region83: #{tpu_custom_call.1} parent=75 // pred_region
          %s1774 = ssub.s32 128, 128
          %1775 = vsyncadd %s1766, %s1774
          %s1776 = sadd.s32 %s33, %s32
          %s1777 = smul.addr %s1776, 128
          %s1778 = scalar_lea.hbm %s14, %s1777
          %s1780 = sshll.u32 %s1769, 4
          %s1781 = int_to_ptr.vmem [resolvable:$true] %s1780
          %1783 = dma.vmem_to_hbm [thread:$0]  %s1781, 128, %s1778, %s1766
        $region84: #{tpu_custom_call.1} parent=75 // pred_fallthru
          _
      $region76: #{tpu_custom_call.1} parent=5 // pred_fallthru
        _
      %p1784 = scmp.le.s32.totalorder 2, %s23
      // Predicated region
      $region85: #{tpu_custom_call.1} parent=5 // pred_check
        %p1785 = pneg %p1784
      $region86: #{tpu_custom_call.1} parent=5 // pred_check_branch
        %1787 = sbr.rel (%p1785) target = $region88
      $region87: #{tpu_custom_call.1} parent=5 // pred_region
        %s1788 = ssub.s32 %s23, 2
        // Predicated region
        $region89: #{tpu_custom_call.1} parent=87 // pred_check
          %p1789 = pneg %p365
        $region90: #{tpu_custom_call.1} parent=87 // pred_check_branch
          %1791 = sbr.rel (%p1789) target = $region92
        $region91: #{tpu_custom_call.1} parent=87 // pred_region
          %s1792 = sand.u32 %s350, 1
          %s1793 = scalar_lea.sflag [#allocation6], %s1792
          %s1794 = sand.u32 %s350, 1
          %s1795 = smul.addr %s1794, 8
          %s1796 = scalar_lea.vmem [#allocation5], %s1795
          %1797 = dma.done %s1793, 128
        $region92: #{tpu_custom_call.1} parent=87 // pred_fallthru
          _
      $region88: #{tpu_custom_call.1} parent=5 // pred_fallthru
        _
    $region6: #{tpu_custom_call.1} parent=1 // loop_footer
      %s27 = sadd.s32 1, %s23
    $region7: #{tpu_custom_call.1} parent=1 // loop_footer_branch
      %22 = sbr.rel target = $region3
    $region8: #{tpu_custom_call.1} parent=1 // loop_exit
      _
    %1798 = vsyncpa [#allocation6], 1
    %s1799 = scalar_lea.sflag [#allocation6], 1
    %1800 = vsyncpa %s1799, 1

</llo_original>
